<compile_context>
chip_gen: v7x
topology: tpu7x:2x2x1
jax: 0.10.0
libtpu: 0.0.40
codegen_flags: <defaults>
</compile_context>

<pallas_src>
import math
import functools

import jax
import jax.numpy as jnp
from jax.experimental import pallas as pl
from jax.experimental.pallas import tpu as pltpu

# --- small, forward-consistent config ---------------------------------------
BATCH = 2
NUM_PATCHES = 8        # sequence length (num image tokens)
EMBED_DIM = 32         # hidden_size
NUM_HEADS = 4          # num_attention_heads
HEAD_DIM = EMBED_DIM // NUM_HEADS


def _siglip_attention_kernel(x_ref, wq_ref, bq_ref, wk_ref, bk_ref, wv_ref, bv_ref,
                             wo_ref, bo_ref, o_ref,
                             *, num_heads, head_dim, embed_dim):
    """Single program: everything resident in VMEM. x_ref is (B, N, D)."""
    x = x_ref[...]                                            # (B, N, D)
    scale = 1.0 / math.sqrt(embed_dim)                        # matches reference (embed_dim!)

    acc = jnp.zeros(o_ref.shape, jnp.float32)                 # (B, N, D) o_proj accumulator

    for h in range(num_heads):                                # tiny static loop, unrolled at trace
        c0 = h * head_dim
        # Static *ref* slices of weights/biases (free) -> no slicing of live values.
        wq_h = wq_ref[:, c0:c0 + head_dim]                    # (D, hd)
        wk_h = wk_ref[:, c0:c0 + head_dim]
        wv_h = wv_ref[:, c0:c0 + head_dim]
        bq_h = bq_ref[:, c0:c0 + head_dim]                    # (1, hd)
        bk_h = bk_ref[:, c0:c0 + head_dim]
        bv_h = bv_ref[:, c0:c0 + head_dim]

        # Per-head projections; both batches stacked -> M = B*N rows per MXU push.
        q = jnp.dot(x, wq_h, preferred_element_type=jnp.float32) + bq_h   # (B, N, hd)
        k = jnp.dot(x, wk_h, preferred_element_type=jnp.float32) + bk_h   # (B, N, hd)
        v = jnp.dot(x, wv_h, preferred_element_type=jnp.float32) + bv_h   # (B, N, hd)

        # scores = q @ k^T / sqrt(embed_dim)  (batched, no explicit transpose)
        s = jnp.einsum('bqh,bkh->bqk', q, k,
                       preferred_element_type=jnp.float32) * scale        # (B, N, N)
        s = s - jnp.max(s, axis=-1, keepdims=True)
        p = jnp.exp(s)
        p = p * pl.reciprocal(jnp.sum(p, axis=-1, keepdims=True), approx=False)
        # dropout(p=0.0) is the identity -> skipped

        oh = jnp.einsum('bqk,bkh->bqh', p, v,
                        preferred_element_type=jnp.float32)               # (B, N, hd)
        # Accumulate the output projection per head (sublane-aligned wo row slice);
        # one push per head carrying all B*N rows.
        acc = acc + jnp.dot(oh, wo_ref[c0:c0 + head_dim, :],
                            preferred_element_type=jnp.float32)           # (B, N, D)

    # Single-shot store; output bias folded exactly once.
    o_ref[...] = acc + bo_ref[...]


def siglip_attention(x, wq, bq, wk, bk, wv, bv, wo, bo, *, num_heads=NUM_HEADS):
    """x: (B, N, D) float32.  Weights stored as (in, out); biases as (1, D)."""
    B, N, D = x.shape
    head_dim = D // num_heads

    kernel = functools.partial(_siglip_attention_kernel,
                               num_heads=num_heads,
                               head_dim=head_dim,
                               embed_dim=D)

    def full_block(shape):
        # Whole-array block (block_shape == array shape satisfies the (8,128) rule).
        return pl.BlockSpec(shape, lambda i, _s=shape: (0,) * len(_s))

    out = pl.pallas_call(
        kernel,
        out_shape=jax.ShapeDtypeStruct((B, N, D), jnp.float32),
        grid_spec=pltpu.PrefetchScalarGridSpec(
            num_scalar_prefetch=0,
            grid=(1,),                                        # single program (toy size)
            in_specs=[
                full_block((B, N, D)),    # x
                full_block((D, D)),       # wq
                full_block((1, D)),       # bq
                full_block((D, D)),       # wk
                full_block((1, D)),       # bk
                full_block((D, D)),       # wv
                full_block((1, D)),       # bv
                full_block((D, D)),       # wo
                full_block((1, D)),       # bo
            ],
            out_specs=full_block((B, N, D)),
        ),
        compiler_params=pltpu.CompilerParams(
            dimension_semantics=("arbitrary",)),
    )(x, wq, bq, wk, bk, wv, bv, wo, bo)

    return out


def _reference(x, wq, bq, wk, bk, wv, bv, wo, bo, num_heads=NUM_HEADS):
    """Pure-JAX reference mirroring the PyTorch forward."""
    B, N, D = x.shape
    hd = D // num_heads
    q = x @ wq + bq
    k = x @ wk + bk
    v = x @ wv + bv
    q = q.reshape(B, N, num_heads, hd).transpose(0, 2, 1, 3)
    k = k.reshape(B, N, num_heads, hd).transpose(0, 2, 1, 3)
    v = v.reshape(B, N, num_heads, hd).transpose(0, 2, 1, 3)
    s = (q @ k.transpose(0, 1, 3, 2)) / math.sqrt(D)          # scale = sqrt(embed_dim)
    p = jax.nn.softmax(s, axis=-1)
    o = p @ v
    o = o.transpose(0, 2, 1, 3).reshape(B, N, D)
    return o @ wo + bo


if __name__ == "__main__":
    key = jax.random.PRNGKey(0)
    keys = jax.random.split(key, 9)

    x = jax.random.normal(keys[0], (BATCH, NUM_PATCHES, EMBED_DIM), jnp.float32)

    # Deterministic "Linear" parameters; stored as (in, out) for the kernel.
    init = 1.0 / math.sqrt(EMBED_DIM)
    wq = jax.random.uniform(keys[1], (EMBED_DIM, EMBED_DIM), jnp.float32, -init, init)
    wk = jax.random.uniform(keys[2], (EMBED_DIM, EMBED_DIM), jnp.float32, -init, init)
    wv = jax.random.uniform(keys[3], (EMBED_DIM, EMBED_DIM), jnp.float32, -init, init)
    wo = jax.random.uniform(keys[4], (EMBED_DIM, EMBED_DIM), jnp.float32, -init, init)
    bq = jax.random.uniform(keys[5], (1, EMBED_DIM), jnp.float32, -init, init)
    bk = jax.random.uniform(keys[6], (1, EMBED_DIM), jnp.float32, -init, init)
    bv = jax.random.uniform(keys[7], (1, EMBED_DIM), jnp.float32, -init, init)
    bo = jax.random.uniform(keys[8], (1, EMBED_DIM), jnp.float32, -init, init)

    out = siglip_attention(x, wq, bq, wk, bk, wv, bv, wo, bo)
    out = jax.block_until_ready(out)

    ref = _reference(x, wq, bq, wk, bk, wv, bv, wo, bo)
    assert out.shape == (BATCH, NUM_PATCHES, EMBED_DIM)
    # Exact softmax reciprocal now; remaining tolerance only covers MXU f32
    # pass / per-head accumulation-order differences vs the XLA reference.
    assert jnp.allclose(out, ref, atol=1e-4, rtol=1e-4), "mismatch vs. reference"

    print("KERNEL_OK")
</pallas_src>

<mosaic_0001>
module attributes {stable_mosaic.version = 11 : i64} {
  func.func @_siglip_attention_kernel(%arg0: i32, %arg1: memref<2x8x32xf32, #tpu.memory_space<vmem>>, %arg2: memref<32x32xf32, #tpu.memory_space<vmem>>, %arg3: memref<1x32xf32, #tpu.memory_space<vmem>>, %arg4: memref<32x32xf32, #tpu.memory_space<vmem>>, %arg5: memref<1x32xf32, #tpu.memory_space<vmem>>, %arg6: memref<32x32xf32, #tpu.memory_space<vmem>>, %arg7: memref<1x32xf32, #tpu.memory_space<vmem>>, %arg8: memref<32x32xf32, #tpu.memory_space<vmem>>, %arg9: memref<1x32xf32, #tpu.memory_space<vmem>>, %arg10: memref<2x8x32xf32, #tpu.memory_space<vmem>>) attributes {dimension_semantics = [#tpu.dimension_semantics<arbitrary>], iteration_bounds = array<i64: 1>, scalar_prefetch = 0 : i64, scratch_operands = 0 : i64, tpu.core_type = #tpu.core_type<tc>, window_params = [{pipeline_mode = #tpu.pipeline_mode<synchronous>, transform_indices = @transform_0, window_bounds = array<i64: 2, 8, 32>}, {pipeline_mode = #tpu.pipeline_mode<synchronous>, transform_indices = @transform_1, window_bounds = array<i64: 32, 32>}, {pipeline_mode = #tpu.pipeline_mode<synchronous>, transform_indices = @transform_2, window_bounds = array<i64: 1, 32>}, {pipeline_mode = #tpu.pipeline_mode<synchronous>, transform_indices = @transform_3, window_bounds = array<i64: 32, 32>}, {pipeline_mode = #tpu.pipeline_mode<synchronous>, transform_indices = @transform_4, window_bounds = array<i64: 1, 32>}, {pipeline_mode = #tpu.pipeline_mode<synchronous>, transform_indices = @transform_5, window_bounds = array<i64: 32, 32>}, {pipeline_mode = #tpu.pipeline_mode<synchronous>, transform_indices = @transform_6, window_bounds = array<i64: 1, 32>}, {pipeline_mode = #tpu.pipeline_mode<synchronous>, transform_indices = @transform_7, window_bounds = array<i64: 32, 32>}, {pipeline_mode = #tpu.pipeline_mode<synchronous>, transform_indices = @transform_8, window_bounds = array<i64: 1, 32>}, {pipeline_mode = #tpu.pipeline_mode<synchronous>, transform_indices = @transform_9, window_bounds = array<i64: 2, 8, 32>}]} {
    %c0 = arith.constant 0 : index
    %c0_0 = arith.constant 0 : index
    %c0_1 = arith.constant 0 : index
    %0 = vector.load %arg1[%c0, %c0_0, %c0_1] : memref<2x8x32xf32, #tpu.memory_space<vmem>>, vector<2x8x32xf32>
    %cst = arith.constant 0.000000e+00 : f32
    %1 = vector.broadcast %cst : f32 to vector<2x8x32xf32>
    %c0_2 = arith.constant 0 : index
    %c0_3 = arith.constant 0 : index
    %2 = vector.load %arg2[%c0_2, %c0_3] : memref<32x32xf32, #tpu.memory_space<vmem>>, vector<32x8xf32>
    %c0_4 = arith.constant 0 : index
    %c0_5 = arith.constant 0 : index
    %3 = vector.load %arg4[%c0_4, %c0_5] : memref<32x32xf32, #tpu.memory_space<vmem>>, vector<32x8xf32>
    %c0_6 = arith.constant 0 : index
    %c0_7 = arith.constant 0 : index
    %4 = vector.load %arg6[%c0_6, %c0_7] : memref<32x32xf32, #tpu.memory_space<vmem>>, vector<32x8xf32>
    %c0_8 = arith.constant 0 : index
    %c0_9 = arith.constant 0 : index
    %5 = vector.load %arg3[%c0_8, %c0_9] : memref<1x32xf32, #tpu.memory_space<vmem>>, vector<1x8xf32>
    %c0_10 = arith.constant 0 : index
    %c0_11 = arith.constant 0 : index
    %6 = vector.load %arg5[%c0_10, %c0_11] : memref<1x32xf32, #tpu.memory_space<vmem>>, vector<1x8xf32>
    %c0_12 = arith.constant 0 : index
    %c0_13 = arith.constant 0 : index
    %7 = vector.load %arg7[%c0_12, %c0_13] : memref<1x32xf32, #tpu.memory_space<vmem>>, vector<1x8xf32>
    %cst_14 = arith.constant dense<0.000000e+00> : vector<2x8x8xf32>
    %8 = tpu.matmul %0, %2, %cst_14 {dimension_numbers = #tpu.dot_dimension_numbers<[2], [0], [0, 1], [1], [0, 0, 0, 1, 1, 1], [], []>} : vector<2x8x32xf32>, vector<32x8xf32>, vector<2x8x8xf32> -> vector<2x8x8xf32>
    %9 = vector.shape_cast %5 : vector<1x8xf32> to vector<1x1x8xf32>
    %10 = vector.broadcast %9 : vector<1x1x8xf32> to vector<2x8x8xf32>
    %11 = arith.addf %8, %10 : vector<2x8x8xf32>
    %cst_15 = arith.constant dense<0.000000e+00> : vector<2x8x8xf32>
    %12 = tpu.matmul %0, %3, %cst_15 {dimension_numbers = #tpu.dot_dimension_numbers<[2], [0], [0, 1], [1], [0, 0, 0, 1, 1, 1], [], []>} : vector<2x8x32xf32>, vector<32x8xf32>, vector<2x8x8xf32> -> vector<2x8x8xf32>
    %13 = vector.shape_cast %6 : vector<1x8xf32> to vector<1x1x8xf32>
    %14 = vector.broadcast %13 : vector<1x1x8xf32> to vector<2x8x8xf32>
    %15 = arith.addf %12, %14 : vector<2x8x8xf32>
    %cst_16 = arith.constant dense<0.000000e+00> : vector<2x8x8xf32>
    %16 = tpu.matmul %0, %4, %cst_16 {dimension_numbers = #tpu.dot_dimension_numbers<[2], [0], [0, 1], [1], [0, 0, 0, 1, 1, 1], [], []>} : vector<2x8x32xf32>, vector<32x8xf32>, vector<2x8x8xf32> -> vector<2x8x8xf32>
    %17 = vector.shape_cast %7 : vector<1x8xf32> to vector<1x1x8xf32>
    %18 = vector.broadcast %17 : vector<1x1x8xf32> to vector<2x8x8xf32>
    %19 = arith.addf %16, %18 : vector<2x8x8xf32>
    "tpu.trace_start"() <{level = 10 : i32, message = "bqh,bkh->bqk"}> : () -> ()
    %cst_17 = arith.constant dense<0.000000e+00> : vector<2x8x8xf32>
    %20 = tpu.matmul %11, %15, %cst_17 {dimension_numbers = #tpu.dot_dimension_numbers<[2], [2], [1], [1], [0, 0, 0, 1, 1, 1], [0], [0]>} : vector<2x8x8xf32>, vector<2x8x8xf32>, vector<2x8x8xf32> -> vector<2x8x8xf32>
    "tpu.trace_stop"() : () -> ()
    %cst_18 = arith.constant 0.176776692 : f32
    %21 = vector.broadcast %cst_18 : f32 to vector<2x8x8xf32>
    %22 = arith.mulf %20, %21 : vector<2x8x8xf32>
    %cst_19 = arith.constant dense<0xFF800000> : vector<2x8xf32>
    %23 = vector.multi_reduction <maximumf>, %22, %cst_19 [2] : vector<2x8x8xf32> to vector<2x8xf32>
    %24 = vector.shape_cast %23 : vector<2x8xf32> to vector<2x8x1xf32>
    %25 = vector.broadcast %24 : vector<2x8x1xf32> to vector<2x8x8xf32>
    %26 = arith.subf %22, %25 : vector<2x8x8xf32>
    %27 = math.exp %26 : vector<2x8x8xf32>
    %cst_20 = arith.constant dense<0.000000e+00> : vector<2x8xf32>
    %28 = vector.multi_reduction <add>, %27, %cst_20 [2] : vector<2x8x8xf32> to vector<2x8xf32>
    %29 = vector.shape_cast %28 : vector<2x8xf32> to vector<2x8x1xf32>
    %30 = tpu.reciprocal %29 : vector<2x8x1xf32> -> vector<2x8x1xf32>
    %31 = vector.broadcast %30 : vector<2x8x1xf32> to vector<2x8x8xf32>
    %32 = arith.mulf %27, %31 : vector<2x8x8xf32>
    "tpu.trace_start"() <{level = 10 : i32, message = "bqk,bkh->bqh"}> : () -> ()
    %cst_21 = arith.constant dense<0.000000e+00> : vector<2x8x8xf32>
    %33 = tpu.matmul %32, %19, %cst_21 {dimension_numbers = #tpu.dot_dimension_numbers<[2], [1], [1], [2], [0, 0, 0, 1, 1, 2], [0], [0]>} : vector<2x8x8xf32>, vector<2x8x8xf32>, vector<2x8x8xf32> -> vector<2x8x8xf32>
    "tpu.trace_stop"() : () -> ()
    %c0_22 = arith.constant 0 : index
    %c0_23 = arith.constant 0 : index
    %34 = vector.load %arg8[%c0_22, %c0_23] : memref<32x32xf32, #tpu.memory_space<vmem>>, vector<8x32xf32>
    %cst_24 = arith.constant dense<0.000000e+00> : vector<2x8x32xf32>
    %35 = tpu.matmul %33, %34, %cst_24 {dimension_numbers = #tpu.dot_dimension_numbers<[2], [0], [0, 1], [1], [0, 0, 0, 1, 1, 1], [], []>} : vector<2x8x8xf32>, vector<8x32xf32>, vector<2x8x32xf32> -> vector<2x8x32xf32>
    %36 = arith.addf %1, %35 : vector<2x8x32xf32>
    %c0_25 = arith.constant 0 : index
    %c8 = arith.constant 8 : index
    %37 = vector.load %arg2[%c0_25, %c8] : memref<32x32xf32, #tpu.memory_space<vmem>>, vector<32x8xf32>
    %c0_26 = arith.constant 0 : index
    %c8_27 = arith.constant 8 : index
    %38 = vector.load %arg4[%c0_26, %c8_27] : memref<32x32xf32, #tpu.memory_space<vmem>>, vector<32x8xf32>
    %c0_28 = arith.constant 0 : index
    %c8_29 = arith.constant 8 : index
    %39 = vector.load %arg6[%c0_28, %c8_29] : memref<32x32xf32, #tpu.memory_space<vmem>>, vector<32x8xf32>
    %c0_30 = arith.constant 0 : index
    %c8_31 = arith.constant 8 : index
    %40 = vector.load %arg3[%c0_30, %c8_31] : memref<1x32xf32, #tpu.memory_space<vmem>>, vector<1x8xf32>
    %c0_32 = arith.constant 0 : index
    %c8_33 = arith.constant 8 : index
    %41 = vector.load %arg5[%c0_32, %c8_33] : memref<1x32xf32, #tpu.memory_space<vmem>>, vector<1x8xf32>
    %c0_34 = arith.constant 0 : index
    %c8_35 = arith.constant 8 : index
    %42 = vector.load %arg7[%c0_34, %c8_35] : memref<1x32xf32, #tpu.memory_space<vmem>>, vector<1x8xf32>
    %cst_36 = arith.constant dense<0.000000e+00> : vector<2x8x8xf32>
    %43 = tpu.matmul %0, %37, %cst_36 {dimension_numbers = #tpu.dot_dimension_numbers<[2], [0], [0, 1], [1], [0, 0, 0, 1, 1, 1], [], []>} : vector<2x8x32xf32>, vector<32x8xf32>, vector<2x8x8xf32> -> vector<2x8x8xf32>
    %44 = vector.shape_cast %40 : vector<1x8xf32> to vector<1x1x8xf32>
    %45 = vector.broadcast %44 : vector<1x1x8xf32> to vector<2x8x8xf32>
    %46 = arith.addf %43, %45 : vector<2x8x8xf32>
    %cst_37 = arith.constant dense<0.000000e+00> : vector<2x8x8xf32>
    %47 = tpu.matmul %0, %38, %cst_37 {dimension_numbers = #tpu.dot_dimension_numbers<[2], [0], [0, 1], [1], [0, 0, 0, 1, 1, 1], [], []>} : vector<2x8x32xf32>, vector<32x8xf32>, vector<2x8x8xf32> -> vector<2x8x8xf32>
    %48 = vector.shape_cast %41 : vector<1x8xf32> to vector<1x1x8xf32>
    %49 = vector.broadcast %48 : vector<1x1x8xf32> to vector<2x8x8xf32>
    %50 = arith.addf %47, %49 : vector<2x8x8xf32>
    %cst_38 = arith.constant dense<0.000000e+00> : vector<2x8x8xf32>
    %51 = tpu.matmul %0, %39, %cst_38 {dimension_numbers = #tpu.dot_dimension_numbers<[2], [0], [0, 1], [1], [0, 0, 0, 1, 1, 1], [], []>} : vector<2x8x32xf32>, vector<32x8xf32>, vector<2x8x8xf32> -> vector<2x8x8xf32>
    %52 = vector.shape_cast %42 : vector<1x8xf32> to vector<1x1x8xf32>
    %53 = vector.broadcast %52 : vector<1x1x8xf32> to vector<2x8x8xf32>
    %54 = arith.addf %51, %53 : vector<2x8x8xf32>
    "tpu.trace_start"() <{level = 10 : i32, message = "bqh,bkh->bqk"}> : () -> ()
    %cst_39 = arith.constant dense<0.000000e+00> : vector<2x8x8xf32>
    %55 = tpu.matmul %46, %50, %cst_39 {dimension_numbers = #tpu.dot_dimension_numbers<[2], [2], [1], [1], [0, 0, 0, 1, 1, 1], [0], [0]>} : vector<2x8x8xf32>, vector<2x8x8xf32>, vector<2x8x8xf32> -> vector<2x8x8xf32>
    "tpu.trace_stop"() : () -> ()
    %cst_40 = arith.constant 0.176776692 : f32
    %56 = vector.broadcast %cst_40 : f32 to vector<2x8x8xf32>
    %57 = arith.mulf %55, %56 : vector<2x8x8xf32>
    %cst_41 = arith.constant dense<0xFF800000> : vector<2x8xf32>
    %58 = vector.multi_reduction <maximumf>, %57, %cst_41 [2] : vector<2x8x8xf32> to vector<2x8xf32>
    %59 = vector.shape_cast %58 : vector<2x8xf32> to vector<2x8x1xf32>
    %60 = vector.broadcast %59 : vector<2x8x1xf32> to vector<2x8x8xf32>
    %61 = arith.subf %57, %60 : vector<2x8x8xf32>
    %62 = math.exp %61 : vector<2x8x8xf32>
    %cst_42 = arith.constant dense<0.000000e+00> : vector<2x8xf32>
    %63 = vector.multi_reduction <add>, %62, %cst_42 [2] : vector<2x8x8xf32> to vector<2x8xf32>
    %64 = vector.shape_cast %63 : vector<2x8xf32> to vector<2x8x1xf32>
    %65 = tpu.reciprocal %64 : vector<2x8x1xf32> -> vector<2x8x1xf32>
    %66 = vector.broadcast %65 : vector<2x8x1xf32> to vector<2x8x8xf32>
    %67 = arith.mulf %62, %66 : vector<2x8x8xf32>
    "tpu.trace_start"() <{level = 10 : i32, message = "bqk,bkh->bqh"}> : () -> ()
    %cst_43 = arith.constant dense<0.000000e+00> : vector<2x8x8xf32>
    %68 = tpu.matmul %67, %54, %cst_43 {dimension_numbers = #tpu.dot_dimension_numbers<[2], [1], [1], [2], [0, 0, 0, 1, 1, 2], [0], [0]>} : vector<2x8x8xf32>, vector<2x8x8xf32>, vector<2x8x8xf32> -> vector<2x8x8xf32>
    "tpu.trace_stop"() : () -> ()
    %c8_44 = arith.constant 8 : index
    %c0_45 = arith.constant 0 : index
    %69 = vector.load %arg8[%c8_44, %c0_45] : memref<32x32xf32, #tpu.memory_space<vmem>>, vector<8x32xf32>
    %cst_46 = arith.constant dense<0.000000e+00> : vector<2x8x32xf32>
    %70 = tpu.matmul %68, %69, %cst_46 {dimension_numbers = #tpu.dot_dimension_numbers<[2], [0], [0, 1], [1], [0, 0, 0, 1, 1, 1], [], []>} : vector<2x8x8xf32>, vector<8x32xf32>, vector<2x8x32xf32> -> vector<2x8x32xf32>
    %71 = arith.addf %36, %70 : vector<2x8x32xf32>
    %c0_47 = arith.constant 0 : index
    %c16 = arith.constant 16 : index
    %72 = vector.load %arg2[%c0_47, %c16] : memref<32x32xf32, #tpu.memory_space<vmem>>, vector<32x8xf32>
    %c0_48 = arith.constant 0 : index
    %c16_49 = arith.constant 16 : index
    %73 = vector.load %arg4[%c0_48, %c16_49] : memref<32x32xf32, #tpu.memory_space<vmem>>, vector<32x8xf32>
    %c0_50 = arith.constant 0 : index
    %c16_51 = arith.constant 16 : index
    %74 = vector.load %arg6[%c0_50, %c16_51] : memref<32x32xf32, #tpu.memory_space<vmem>>, vector<32x8xf32>
    %c0_52 = arith.constant 0 : index
    %c16_53 = arith.constant 16 : index
    %75 = vector.load %arg3[%c0_52, %c16_53] : memref<1x32xf32, #tpu.memory_space<vmem>>, vector<1x8xf32>
    %c0_54 = arith.constant 0 : index
    %c16_55 = arith.constant 16 : index
    %76 = vector.load %arg5[%c0_54, %c16_55] : memref<1x32xf32, #tpu.memory_space<vmem>>, vector<1x8xf32>
    %c0_56 = arith.constant 0 : index
    %c16_57 = arith.constant 16 : index
    %77 = vector.load %arg7[%c0_56, %c16_57] : memref<1x32xf32, #tpu.memory_space<vmem>>, vector<1x8xf32>
    %cst_58 = arith.constant dense<0.000000e+00> : vector<2x8x8xf32>
    %78 = tpu.matmul %0, %72, %cst_58 {dimension_numbers = #tpu.dot_dimension_numbers<[2], [0], [0, 1], [1], [0, 0, 0, 1, 1, 1], [], []>} : vector<2x8x32xf32>, vector<32x8xf32>, vector<2x8x8xf32> -> vector<2x8x8xf32>
    %79 = vector.shape_cast %75 : vector<1x8xf32> to vector<1x1x8xf32>
    %80 = vector.broadcast %79 : vector<1x1x8xf32> to vector<2x8x8xf32>
    %81 = arith.addf %78, %80 : vector<2x8x8xf32>
    %cst_59 = arith.constant dense<0.000000e+00> : vector<2x8x8xf32>
    %82 = tpu.matmul %0, %73, %cst_59 {dimension_numbers = #tpu.dot_dimension_numbers<[2], [0], [0, 1], [1], [0, 0, 0, 1, 1, 1], [], []>} : vector<2x8x32xf32>, vector<32x8xf32>, vector<2x8x8xf32> -> vector<2x8x8xf32>
    %83 = vector.shape_cast %76 : vector<1x8xf32> to vector<1x1x8xf32>
    %84 = vector.broadcast %83 : vector<1x1x8xf32> to vector<2x8x8xf32>
    %85 = arith.addf %82, %84 : vector<2x8x8xf32>
    %cst_60 = arith.constant dense<0.000000e+00> : vector<2x8x8xf32>
    %86 = tpu.matmul %0, %74, %cst_60 {dimension_numbers = #tpu.dot_dimension_numbers<[2], [0], [0, 1], [1], [0, 0, 0, 1, 1, 1], [], []>} : vector<2x8x32xf32>, vector<32x8xf32>, vector<2x8x8xf32> -> vector<2x8x8xf32>
    %87 = vector.shape_cast %77 : vector<1x8xf32> to vector<1x1x8xf32>
    %88 = vector.broadcast %87 : vector<1x1x8xf32> to vector<2x8x8xf32>
    %89 = arith.addf %86, %88 : vector<2x8x8xf32>
    "tpu.trace_start"() <{level = 10 : i32, message = "bqh,bkh->bqk"}> : () -> ()
    %cst_61 = arith.constant dense<0.000000e+00> : vector<2x8x8xf32>
    %90 = tpu.matmul %81, %85, %cst_61 {dimension_numbers = #tpu.dot_dimension_numbers<[2], [2], [1], [1], [0, 0, 0, 1, 1, 1], [0], [0]>} : vector<2x8x8xf32>, vector<2x8x8xf32>, vector<2x8x8xf32> -> vector<2x8x8xf32>
    "tpu.trace_stop"() : () -> ()
    %cst_62 = arith.constant 0.176776692 : f32
    %91 = vector.broadcast %cst_62 : f32 to vector<2x8x8xf32>
    %92 = arith.mulf %90, %91 : vector<2x8x8xf32>
    %cst_63 = arith.constant dense<0xFF800000> : vector<2x8xf32>
    %93 = vector.multi_reduction <maximumf>, %92, %cst_63 [2] : vector<2x8x8xf32> to vector<2x8xf32>
    %94 = vector.shape_cast %93 : vector<2x8xf32> to vector<2x8x1xf32>
    %95 = vector.broadcast %94 : vector<2x8x1xf32> to vector<2x8x8xf32>
    %96 = arith.subf %92, %95 : vector<2x8x8xf32>
    %97 = math.exp %96 : vector<2x8x8xf32>
    %cst_64 = arith.constant dense<0.000000e+00> : vector<2x8xf32>
    %98 = vector.multi_reduction <add>, %97, %cst_64 [2] : vector<2x8x8xf32> to vector<2x8xf32>
    %99 = vector.shape_cast %98 : vector<2x8xf32> to vector<2x8x1xf32>
    %100 = tpu.reciprocal %99 : vector<2x8x1xf32> -> vector<2x8x1xf32>
    %101 = vector.broadcast %100 : vector<2x8x1xf32> to vector<2x8x8xf32>
    %102 = arith.mulf %97, %101 : vector<2x8x8xf32>
    "tpu.trace_start"() <{level = 10 : i32, message = "bqk,bkh->bqh"}> : () -> ()
    %cst_65 = arith.constant dense<0.000000e+00> : vector<2x8x8xf32>
    %103 = tpu.matmul %102, %89, %cst_65 {dimension_numbers = #tpu.dot_dimension_numbers<[2], [1], [1], [2], [0, 0, 0, 1, 1, 2], [0], [0]>} : vector<2x8x8xf32>, vector<2x8x8xf32>, vector<2x8x8xf32> -> vector<2x8x8xf32>
    "tpu.trace_stop"() : () -> ()
    %c16_66 = arith.constant 16 : index
    %c0_67 = arith.constant 0 : index
    %104 = vector.load %arg8[%c16_66, %c0_67] : memref<32x32xf32, #tpu.memory_space<vmem>>, vector<8x32xf32>
    %cst_68 = arith.constant dense<0.000000e+00> : vector<2x8x32xf32>
    %105 = tpu.matmul %103, %104, %cst_68 {dimension_numbers = #tpu.dot_dimension_numbers<[2], [0], [0, 1], [1], [0, 0, 0, 1, 1, 1], [], []>} : vector<2x8x8xf32>, vector<8x32xf32>, vector<2x8x32xf32> -> vector<2x8x32xf32>
    %106 = arith.addf %71, %105 : vector<2x8x32xf32>
    %c0_69 = arith.constant 0 : index
    %c24 = arith.constant 24 : index
    %107 = vector.load %arg2[%c0_69, %c24] : memref<32x32xf32, #tpu.memory_space<vmem>>, vector<32x8xf32>
    %c0_70 = arith.constant 0 : index
    %c24_71 = arith.constant 24 : index
    %108 = vector.load %arg4[%c0_70, %c24_71] : memref<32x32xf32, #tpu.memory_space<vmem>>, vector<32x8xf32>
    %c0_72 = arith.constant 0 : index
    %c24_73 = arith.constant 24 : index
    %109 = vector.load %arg6[%c0_72, %c24_73] : memref<32x32xf32, #tpu.memory_space<vmem>>, vector<32x8xf32>
    %c0_74 = arith.constant 0 : index
    %c24_75 = arith.constant 24 : index
    %110 = vector.load %arg3[%c0_74, %c24_75] : memref<1x32xf32, #tpu.memory_space<vmem>>, vector<1x8xf32>
    %c0_76 = arith.constant 0 : index
    %c24_77 = arith.constant 24 : index
    %111 = vector.load %arg5[%c0_76, %c24_77] : memref<1x32xf32, #tpu.memory_space<vmem>>, vector<1x8xf32>
    %c0_78 = arith.constant 0 : index
    %c24_79 = arith.constant 24 : index
    %112 = vector.load %arg7[%c0_78, %c24_79] : memref<1x32xf32, #tpu.memory_space<vmem>>, vector<1x8xf32>
    %cst_80 = arith.constant dense<0.000000e+00> : vector<2x8x8xf32>
    %113 = tpu.matmul %0, %107, %cst_80 {dimension_numbers = #tpu.dot_dimension_numbers<[2], [0], [0, 1], [1], [0, 0, 0, 1, 1, 1], [], []>} : vector<2x8x32xf32>, vector<32x8xf32>, vector<2x8x8xf32> -> vector<2x8x8xf32>
    %114 = vector.shape_cast %110 : vector<1x8xf32> to vector<1x1x8xf32>
    %115 = vector.broadcast %114 : vector<1x1x8xf32> to vector<2x8x8xf32>
    %116 = arith.addf %113, %115 : vector<2x8x8xf32>
    %cst_81 = arith.constant dense<0.000000e+00> : vector<2x8x8xf32>
    %117 = tpu.matmul %0, %108, %cst_81 {dimension_numbers = #tpu.dot_dimension_numbers<[2], [0], [0, 1], [1], [0, 0, 0, 1, 1, 1], [], []>} : vector<2x8x32xf32>, vector<32x8xf32>, vector<2x8x8xf32> -> vector<2x8x8xf32>
    %118 = vector.shape_cast %111 : vector<1x8xf32> to vector<1x1x8xf32>
    %119 = vector.broadcast %118 : vector<1x1x8xf32> to vector<2x8x8xf32>
    %120 = arith.addf %117, %119 : vector<2x8x8xf32>
    %cst_82 = arith.constant dense<0.000000e+00> : vector<2x8x8xf32>
    %121 = tpu.matmul %0, %109, %cst_82 {dimension_numbers = #tpu.dot_dimension_numbers<[2], [0], [0, 1], [1], [0, 0, 0, 1, 1, 1], [], []>} : vector<2x8x32xf32>, vector<32x8xf32>, vector<2x8x8xf32> -> vector<2x8x8xf32>
    %122 = vector.shape_cast %112 : vector<1x8xf32> to vector<1x1x8xf32>
    %123 = vector.broadcast %122 : vector<1x1x8xf32> to vector<2x8x8xf32>
    %124 = arith.addf %121, %123 : vector<2x8x8xf32>
    "tpu.trace_start"() <{level = 10 : i32, message = "bqh,bkh->bqk"}> : () -> ()
    %cst_83 = arith.constant dense<0.000000e+00> : vector<2x8x8xf32>
    %125 = tpu.matmul %116, %120, %cst_83 {dimension_numbers = #tpu.dot_dimension_numbers<[2], [2], [1], [1], [0, 0, 0, 1, 1, 1], [0], [0]>} : vector<2x8x8xf32>, vector<2x8x8xf32>, vector<2x8x8xf32> -> vector<2x8x8xf32>
    "tpu.trace_stop"() : () -> ()
    %cst_84 = arith.constant 0.176776692 : f32
    %126 = vector.broadcast %cst_84 : f32 to vector<2x8x8xf32>
    %127 = arith.mulf %125, %126 : vector<2x8x8xf32>
    %cst_85 = arith.constant dense<0xFF800000> : vector<2x8xf32>
    %128 = vector.multi_reduction <maximumf>, %127, %cst_85 [2] : vector<2x8x8xf32> to vector<2x8xf32>
    %129 = vector.shape_cast %128 : vector<2x8xf32> to vector<2x8x1xf32>
    %130 = vector.broadcast %129 : vector<2x8x1xf32> to vector<2x8x8xf32>
    %131 = arith.subf %127, %130 : vector<2x8x8xf32>
    %132 = math.exp %131 : vector<2x8x8xf32>
    %cst_86 = arith.constant dense<0.000000e+00> : vector<2x8xf32>
    %133 = vector.multi_reduction <add>, %132, %cst_86 [2] : vector<2x8x8xf32> to vector<2x8xf32>
    %134 = vector.shape_cast %133 : vector<2x8xf32> to vector<2x8x1xf32>
    %135 = tpu.reciprocal %134 : vector<2x8x1xf32> -> vector<2x8x1xf32>
    %136 = vector.broadcast %135 : vector<2x8x1xf32> to vector<2x8x8xf32>
    %137 = arith.mulf %132, %136 : vector<2x8x8xf32>
    "tpu.trace_start"() <{level = 10 : i32, message = "bqk,bkh->bqh"}> : () -> ()
    %cst_87 = arith.constant dense<0.000000e+00> : vector<2x8x8xf32>
    %138 = tpu.matmul %137, %124, %cst_87 {dimension_numbers = #tpu.dot_dimension_numbers<[2], [1], [1], [2], [0, 0, 0, 1, 1, 2], [0], [0]>} : vector<2x8x8xf32>, vector<2x8x8xf32>, vector<2x8x8xf32> -> vector<2x8x8xf32>
    "tpu.trace_stop"() : () -> ()
    %c24_88 = arith.constant 24 : index
    %c0_89 = arith.constant 0 : index
    %139 = vector.load %arg8[%c24_88, %c0_89] : memref<32x32xf32, #tpu.memory_space<vmem>>, vector<8x32xf32>
    %cst_90 = arith.constant dense<0.000000e+00> : vector<2x8x32xf32>
    %140 = tpu.matmul %138, %139, %cst_90 {dimension_numbers = #tpu.dot_dimension_numbers<[2], [0], [0, 1], [1], [0, 0, 0, 1, 1, 1], [], []>} : vector<2x8x8xf32>, vector<8x32xf32>, vector<2x8x32xf32> -> vector<2x8x32xf32>
    %141 = arith.addf %106, %140 : vector<2x8x32xf32>
    %c0_91 = arith.constant 0 : index
    %c0_92 = arith.constant 0 : index
    %142 = vector.load %arg9[%c0_91, %c0_92] : memref<1x32xf32, #tpu.memory_space<vmem>>, vector<1x32xf32>
    %143 = vector.shape_cast %142 : vector<1x32xf32> to vector<1x1x32xf32>
    %144 = vector.broadcast %143 : vector<1x1x32xf32> to vector<2x8x32xf32>
    %145 = arith.addf %141, %144 : vector<2x8x32xf32>
    %c0_93 = arith.constant 0 : index
    %c0_94 = arith.constant 0 : index
    %c0_95 = arith.constant 0 : index
    %146 = vector.load %arg10[%c0_93, %c0_94, %c0_95] : memref<2x8x32xf32, #tpu.memory_space<vmem>>, vector<2x8x32xf32>
    tpu.vector_store %arg10[%c0_93, %c0_94, %c0_95], %145 {strides = array<i32>} : memref<2x8x32xf32, #tpu.memory_space<vmem>>, vector<2x8x32xf32>,
    return
  }
  func.func @transform_0(%arg0: i32) -> (i32, i32, i32) {
    %c0_i32 = arith.constant 0 : i32
    %c0_i32_0 = arith.constant 0 : i32
    %c0_i32_1 = arith.constant 0 : i32
    %c0_i32_2 = arith.constant 0 : i32
    return %c0_i32, %c0_i32_0, %c0_i32_1 : i32, i32, i32
  }
  func.func @transform_1(%arg0: i32) -> (i32, i32) {
    %c0_i32 = arith.constant 0 : i32
    %c0_i32_0 = arith.constant 0 : i32
    %c0_i32_1 = arith.constant 0 : i32
    return %c0_i32, %c0_i32_0 : i32, i32
  }
  func.func @transform_2(%arg0: i32) -> (i32, i32) {
    %c0_i32 = arith.constant 0 : i32
    %c0_i32_0 = arith.constant 0 : i32
    %c0_i32_1 = arith.constant 0 : i32
    return %c0_i32, %c0_i32_0 : i32, i32
  }
  func.func @transform_3(%arg0: i32) -> (i32, i32) {
    %c0_i32 = arith.constant 0 : i32
    %c0_i32_0 = arith.constant 0 : i32
    %c0_i32_1 = arith.constant 0 : i32
    return %c0_i32, %c0_i32_0 : i32, i32
  }
  func.func @transform_4(%arg0: i32) -> (i32, i32) {
    %c0_i32 = arith.constant 0 : i32
    %c0_i32_0 = arith.constant 0 : i32
    %c0_i32_1 = arith.constant 0 : i32
    return %c0_i32, %c0_i32_0 : i32, i32
  }
  func.func @transform_5(%arg0: i32) -> (i32, i32) {
    %c0_i32 = arith.constant 0 : i32
    %c0_i32_0 = arith.constant 0 : i32
    %c0_i32_1 = arith.constant 0 : i32
    return %c0_i32, %c0_i32_0 : i32, i32
  }
  func.func @transform_6(%arg0: i32) -> (i32, i32) {
    %c0_i32 = arith.constant 0 : i32
    %c0_i32_0 = arith.constant 0 : i32
    %c0_i32_1 = arith.constant 0 : i32
    return %c0_i32, %c0_i32_0 : i32, i32
  }
  func.func @transform_7(%arg0: i32) -> (i32, i32) {
    %c0_i32 = arith.constant 0 : i32
    %c0_i32_0 = arith.constant 0 : i32
    %c0_i32_1 = arith.constant 0 : i32
    return %c0_i32, %c0_i32_0 : i32, i32
  }
  func.func @transform_8(%arg0: i32) -> (i32, i32) {
    %c0_i32 = arith.constant 0 : i32
    %c0_i32_0 = arith.constant 0 : i32
    %c0_i32_1 = arith.constant 0 : i32
    return %c0_i32, %c0_i32_0 : i32, i32
  }
  func.func @transform_9(%arg0: i32) -> (i32, i32, i32) {
    %c0_i32 = arith.constant 0 : i32
    %c0_i32_0 = arith.constant 0 : i32
    %c0_i32_1 = arith.constant 0 : i32
    %c0_i32_2 = arith.constant 0 : i32
    return %c0_i32, %c0_i32_0, %c0_i32_1 : i32, i32, i32
  }
}

</mosaic_0001>

<llo_original>
// kernel: tpu_custom_call.1
$region0: #{tpu_custom_call.1}
  #allocation0 [shape = 'u32[]', space=smem, size = 0x4, offset = 0x4, fixed_abs, tag = 'smem constant byte address 0x4 - core index']
  #allocation1 [shape = 'u32[144,128]{1,0:T(1,128)}', space=vmem, size = 0x12000, scoped, tag = 'internal scratch']
  %s0 = inlined_call_operand.hbm [shape: f32[2,8,32], index: 0, kind: input, shape index: {}]
  %s1 = inlined_call_operand.hbm [shape: f32[32,32], index: 1, kind: input, shape index: {}]
  %s2 = inlined_call_operand.vmem [shape: f32[1,32], index: 2, kind: input, shape index: {}]
  %s3 = inlined_call_operand.hbm [shape: f32[32,32], index: 3, kind: input, shape index: {}]
  %s4 = inlined_call_operand.vmem [shape: f32[1,32], index: 4, kind: input, shape index: {}]
  %s5 = inlined_call_operand.hbm [shape: f32[32,32], index: 5, kind: input, shape index: {}]
  %s6 = inlined_call_operand.vmem [shape: f32[1,32], index: 6, kind: input, shape index: {}]
  %s7 = inlined_call_operand.hbm [shape: f32[32,32], index: 7, kind: input, shape index: {}]
  %s8 = inlined_call_operand.vmem [shape: f32[1,32], index: 8, kind: input, shape index: {}]
  %s9 = inlined_call_operand.hbm [shape: f32[2,8,32], index: 9, kind: output, shape index: {}]
  %s10 = sld [smem:[#allocation0]]
  $region66: #{tpu_custom_call.1} parent=0
    _
  %s12 = ssub.s32 1, %s10
  %s13 = scalar_select 0, %s12, %s10
  $region1: #{tpu_custom_call.1} parent=0
    #allocation2 [shape = 'u8[8192]{0}', space=vmem, size = 0x2000, scoped, tag = 'input window, operand 0, single buffered']
    #allocation3 [shape = 's32[1]{0}', space=sflag, size = 0x4, scoped, tag = 'scoped memory for tpu_custom_call.1']
    #allocation4 [shape = 's32[1]{0}', space=sflag, size = 0x4, scoped, tag = 'scoped memory for tpu_custom_call.1']
    #allocation5 [shape = 'u8[16384]{0}', space=vmem, size = 0x4000, scoped, tag = 'input window, operand 1, single buffered']
    #allocation6 [shape = 's32[1]{0}', space=sflag, size = 0x4, scoped, tag = 'scoped memory for tpu_custom_call.1']
    #allocation7 [shape = 'u8[16384]{0}', space=vmem, size = 0x4000, scoped, tag = 'input window, operand 3, single buffered']
    #allocation8 [shape = 'u8[16384]{0}', space=vmem, size = 0x4000, scoped, tag = 'input window, operand 5, single buffered']
    #allocation9 [shape = 's32[1]{0}', space=sflag, size = 0x4, scoped, tag = 'scoped memory for tpu_custom_call.1']
    #allocation10 [shape = 'u8[16384]{0}', space=vmem, size = 0x4000, scoped, tag = 'input window, operand 7, single buffered']
    #allocation11 [shape = 'u8[8192]{0}', space=vmem, size = 0x2000, scoped, tag = 'output window, operand 0, single buffered']
    %14 = vsyncpa [#allocation3], 0
    %15 = vsyncpa [#allocation6], 0
    %16 = vsyncpa [#allocation9], 0
    %17 = vsyncpa [#allocation4], 0
    // Predicated region
    $region2: #{tpu_custom_call.1} parent=1 // pred_check
      _
    $region3: #{tpu_custom_call.1} parent=1 // pred_check_branch
      %19 = sbr.rel (0) target = $region5
    $region4: #{tpu_custom_call.1} parent=1 // pred_region
      %s21 = ssub.s32 256, 256
      %22 = vsyncadd [#allocation3], %s21
      %s23 = sshll.u32 [#allocation2], 4
      %s24 = int_to_ptr.vmem [resolvable:$true] %s23
      %29 = dma.hbm_to_vmem [thread:$0]  %s0, 256, %s24, [#allocation3], 128, 128, 8
    $region5: #{tpu_custom_call.1} parent=1 // pred_fallthru
      _
    // Predicated region
    $region6: #{tpu_custom_call.1} parent=1 // pred_check
      _
    $region7: #{tpu_custom_call.1} parent=1 // pred_check_branch
      %31 = sbr.rel (0) target = $region9
    $region8: #{tpu_custom_call.1} parent=1 // pred_region
      %s33 = ssub.s32 512, 512
      %34 = vsyncadd [#allocation6], %s33
      %s35 = sshll.u32 [#allocation5], 4
      %s36 = int_to_ptr.vmem [resolvable:$true] %s35
      %41 = dma.hbm_to_vmem [thread:$0]  %s1, 512, %s36, [#allocation6], 128, 128, 8
    $region9: #{tpu_custom_call.1} parent=1 // pred_fallthru
      _
    // Predicated region
    $region10: #{tpu_custom_call.1} parent=1 // pred_check
      _
    $region11: #{tpu_custom_call.1} parent=1 // pred_check_branch
      %43 = sbr.rel (0) target = $region13
    $region12: #{tpu_custom_call.1} parent=1 // pred_region
      _
    $region13: #{tpu_custom_call.1} parent=1 // pred_fallthru
      _
    // Predicated region
    $region14: #{tpu_custom_call.1} parent=1 // pred_check
      _
    $region15: #{tpu_custom_call.1} parent=1 // pred_check_branch
      %45 = sbr.rel (0) target = $region17
    $region16: #{tpu_custom_call.1} parent=1 // pred_region
      %s47 = ssub.s32 512, 512
      %48 = vsyncadd [#allocation6], %s47
      %s49 = sshll.u32 [#allocation7], 4
      %s50 = int_to_ptr.vmem [resolvable:$true] %s49
      %55 = dma.hbm_to_vmem [thread:$0]  %s3, 512, %s50, [#allocation6], 128, 128, 8
    $region17: #{tpu_custom_call.1} parent=1 // pred_fallthru
      _
    // Predicated region
    $region18: #{tpu_custom_call.1} parent=1 // pred_check
      _
    $region19: #{tpu_custom_call.1} parent=1 // pred_check_branch
      %57 = sbr.rel (0) target = $region21
    $region20: #{tpu_custom_call.1} parent=1 // pred_region
      _
    $region21: #{tpu_custom_call.1} parent=1 // pred_fallthru
      _
    // Predicated region
    $region22: #{tpu_custom_call.1} parent=1 // pred_check
      _
    $region23: #{tpu_custom_call.1} parent=1 // pred_check_branch
      %59 = sbr.rel (0) target = $region25
    $region24: #{tpu_custom_call.1} parent=1 // pred_region
      %s61 = ssub.s32 512, 512
      %62 = vsyncadd [#allocation9], %s61
      %s63 = sshll.u32 [#allocation8], 4
      %s64 = int_to_ptr.vmem [resolvable:$true] %s63
      %69 = dma.hbm_to_vmem [thread:$0]  %s5, 512, %s64, [#allocation9], 128, 128, 8
    $region25: #{tpu_custom_call.1} parent=1 // pred_fallthru
      _
    // Predicated region
    $region26: #{tpu_custom_call.1} parent=1 // pred_check
      _
    $region27: #{tpu_custom_call.1} parent=1 // pred_check_branch
      %71 = sbr.rel (0) target = $region29
    $region28: #{tpu_custom_call.1} parent=1 // pred_region
      _
    $region29: #{tpu_custom_call.1} parent=1 // pred_fallthru
      _
    // Predicated region
    $region30: #{tpu_custom_call.1} parent=1 // pred_check
      _
    $region31: #{tpu_custom_call.1} parent=1 // pred_check_branch
      %73 = sbr.rel (0) target = $region33
    $region32: #{tpu_custom_call.1} parent=1 // pred_region
      %s75 = ssub.s32 512, 512
      %76 = vsyncadd [#allocation9], %s75
      %s77 = sshll.u32 [#allocation10], 4
      %s78 = int_to_ptr.vmem [resolvable:$true] %s77
      %83 = dma.hbm_to_vmem [thread:$0]  %s7, 512, %s78, [#allocation9], 128, 128, 8
    $region33: #{tpu_custom_call.1} parent=1 // pred_fallthru
      _
    // Predicated region
    $region34: #{tpu_custom_call.1} parent=1 // pred_check
      _
    $region35: #{tpu_custom_call.1} parent=1 // pred_check_branch
      %85 = sbr.rel (0) target = $region37
    $region36: #{tpu_custom_call.1} parent=1 // pred_region
      _
    $region37: #{tpu_custom_call.1} parent=1 // pred_fallthru
      _
    // Predicated region
    $region38: #{tpu_custom_call.1} parent=1 // pred_check
      _
    $region39: #{tpu_custom_call.1} parent=1 // pred_check_branch
      %87 = sbr.rel (0) target = $region41
    $region40: #{tpu_custom_call.1} parent=1 // pred_region
      %88 = dma.done [#allocation3], 256
    $region41: #{tpu_custom_call.1} parent=1 // pred_fallthru
      _
    // Predicated region
    $region42: #{tpu_custom_call.1} parent=1 // pred_check
      _
    $region43: #{tpu_custom_call.1} parent=1 // pred_check_branch
      %90 = sbr.rel (0) target = $region45
    $region44: #{tpu_custom_call.1} parent=1 // pred_region
      %91 = dma.done [#allocation6], 512
    $region45: #{tpu_custom_call.1} parent=1 // pred_fallthru
      _
    // Predicated region
    $region46: #{tpu_custom_call.1} parent=1 // pred_check
      _
    $region47: #{tpu_custom_call.1} parent=1 // pred_check_branch
      %93 = sbr.rel (0) target = $region49
    $region48: #{tpu_custom_call.1} parent=1 // pred_region
      %94 = dma.done [#allocation6], 512
    $region49: #{tpu_custom_call.1} parent=1 // pred_fallthru
      _
    // Predicated region
    $region50: #{tpu_custom_call.1} parent=1 // pred_check
      _
    $region51: #{tpu_custom_call.1} parent=1 // pred_check_branch
      %96 = sbr.rel (0) target = $region53
    $region52: #{tpu_custom_call.1} parent=1 // pred_region
      %97 = dma.done [#allocation9], 512
    $region53: #{tpu_custom_call.1} parent=1 // pred_fallthru
      _
    // Predicated region
    $region54: #{tpu_custom_call.1} parent=1 // pred_check
      _
    $region55: #{tpu_custom_call.1} parent=1 // pred_check_branch
      %99 = sbr.rel (0) target = $region57
    $region56: #{tpu_custom_call.1} parent=1 // pred_region
      %100 = dma.done [#allocation9], 512
    $region57: #{tpu_custom_call.1} parent=1 // pred_fallthru
      _
    %v101 = vld [vmem:[#allocation2] sm:$0xff]
    %v102 = vld [vmem:[#allocation2 + $0x8] sm:$0xff]
    %v103 = vld [vmem:[#allocation5] sm:$0xff]
    %v104 = vld [vmem:[#allocation5 + $0x8] sm:$0xff]
    %v105 = vld [vmem:[#allocation5 + $0x10] sm:$0xff]
    %v106 = vld [vmem:[#allocation5 + $0x18] sm:$0xff]
    %v107 = vld [vmem:[#allocation7] sm:$0xff]
    %v108 = vld [vmem:[#allocation7 + $0x8] sm:$0xff]
    %v109 = vld [vmem:[#allocation7 + $0x10] sm:$0xff]
    %v110 = vld [vmem:[#allocation7 + $0x18] sm:$0xff]
    %v111 = vld [vmem:[#allocation8] sm:$0xff]
    %v112 = vld [vmem:[#allocation8 + $0x8] sm:$0xff]
    %v113 = vld [vmem:[#allocation8 + $0x10] sm:$0xff]
    %v114 = vld [vmem:[#allocation8 + $0x18] sm:$0xff]
    %v115 = vld [vmem:[%s2] sm:$0x1]
    %v116 = vld [vmem:[%s4] sm:$0x1]
    %v117 = vld [vmem:[%s6] sm:$0x1]
    %v119 = vlaneseq
    %v120 = vshrl.u32 %v119, 7
    %v121 = vsub.s32 0, %v120
    %v122 = vrot.slane %v115, %v121
    %vm124 = vcmask 261120
    %v126 = vsel %vm124, %v101, 0
    %v129 = vsel %vm124, %v102, 0
    %131 = vmatprep.subr.mxu0 0.0
    %132 = vmatpush1.msra.mxu0 %v103
    %133 = vmatprep.subr.mxu0 0.0
    %134 = vmatpush1.msra.mxu0 %v104
    %135 = vmatprep.subr.mxu0 0.0
    %136 = vmatpush1.msra.mxu0 %v105
    %137 = vmatprep.subr.mxu0 0.0
    %138 = vmatpush1.msra.mxu0 %v106
    %139 = vmatprep.subr.mxu0 0.0
    %140 = vmatpush1.msra.mxu0 0.0
    %141 = vmatprep.subr.mxu0 0.0
    %142 = vmatpush1.msra.mxu0 0.0
    %143 = vmatprep.subr.mxu0 0.0
    %144 = vmatpush1.msra.mxu0 0.0
    %145 = vmatprep.subr.mxu0 0.0
    %146 = vmatpush1.msra.mxu0 0.0
    %147 = vmatprep.subr.mxu0 0.0
    %148 = vmatpush1.msra.mxu0 0.0
    %149 = vmatprep.subr.mxu0 0.0
    %150 = vmatpush1.msra.mxu0 0.0
    %151 = vmatprep.subr.mxu0 0.0
    %152 = vmatpush1.msra.mxu0 0.0
    %153 = vmatprep.subr.mxu0 0.0
    %154 = vmatpush1.msra.mxu0 0.0
    %155 = vmatprep.subr.mxu0 0.0
    %156 = vmatpush1.msra.mxu0 0.0
    %157 = vmatprep.subr.mxu0 0.0
    %158 = vmatpush1.msra.mxu0 0.0
    %159 = vmatprep.subr.mxu0 0.0
    %160 = vmatpush1.msra.mxu0 0.0
    %161 = vmatprep.subr.mxu0 0.0
    %162 = vmatpush1.msra.mxu0 0.0
    %163 = vmatprep.subr.mxu0 0.0
    %164 = vmatpush1.msra.mxu0 0.0
    %165 = vmatprep.subr.mxu0 0.0
    %166 = vmatpush1.msra.mxu0 0.0
    %167 = vmatprep.subr.mxu0 0.0
    %168 = vmatpush1.msra.mxu0 0.0
    %169 = vmatprep.subr.mxu0 0.0
    %170 = vmatpush1.msra.mxu0 0.0
    %171 = vmatprep.subr.mxu0 0.0
    %172 = vmatpush1.msra.mxu0 0.0
    %173 = vmatprep.subr.mxu0 0.0
    %174 = vmatpush1.msra.mxu0 0.0
    %175 = vmatprep.subr.mxu0 0.0
    %176 = vmatpush1.msra.mxu0 0.0
    %177 = vmatprep.subr.mxu0 0.0
    %178 = vmatpush1.msra.mxu0 0.0
    %179 = vmatprep.subr.mxu0 0.0
    %180 = vmatpush1.msra.mxu0 0.0
    %181 = vmatprep.subr.mxu0 0.0
    %182 = vmatpush1.msra.mxu0 0.0
    %183 = vmatprep.subr.mxu0 0.0
    %184 = vmatpush1.msra.mxu0 0.0
    %185 = vmatprep.subr.mxu0 0.0
    %186 = vmatpush1.msra.mxu0 0.0
    %187 = vmatprep.subr.mxu0 0.0
    %188 = vmatpush1.msra.mxu0 0.0
    %189 = vmatprep.subr.mxu0 0.0
    %190 = vmatpush1.msra.mxu0 0.0
    %191 = vmatprep.subr.mxu0 0.0
    %192 = vmatpush1.msra.mxu0 0.0
    %193 = vmatprep.subr.mxu0 0.0
    %194 = vmatpush1.msra.mxu0 0.0
    %195 = vmatprep.mubr.f32.mxu0 0.0
    %196 = vmatmul.mubr.f32.gmra.mrb[0].mxu0 %v126
    %v197 = vpop.f32.mrb[0].mxu0
    %v198 = vadd.f32 %v122, %v197
    %v199 = vpop.f32.mrb[0].mxu0
    %200 = vmatprep.mubr.f32.mxu0 0.0
    %201 = vmatmul.mubr.f32.gmra.mrb[0].mxu0 %v129
    %v202 = vpop.f32.mrb[0].mxu0
    %v203 = vadd.f32 %v122, %v202
    %v204 = vpop.f32.mrb[0].mxu0
    %205 = vdwg.mxu0
    %v207 = vlaneseq
    %v208 = vshrl.u32 %v207, 7
    %v209 = vsub.s32 0, %v208
    %v210 = vrot.slane %v116, %v209
    %212 = vmatprep.subr.mxu0 0.0
    %213 = vmatpush1.msra.mxu0 %v107
    %214 = vmatprep.subr.mxu0 0.0
    %215 = vmatpush1.msra.mxu0 %v108
    %216 = vmatprep.subr.mxu0 0.0
    %217 = vmatpush1.msra.mxu0 %v109
    %218 = vmatprep.subr.mxu0 0.0
    %219 = vmatpush1.msra.mxu0 %v110
    %220 = vmatprep.subr.mxu0 0.0
    %221 = vmatpush1.msra.mxu0 0.0
    %222 = vmatprep.subr.mxu0 0.0
    %223 = vmatpush1.msra.mxu0 0.0
    %224 = vmatprep.subr.mxu0 0.0
    %225 = vmatpush1.msra.mxu0 0.0
    %226 = vmatprep.subr.mxu0 0.0
    %227 = vmatpush1.msra.mxu0 0.0
    %228 = vmatprep.subr.mxu0 0.0
    %229 = vmatpush1.msra.mxu0 0.0
    %230 = vmatprep.subr.mxu0 0.0
    %231 = vmatpush1.msra.mxu0 0.0
    %232 = vmatprep.subr.mxu0 0.0
    %233 = vmatpush1.msra.mxu0 0.0
    %234 = vmatprep.subr.mxu0 0.0
    %235 = vmatpush1.msra.mxu0 0.0
    %236 = vmatprep.subr.mxu0 0.0
    %237 = vmatpush1.msra.mxu0 0.0
    %238 = vmatprep.subr.mxu0 0.0
    %239 = vmatpush1.msra.mxu0 0.0
    %240 = vmatprep.subr.mxu0 0.0
    %241 = vmatpush1.msra.mxu0 0.0
    %242 = vmatprep.subr.mxu0 0.0
    %243 = vmatpush1.msra.mxu0 0.0
    %244 = vmatprep.subr.mxu0 0.0
    %245 = vmatpush1.msra.mxu0 0.0
    %246 = vmatprep.subr.mxu0 0.0
    %247 = vmatpush1.msra.mxu0 0.0
    %248 = vmatprep.subr.mxu0 0.0
    %249 = vmatpush1.msra.mxu0 0.0
    %250 = vmatprep.subr.mxu0 0.0
    %251 = vmatpush1.msra.mxu0 0.0
    %252 = vmatprep.subr.mxu0 0.0
    %253 = vmatpush1.msra.mxu0 0.0
    %254 = vmatprep.subr.mxu0 0.0
    %255 = vmatpush1.msra.mxu0 0.0
    %256 = vmatprep.subr.mxu0 0.0
    %257 = vmatpush1.msra.mxu0 0.0
    %258 = vmatprep.subr.mxu0 0.0
    %259 = vmatpush1.msra.mxu0 0.0
    %260 = vmatprep.subr.mxu0 0.0
    %261 = vmatpush1.msra.mxu0 0.0
    %262 = vmatprep.subr.mxu0 0.0
    %263 = vmatpush1.msra.mxu0 0.0
    %264 = vmatprep.subr.mxu0 0.0
    %265 = vmatpush1.msra.mxu0 0.0
    %266 = vmatprep.subr.mxu0 0.0
    %267 = vmatpush1.msra.mxu0 0.0
    %268 = vmatprep.subr.mxu0 0.0
    %269 = vmatpush1.msra.mxu0 0.0
    %270 = vmatprep.subr.mxu0 0.0
    %271 = vmatpush1.msra.mxu0 0.0
    %272 = vmatprep.subr.mxu0 0.0
    %273 = vmatpush1.msra.mxu0 0.0
    %274 = vmatprep.subr.mxu0 0.0
    %275 = vmatpush1.msra.mxu0 0.0
    %276 = vmatprep.mubr.f32.mxu0 0.0
    %277 = vmatmul.mubr.f32.gmra.mrb[0].mxu0 %v126
    %v278 = vpop.f32.mrb[0].mxu0
    %v279 = vadd.f32 %v210, %v278
    %v280 = vpop.f32.mrb[0].mxu0
    %281 = vmatprep.mubr.f32.mxu0 0.0
    %282 = vmatmul.mubr.f32.gmra.mrb[0].mxu0 %v129
    %v283 = vpop.f32.mrb[0].mxu0
    %v284 = vadd.f32 %v210, %v283
    %v285 = vpop.f32.mrb[0].mxu0
    %286 = vdwg.mxu0
    %v288 = vlaneseq
    %v289 = vshrl.u32 %v288, 7
    %v290 = vsub.s32 0, %v289
    %v291 = vrot.slane %v117, %v290
    %293 = vmatprep.subr.mxu0 0.0
    %294 = vmatpush1.msra.mxu0 %v111
    %295 = vmatprep.subr.mxu0 0.0
    %296 = vmatpush1.msra.mxu0 %v112
    %297 = vmatprep.subr.mxu0 0.0
    %298 = vmatpush1.msra.mxu0 %v113
    %299 = vmatprep.subr.mxu0 0.0
    %300 = vmatpush1.msra.mxu0 %v114
    %301 = vmatprep.subr.mxu0 0.0
    %302 = vmatpush1.msra.mxu0 0.0
    %303 = vmatprep.subr.mxu0 0.0
    %304 = vmatpush1.msra.mxu0 0.0
    %305 = vmatprep.subr.mxu0 0.0
    %306 = vmatpush1.msra.mxu0 0.0
    %307 = vmatprep.subr.mxu0 0.0
    %308 = vmatpush1.msra.mxu0 0.0
    %309 = vmatprep.subr.mxu0 0.0
    %310 = vmatpush1.msra.mxu0 0.0
    %311 = vmatprep.subr.mxu0 0.0
    %312 = vmatpush1.msra.mxu0 0.0
    %313 = vmatprep.subr.mxu0 0.0
    %314 = vmatpush1.msra.mxu0 0.0
    %315 = vmatprep.subr.mxu0 0.0
    %316 = vmatpush1.msra.mxu0 0.0
    %317 = vmatprep.subr.mxu0 0.0
    %318 = vmatpush1.msra.mxu0 0.0
    %319 = vmatprep.subr.mxu0 0.0
    %320 = vmatpush1.msra.mxu0 0.0
    %321 = vmatprep.subr.mxu0 0.0
    %322 = vmatpush1.msra.mxu0 0.0
    %323 = vmatprep.subr.mxu0 0.0
    %324 = vmatpush1.msra.mxu0 0.0
    %325 = vmatprep.subr.mxu0 0.0
    %326 = vmatpush1.msra.mxu0 0.0
    %327 = vmatprep.subr.mxu0 0.0
    %328 = vmatpush1.msra.mxu0 0.0
    %329 = vmatprep.subr.mxu0 0.0
    %330 = vmatpush1.msra.mxu0 0.0
    %331 = vmatprep.subr.mxu0 0.0
    %332 = vmatpush1.msra.mxu0 0.0
    %333 = vmatprep.subr.mxu0 0.0
    %334 = vmatpush1.msra.mxu0 0.0
    %335 = vmatprep.subr.mxu0 0.0
    %336 = vmatpush1.msra.mxu0 0.0
    %337 = vmatprep.subr.mxu0 0.0
    %338 = vmatpush1.msra.mxu0 0.0
    %339 = vmatprep.subr.mxu0 0.0
    %340 = vmatpush1.msra.mxu0 0.0
    %341 = vmatprep.subr.mxu0 0.0
    %342 = vmatpush1.msra.mxu0 0.0
    %343 = vmatprep.subr.mxu0 0.0
    %344 = vmatpush1.msra.mxu0 0.0
    %345 = vmatprep.subr.mxu0 0.0
    %346 = vmatpush1.msra.mxu0 0.0
    %347 = vmatprep.subr.mxu0 0.0
    %348 = vmatpush1.msra.mxu0 0.0
    %349 = vmatprep.subr.mxu0 0.0
    %350 = vmatpush1.msra.mxu0 0.0
    %351 = vmatprep.subr.mxu0 0.0
    %352 = vmatpush1.msra.mxu0 0.0
    %353 = vmatprep.subr.mxu0 0.0
    %354 = vmatpush1.msra.mxu0 0.0
    %355 = vmatprep.subr.mxu0 0.0
    %356 = vmatpush1.msra.mxu0 0.0
    %357 = vmatprep.mubr.f32.mxu0 0.0
    %358 = vmatmul.mubr.f32.gmra.mrb[0].mxu0 %v126
    %v359 = vpop.f32.mrb[0].mxu0
    %v360 = vadd.f32 %v291, %v359
    %v361 = vpop.f32.mrb[0].mxu0
    %362 = vmatprep.mubr.f32.mxu0 0.0
    %363 = vmatmul.mubr.f32.gmra.mrb[0].mxu0 %v129
    %v364 = vpop.f32.mrb[0].mxu0
    %v365 = vadd.f32 %v291, %v364
    %v366 = vpop.f32.mrb[0].mxu0
    %367 = vdwg.mxu0
    %vm368 = vcmask 64512
    %v370 = vsel %vm368, %v198, 0
    %v373 = vsel %vm368, %v279, 0
    %375 = vmatprep.subr.mxu0 0.0
    %376 = vmatpush1.xpose.msra.mxu0 %v373
    %377 = vmatprep.subr.mxu0 0.0
    %378 = vmatpush1.xpose.msra.mxu0 0.0
    %379 = vmatprep.subr.mxu0 0.0
    %380 = vmatpush1.xpose.msra.mxu0 0.0
    %381 = vmatprep.subr.mxu0 0.0
    %382 = vmatpush1.xpose.msra.mxu0 0.0
    %383 = vmatprep.subr.mxu0 0.0
    %384 = vmatpush1.xpose.msra.mxu0 0.0
    %385 = vmatprep.subr.mxu0 0.0
    %386 = vmatpush1.xpose.msra.mxu0 0.0
    %387 = vmatprep.subr.mxu0 0.0
    %388 = vmatpush1.xpose.msra.mxu0 0.0
    %389 = vmatprep.subr.mxu0 0.0
    %390 = vmatpush1.xpose.msra.mxu0 0.0
    %391 = vmatprep.subr.mxu0 0.0
    %392 = vmatpush1.xpose.msra.mxu0 0.0
    %393 = vmatprep.subr.mxu0 0.0
    %394 = vmatpush1.xpose.msra.mxu0 0.0
    %395 = vmatprep.subr.mxu0 0.0
    %396 = vmatpush1.xpose.msra.mxu0 0.0
    %397 = vmatprep.subr.mxu0 0.0
    %398 = vmatpush1.xpose.msra.mxu0 0.0
    %399 = vmatprep.subr.mxu0 0.0
    %400 = vmatpush1.xpose.msra.mxu0 0.0
    %401 = vmatprep.subr.mxu0 0.0
    %402 = vmatpush1.xpose.msra.mxu0 0.0
    %403 = vmatprep.subr.mxu0 0.0
    %404 = vmatpush1.xpose.msra.mxu0 0.0
    %405 = vmatprep.subr.mxu0 0.0
    %406 = vmatpush1.xpose.msra.mxu0 0.0
    %407 = vmatprep.subr.mxu0 0.0
    %408 = vmatpush1.xpose.msra.mxu0 0.0
    %409 = vmatprep.subr.mxu0 0.0
    %410 = vmatpush1.xpose.msra.mxu0 0.0
    %411 = vmatprep.subr.mxu0 0.0
    %412 = vmatpush1.xpose.msra.mxu0 0.0
    %413 = vmatprep.subr.mxu0 0.0
    %414 = vmatpush1.xpose.msra.mxu0 0.0
    %415 = vmatprep.subr.mxu0 0.0
    %416 = vmatpush1.xpose.msra.mxu0 0.0
    %417 = vmatprep.subr.mxu0 0.0
    %418 = vmatpush1.xpose.msra.mxu0 0.0
    %419 = vmatprep.subr.mxu0 0.0
    %420 = vmatpush1.xpose.msra.mxu0 0.0
    %421 = vmatprep.subr.mxu0 0.0
    %422 = vmatpush1.xpose.msra.mxu0 0.0
    %423 = vmatprep.subr.mxu0 0.0
    %424 = vmatpush1.xpose.msra.mxu0 0.0
    %425 = vmatprep.subr.mxu0 0.0
    %426 = vmatpush1.xpose.msra.mxu0 0.0
    %427 = vmatprep.subr.mxu0 0.0
    %428 = vmatpush1.xpose.msra.mxu0 0.0
    %429 = vmatprep.subr.mxu0 0.0
    %430 = vmatpush1.xpose.msra.mxu0 0.0
    %431 = vmatprep.subr.mxu0 0.0
    %432 = vmatpush1.xpose.msra.mxu0 0.0
    %433 = vmatprep.subr.mxu0 0.0
    %434 = vmatpush1.xpose.msra.mxu0 0.0
    %435 = vmatprep.subr.mxu0 0.0
    %436 = vmatpush1.xpose.msra.mxu0 0.0
    %437 = vmatprep.subr.mxu0 0.0
    %438 = vmatpush1.xpose.msra.mxu0 0.0
    %439 = vmatprep.mubr.f32.mxu0 0.0
    %440 = vmatmul.mubr.f32.gmra.mrb[0].mxu0 %v370
    %v441 = vpop.f32.mrb[0].mxu0
    %v442 = vadd.f32 0.0, %v441
    %v443 = vpop.f32.mrb[0].mxu0
    %444 = vdwg.mxu0
    %v446 = vsel %vm368, %v203, 0
    %v449 = vsel %vm368, %v284, 0
    %451 = vmatprep.subr.mxu0 0.0
    %452 = vmatpush1.xpose.msra.mxu0 %v449
    %453 = vmatprep.subr.mxu0 0.0
    %454 = vmatpush1.xpose.msra.mxu0 0.0
    %455 = vmatprep.subr.mxu0 0.0
    %456 = vmatpush1.xpose.msra.mxu0 0.0
    %457 = vmatprep.subr.mxu0 0.0
    %458 = vmatpush1.xpose.msra.mxu0 0.0
    %459 = vmatprep.subr.mxu0 0.0
    %460 = vmatpush1.xpose.msra.mxu0 0.0
    %461 = vmatprep.subr.mxu0 0.0
    %462 = vmatpush1.xpose.msra.mxu0 0.0
    %463 = vmatprep.subr.mxu0 0.0
    %464 = vmatpush1.xpose.msra.mxu0 0.0
    %465 = vmatprep.subr.mxu0 0.0
    %466 = vmatpush1.xpose.msra.mxu0 0.0
    %467 = vmatprep.subr.mxu0 0.0
    %468 = vmatpush1.xpose.msra.mxu0 0.0
    %469 = vmatprep.subr.mxu0 0.0
    %470 = vmatpush1.xpose.msra.mxu0 0.0
    %471 = vmatprep.subr.mxu0 0.0
    %472 = vmatpush1.xpose.msra.mxu0 0.0
    %473 = vmatprep.subr.mxu0 0.0
    %474 = vmatpush1.xpose.msra.mxu0 0.0
    %475 = vmatprep.subr.mxu0 0.0
    %476 = vmatpush1.xpose.msra.mxu0 0.0
    %477 = vmatprep.subr.mxu0 0.0
    %478 = vmatpush1.xpose.msra.mxu0 0.0
    %479 = vmatprep.subr.mxu0 0.0
    %480 = vmatpush1.xpose.msra.mxu0 0.0
    %481 = vmatprep.subr.mxu0 0.0
    %482 = vmatpush1.xpose.msra.mxu0 0.0
    %483 = vmatprep.subr.mxu0 0.0
    %484 = vmatpush1.xpose.msra.mxu0 0.0
    %485 = vmatprep.subr.mxu0 0.0
    %486 = vmatpush1.xpose.msra.mxu0 0.0
    %487 = vmatprep.subr.mxu0 0.0
    %488 = vmatpush1.xpose.msra.mxu0 0.0
    %489 = vmatprep.subr.mxu0 0.0
    %490 = vmatpush1.xpose.msra.mxu0 0.0
    %491 = vmatprep.subr.mxu0 0.0
    %492 = vmatpush1.xpose.msra.mxu0 0.0
    %493 = vmatprep.subr.mxu0 0.0
    %494 = vmatpush1.xpose.msra.mxu0 0.0
    %495 = vmatprep.subr.mxu0 0.0
    %496 = vmatpush1.xpose.msra.mxu0 0.0
    %497 = vmatprep.subr.mxu0 0.0
    %498 = vmatpush1.xpose.msra.mxu0 0.0
    %499 = vmatprep.subr.mxu0 0.0
    %500 = vmatpush1.xpose.msra.mxu0 0.0
    %501 = vmatprep.subr.mxu0 0.0
    %502 = vmatpush1.xpose.msra.mxu0 0.0
    %503 = vmatprep.subr.mxu0 0.0
    %504 = vmatpush1.xpose.msra.mxu0 0.0
    %505 = vmatprep.subr.mxu0 0.0
    %506 = vmatpush1.xpose.msra.mxu0 0.0
    %507 = vmatprep.subr.mxu0 0.0
    %508 = vmatpush1.xpose.msra.mxu0 0.0
    %509 = vmatprep.subr.mxu0 0.0
    %510 = vmatpush1.xpose.msra.mxu0 0.0
    %511 = vmatprep.subr.mxu0 0.0
    %512 = vmatpush1.xpose.msra.mxu0 0.0
    %513 = vmatprep.subr.mxu0 0.0
    %514 = vmatpush1.xpose.msra.mxu0 0.0
    %515 = vmatprep.mubr.f32.mxu0 0.0
    %516 = vmatmul.mubr.f32.gmra.mrb[0].mxu0 %v446
    %v517 = vpop.f32.mrb[0].mxu0
    %v518 = vadd.f32 0.0, %v517
    %v519 = vpop.f32.mrb[0].mxu0
    %520 = vdwg.mxu0
    %v521 = vmul.f32 %v442, 0.17677669
    %v522 = vmul.f32 %v518, 0.17677669
    %v523 = vsel %vm368, %v521, -inf
    %524 = vmax.xlane.f32.xlu0 %v523
    %v525 = vpop.xlane.xlu0 %524
    %v526 = vsel %vm368, %v522, -inf
    %527 = vmax.xlane.f32.xlu0 %v526
    %v528 = vpop.xlane.xlu0 %527
    %v529 = vsub.f32 %v521, %v525
    %v530 = vsub.f32 %v522, %v528
    %v531 = vmul.f32 %v529, 1.442695
    %v532 = vpow.pop %v531
    %v533 = vmul.f32 %v530, 1.442695
    %v534 = vpow.pop %v533
    %v535 = vsel %vm368, %v532, 0.0
    %536 = vadd.xlane.f32.xlu0 %v535
    %v537 = vpop.xlane.xlu0 %536
    %v538 = vsel %vm368, %v534, 0.0
    %539 = vadd.xlane.f32.xlu0 %v538
    %v540 = vpop.xlane.xlu0 %539
    %v541 = vrcp.pop %v537
    %v542 = vrcp.pop %v540
    %v543 = vmul.f32 %v532, %v541
    %v544 = vmul.f32 %v534, %v542
    %v546 = vsel %vm368, %v543, 0
    %548 = vmatprep.subr.mxu0 0.0
    %549 = vmatpush1.msra.mxu0 %v360
    %550 = vmatprep.subr.mxu0 0.0
    %551 = vmatpush1.msra.mxu0 0.0
    %552 = vmatprep.subr.mxu0 0.0
    %553 = vmatpush1.msra.mxu0 0.0
    %554 = vmatprep.subr.mxu0 0.0
    %555 = vmatpush1.msra.mxu0 0.0
    %556 = vmatprep.subr.mxu0 0.0
    %557 = vmatpush1.msra.mxu0 0.0
    %558 = vmatprep.subr.mxu0 0.0
    %559 = vmatpush1.msra.mxu0 0.0
    %560 = vmatprep.subr.mxu0 0.0
    %561 = vmatpush1.msra.mxu0 0.0
    %562 = vmatprep.subr.mxu0 0.0
    %563 = vmatpush1.msra.mxu0 0.0
    %564 = vmatprep.subr.mxu0 0.0
    %565 = vmatpush1.msra.mxu0 0.0
    %566 = vmatprep.subr.mxu0 0.0
    %567 = vmatpush1.msra.mxu0 0.0
    %568 = vmatprep.subr.mxu0 0.0
    %569 = vmatpush1.msra.mxu0 0.0
    %570 = vmatprep.subr.mxu0 0.0
    %571 = vmatpush1.msra.mxu0 0.0
    %572 = vmatprep.subr.mxu0 0.0
    %573 = vmatpush1.msra.mxu0 0.0
    %574 = vmatprep.subr.mxu0 0.0
    %575 = vmatpush1.msra.mxu0 0.0
    %576 = vmatprep.subr.mxu0 0.0
    %577 = vmatpush1.msra.mxu0 0.0
    %578 = vmatprep.subr.mxu0 0.0
    %579 = vmatpush1.msra.mxu0 0.0
    %580 = vmatprep.subr.mxu0 0.0
    %581 = vmatpush1.msra.mxu0 0.0
    %582 = vmatprep.subr.mxu0 0.0
    %583 = vmatpush1.msra.mxu0 0.0
    %584 = vmatprep.subr.mxu0 0.0
    %585 = vmatpush1.msra.mxu0 0.0
    %586 = vmatprep.subr.mxu0 0.0
    %587 = vmatpush1.msra.mxu0 0.0
    %588 = vmatprep.subr.mxu0 0.0
    %589 = vmatpush1.msra.mxu0 0.0
    %590 = vmatprep.subr.mxu0 0.0
    %591 = vmatpush1.msra.mxu0 0.0
    %592 = vmatprep.subr.mxu0 0.0
    %593 = vmatpush1.msra.mxu0 0.0
    %594 = vmatprep.subr.mxu0 0.0
    %595 = vmatpush1.msra.mxu0 0.0
    %596 = vmatprep.subr.mxu0 0.0
    %597 = vmatpush1.msra.mxu0 0.0
    %598 = vmatprep.subr.mxu0 0.0
    %599 = vmatpush1.msra.mxu0 0.0
    %600 = vmatprep.subr.mxu0 0.0
    %601 = vmatpush1.msra.mxu0 0.0
    %602 = vmatprep.subr.mxu0 0.0
    %603 = vmatpush1.msra.mxu0 0.0
    %604 = vmatprep.subr.mxu0 0.0
    %605 = vmatpush1.msra.mxu0 0.0
    %606 = vmatprep.subr.mxu0 0.0
    %607 = vmatpush1.msra.mxu0 0.0
    %608 = vmatprep.subr.mxu0 0.0
    %609 = vmatpush1.msra.mxu0 0.0
    %610 = vmatprep.subr.mxu0 0.0
    %611 = vmatpush1.msra.mxu0 0.0
    %612 = vmatprep.mubr.f32.mxu0 0.0
    %613 = vmatmul.mubr.f32.gmra.mrb[0].mxu0 %v546
    %v614 = vpop.f32.mrb[0].mxu0
    %v615 = vadd.f32 0.0, %v614
    %v616 = vpop.f32.mrb[0].mxu0
    %617 = vdwg.mxu0
    %v619 = vsel %vm368, %v544, 0
    %621 = vmatprep.subr.mxu0 0.0
    %622 = vmatpush1.msra.mxu0 %v365
    %623 = vmatprep.subr.mxu0 0.0
    %624 = vmatpush1.msra.mxu0 0.0
    %625 = vmatprep.subr.mxu0 0.0
    %626 = vmatpush1.msra.mxu0 0.0
    %627 = vmatprep.subr.mxu0 0.0
    %628 = vmatpush1.msra.mxu0 0.0
    %629 = vmatprep.subr.mxu0 0.0
    %630 = vmatpush1.msra.mxu0 0.0
    %631 = vmatprep.subr.mxu0 0.0
    %632 = vmatpush1.msra.mxu0 0.0
    %633 = vmatprep.subr.mxu0 0.0
    %634 = vmatpush1.msra.mxu0 0.0
    %635 = vmatprep.subr.mxu0 0.0
    %636 = vmatpush1.msra.mxu0 0.0
    %637 = vmatprep.subr.mxu0 0.0
    %638 = vmatpush1.msra.mxu0 0.0
    %639 = vmatprep.subr.mxu0 0.0
    %640 = vmatpush1.msra.mxu0 0.0
    %641 = vmatprep.subr.mxu0 0.0
    %642 = vmatpush1.msra.mxu0 0.0
    %643 = vmatprep.subr.mxu0 0.0
    %644 = vmatpush1.msra.mxu0 0.0
    %645 = vmatprep.subr.mxu0 0.0
    %646 = vmatpush1.msra.mxu0 0.0
    %647 = vmatprep.subr.mxu0 0.0
    %648 = vmatpush1.msra.mxu0 0.0
    %649 = vmatprep.subr.mxu0 0.0
    %650 = vmatpush1.msra.mxu0 0.0
    %651 = vmatprep.subr.mxu0 0.0
    %652 = vmatpush1.msra.mxu0 0.0
    %653 = vmatprep.subr.mxu0 0.0
    %654 = vmatpush1.msra.mxu0 0.0
    %655 = vmatprep.subr.mxu0 0.0
    %656 = vmatpush1.msra.mxu0 0.0
    %657 = vmatprep.subr.mxu0 0.0
    %658 = vmatpush1.msra.mxu0 0.0
    %659 = vmatprep.subr.mxu0 0.0
    %660 = vmatpush1.msra.mxu0 0.0
    %661 = vmatprep.subr.mxu0 0.0
    %662 = vmatpush1.msra.mxu0 0.0
    %663 = vmatprep.subr.mxu0 0.0
    %664 = vmatpush1.msra.mxu0 0.0
    %665 = vmatprep.subr.mxu0 0.0
    %666 = vmatpush1.msra.mxu0 0.0
    %667 = vmatprep.subr.mxu0 0.0
    %668 = vmatpush1.msra.mxu0 0.0
    %669 = vmatprep.subr.mxu0 0.0
    %670 = vmatpush1.msra.mxu0 0.0
    %671 = vmatprep.subr.mxu0 0.0
    %672 = vmatpush1.msra.mxu0 0.0
    %673 = vmatprep.subr.mxu0 0.0
    %674 = vmatpush1.msra.mxu0 0.0
    %675 = vmatprep.subr.mxu0 0.0
    %676 = vmatpush1.msra.mxu0 0.0
    %677 = vmatprep.subr.mxu0 0.0
    %678 = vmatpush1.msra.mxu0 0.0
    %679 = vmatprep.subr.mxu0 0.0
    %680 = vmatpush1.msra.mxu0 0.0
    %681 = vmatprep.subr.mxu0 0.0
    %682 = vmatpush1.msra.mxu0 0.0
    %683 = vmatprep.subr.mxu0 0.0
    %684 = vmatpush1.msra.mxu0 0.0
    %685 = vmatprep.mubr.f32.mxu0 0.0
    %686 = vmatmul.mubr.f32.gmra.mrb[0].mxu0 %v619
    %v687 = vpop.f32.mrb[0].mxu0
    %v688 = vadd.f32 0.0, %v687
    %v689 = vpop.f32.mrb[0].mxu0
    %690 = vdwg.mxu0
    %v691 = vld [vmem:[#allocation10] sm:$0xff]
    %v692 = vld [vmem:[#allocation5] sm:$0xff]
    %v693 = vld [vmem:[#allocation5 + $0x8] sm:$0xff]
    %v694 = vld [vmem:[#allocation5 + $0x10] sm:$0xff]
    %v695 = vld [vmem:[#allocation5 + $0x18] sm:$0xff]
    %v696 = vld [vmem:[#allocation7] sm:$0xff]
    %v697 = vld [vmem:[#allocation7 + $0x8] sm:$0xff]
    %v698 = vld [vmem:[#allocation7 + $0x10] sm:$0xff]
    %v699 = vld [vmem:[#allocation7 + $0x18] sm:$0xff]
    %v700 = vld [vmem:[#allocation8] sm:$0xff]
    %v701 = vld [vmem:[#allocation8 + $0x8] sm:$0xff]
    %v702 = vld [vmem:[#allocation8 + $0x10] sm:$0xff]
    %v703 = vld [vmem:[#allocation8 + $0x18] sm:$0xff]
    %v704 = vld [vmem:[%s2] sm:$0x1]
    %v705 = vld [vmem:[%s4] sm:$0x1]
    %v706 = vld [vmem:[%s6] sm:$0x1]
    %v708 = vlaneseq
    %v709 = vshrl.u32 %v708, 7
    %v710 = vsub.s32 0, %v709
    %v711 = vrot.slane %v704, %v710
    %716 = vrot.lane.b32.xlu0 %v692, 120
    %v717 = vpop.permute.xlu0 %716
    %718 = vrot.lane.b32.xlu0 %v693, 120
    %v719 = vpop.permute.xlu0 %718
    %720 = vrot.lane.b32.xlu0 %v694, 120
    %v721 = vpop.permute.xlu0 %720
    %722 = vrot.lane.b32.xlu0 %v695, 120
    %v723 = vpop.permute.xlu0 %722
    %728 = vrot.lane.b32.xlu0 %v711, 120
    %v729 = vpop.permute.xlu0 %728
    %731 = vmatprep.subr.mxu0 0.0
    %732 = vmatpush1.msra.mxu0 %v717
    %733 = vmatprep.subr.mxu0 0.0
    %734 = vmatpush1.msra.mxu0 %v719
    %735 = vmatprep.subr.mxu0 0.0
    %736 = vmatpush1.msra.mxu0 %v721
    %737 = vmatprep.subr.mxu0 0.0
    %738 = vmatpush1.msra.mxu0 %v723
    %739 = vmatprep.subr.mxu0 0.0
    %740 = vmatpush1.msra.mxu0 0.0
    %741 = vmatprep.subr.mxu0 0.0
    %742 = vmatpush1.msra.mxu0 0.0
    %743 = vmatprep.subr.mxu0 0.0
    %744 = vmatpush1.msra.mxu0 0.0
    %745 = vmatprep.subr.mxu0 0.0
    %746 = vmatpush1.msra.mxu0 0.0
    %747 = vmatprep.subr.mxu0 0.0
    %748 = vmatpush1.msra.mxu0 0.0
    %749 = vmatprep.subr.mxu0 0.0
    %750 = vmatpush1.msra.mxu0 0.0
    %751 = vmatprep.subr.mxu0 0.0
    %752 = vmatpush1.msra.mxu0 0.0
    %753 = vmatprep.subr.mxu0 0.0
    %754 = vmatpush1.msra.mxu0 0.0
    %755 = vmatprep.subr.mxu0 0.0
    %756 = vmatpush1.msra.mxu0 0.0
    %757 = vmatprep.subr.mxu0 0.0
    %758 = vmatpush1.msra.mxu0 0.0
    %759 = vmatprep.subr.mxu0 0.0
    %760 = vmatpush1.msra.mxu0 0.0
    %761 = vmatprep.subr.mxu0 0.0
    %762 = vmatpush1.msra.mxu0 0.0
    %763 = vmatprep.subr.mxu0 0.0
    %764 = vmatpush1.msra.mxu0 0.0
    %765 = vmatprep.subr.mxu0 0.0
    %766 = vmatpush1.msra.mxu0 0.0
    %767 = vmatprep.subr.mxu0 0.0
    %768 = vmatpush1.msra.mxu0 0.0
    %769 = vmatprep.subr.mxu0 0.0
    %770 = vmatpush1.msra.mxu0 0.0
    %771 = vmatprep.subr.mxu0 0.0
    %772 = vmatpush1.msra.mxu0 0.0
    %773 = vmatprep.subr.mxu0 0.0
    %774 = vmatpush1.msra.mxu0 0.0
    %775 = vmatprep.subr.mxu0 0.0
    %776 = vmatpush1.msra.mxu0 0.0
    %777 = vmatprep.subr.mxu0 0.0
    %778 = vmatpush1.msra.mxu0 0.0
    %779 = vmatprep.subr.mxu0 0.0
    %780 = vmatpush1.msra.mxu0 0.0
    %781 = vmatprep.subr.mxu0 0.0
    %782 = vmatpush1.msra.mxu0 0.0
    %783 = vmatprep.subr.mxu0 0.0
    %784 = vmatpush1.msra.mxu0 0.0
    %785 = vmatprep.subr.mxu0 0.0
    %786 = vmatpush1.msra.mxu0 0.0
    %787 = vmatprep.subr.mxu0 0.0
    %788 = vmatpush1.msra.mxu0 0.0
    %789 = vmatprep.subr.mxu0 0.0
    %790 = vmatpush1.msra.mxu0 0.0
    %791 = vmatprep.subr.mxu0 0.0
    %792 = vmatpush1.msra.mxu0 0.0
    %793 = vmatprep.subr.mxu0 0.0
    %794 = vmatpush1.msra.mxu0 0.0
    %795 = vmatprep.mubr.f32.mxu0 0.0
    %796 = vmatmul.mubr.f32.gmra.mrb[0].mxu0 %v126
    %v797 = vpop.f32.mrb[0].mxu0
    %v798 = vadd.f32 %v729, %v797
    %v799 = vpop.f32.mrb[0].mxu0
    %800 = vmatprep.mubr.f32.mxu0 0.0
    %801 = vmatmul.mubr.f32.gmra.mrb[0].mxu0 %v129
    %v802 = vpop.f32.mrb[0].mxu0
    %v803 = vadd.f32 %v729, %v802
    %v804 = vpop.f32.mrb[0].mxu0
    %805 = vdwg.mxu0
    %v807 = vlaneseq
    %v808 = vshrl.u32 %v807, 7
    %v809 = vsub.s32 0, %v808
    %v810 = vrot.slane %v705, %v809
    %815 = vrot.lane.b32.xlu0 %v696, 120
    %v816 = vpop.permute.xlu0 %815
    %817 = vrot.lane.b32.xlu0 %v697, 120
    %v818 = vpop.permute.xlu0 %817
    %819 = vrot.lane.b32.xlu0 %v698, 120
    %v820 = vpop.permute.xlu0 %819
    %821 = vrot.lane.b32.xlu0 %v699, 120
    %v822 = vpop.permute.xlu0 %821
    %827 = vrot.lane.b32.xlu0 %v810, 120
    %v828 = vpop.permute.xlu0 %827
    %830 = vmatprep.subr.mxu0 0.0
    %831 = vmatpush1.msra.mxu0 %v816
    %832 = vmatprep.subr.mxu0 0.0
    %833 = vmatpush1.msra.mxu0 %v818
    %834 = vmatprep.subr.mxu0 0.0
    %835 = vmatpush1.msra.mxu0 %v820
    %836 = vmatprep.subr.mxu0 0.0
    %837 = vmatpush1.msra.mxu0 %v822
    %838 = vmatprep.subr.mxu0 0.0
    %839 = vmatpush1.msra.mxu0 0.0
    %840 = vmatprep.subr.mxu0 0.0
    %841 = vmatpush1.msra.mxu0 0.0
    %842 = vmatprep.subr.mxu0 0.0
    %843 = vmatpush1.msra.mxu0 0.0
    %844 = vmatprep.subr.mxu0 0.0
    %845 = vmatpush1.msra.mxu0 0.0
    %846 = vmatprep.subr.mxu0 0.0
    %847 = vmatpush1.msra.mxu0 0.0
    %848 = vmatprep.subr.mxu0 0.0
    %849 = vmatpush1.msra.mxu0 0.0
    %850 = vmatprep.subr.mxu0 0.0
    %851 = vmatpush1.msra.mxu0 0.0
    %852 = vmatprep.subr.mxu0 0.0
    %853 = vmatpush1.msra.mxu0 0.0
    %854 = vmatprep.subr.mxu0 0.0
    %855 = vmatpush1.msra.mxu0 0.0
    %856 = vmatprep.subr.mxu0 0.0
    %857 = vmatpush1.msra.mxu0 0.0
    %858 = vmatprep.subr.mxu0 0.0
    %859 = vmatpush1.msra.mxu0 0.0
    %860 = vmatprep.subr.mxu0 0.0
    %861 = vmatpush1.msra.mxu0 0.0
    %862 = vmatprep.subr.mxu0 0.0
    %863 = vmatpush1.msra.mxu0 0.0
    %864 = vmatprep.subr.mxu0 0.0
    %865 = vmatpush1.msra.mxu0 0.0
    %866 = vmatprep.subr.mxu0 0.0
    %867 = vmatpush1.msra.mxu0 0.0
    %868 = vmatprep.subr.mxu0 0.0
    %869 = vmatpush1.msra.mxu0 0.0
    %870 = vmatprep.subr.mxu0 0.0
    %871 = vmatpush1.msra.mxu0 0.0
    %872 = vmatprep.subr.mxu0 0.0
    %873 = vmatpush1.msra.mxu0 0.0
    %874 = vmatprep.subr.mxu0 0.0
    %875 = vmatpush1.msra.mxu0 0.0
    %876 = vmatprep.subr.mxu0 0.0
    %877 = vmatpush1.msra.mxu0 0.0
    %878 = vmatprep.subr.mxu0 0.0
    %879 = vmatpush1.msra.mxu0 0.0
    %880 = vmatprep.subr.mxu0 0.0
    %881 = vmatpush1.msra.mxu0 0.0
    %882 = vmatprep.subr.mxu0 0.0
    %883 = vmatpush1.msra.mxu0 0.0
    %884 = vmatprep.subr.mxu0 0.0
    %885 = vmatpush1.msra.mxu0 0.0
    %886 = vmatprep.subr.mxu0 0.0
    %887 = vmatpush1.msra.mxu0 0.0
    %888 = vmatprep.subr.mxu0 0.0
    %889 = vmatpush1.msra.mxu0 0.0
    %890 = vmatprep.subr.mxu0 0.0
    %891 = vmatpush1.msra.mxu0 0.0
    %892 = vmatprep.subr.mxu0 0.0
    %893 = vmatpush1.msra.mxu0 0.0
    %894 = vmatprep.mubr.f32.mxu0 0.0
    %895 = vmatmul.mubr.f32.gmra.mrb[0].mxu0 %v126
    %v896 = vpop.f32.mrb[0].mxu0
    %v897 = vadd.f32 %v828, %v896
    %v898 = vpop.f32.mrb[0].mxu0
    %899 = vmatprep.mubr.f32.mxu0 0.0
    %900 = vmatmul.mubr.f32.gmra.mrb[0].mxu0 %v129
    %v901 = vpop.f32.mrb[0].mxu0
    %v902 = vadd.f32 %v828, %v901
    %v903 = vpop.f32.mrb[0].mxu0
    %904 = vdwg.mxu0
    %v906 = vlaneseq
    %v907 = vshrl.u32 %v906, 7
    %v908 = vsub.s32 0, %v907
    %v909 = vrot.slane %v706, %v908
    %914 = vrot.lane.b32.xlu0 %v700, 120
    %v915 = vpop.permute.xlu0 %914
    %916 = vrot.lane.b32.xlu0 %v701, 120
    %v917 = vpop.permute.xlu0 %916
    %918 = vrot.lane.b32.xlu0 %v702, 120
    %v919 = vpop.permute.xlu0 %918
    %920 = vrot.lane.b32.xlu0 %v703, 120
    %v921 = vpop.permute.xlu0 %920
    %926 = vrot.lane.b32.xlu0 %v909, 120
    %v927 = vpop.permute.xlu0 %926
    %929 = vmatprep.subr.mxu0 0.0
    %930 = vmatpush1.msra.mxu0 %v915
    %931 = vmatprep.subr.mxu0 0.0
    %932 = vmatpush1.msra.mxu0 %v917
    %933 = vmatprep.subr.mxu0 0.0
    %934 = vmatpush1.msra.mxu0 %v919
    %935 = vmatprep.subr.mxu0 0.0
    %936 = vmatpush1.msra.mxu0 %v921
    %937 = vmatprep.subr.mxu0 0.0
    %938 = vmatpush1.msra.mxu0 0.0
    %939 = vmatprep.subr.mxu0 0.0
    %940 = vmatpush1.msra.mxu0 0.0
    %941 = vmatprep.subr.mxu0 0.0
    %942 = vmatpush1.msra.mxu0 0.0
    %943 = vmatprep.subr.mxu0 0.0
    %944 = vmatpush1.msra.mxu0 0.0
    %945 = vmatprep.subr.mxu0 0.0
    %946 = vmatpush1.msra.mxu0 0.0
    %947 = vmatprep.subr.mxu0 0.0
    %948 = vmatpush1.msra.mxu0 0.0
    %949 = vmatprep.subr.mxu0 0.0
    %950 = vmatpush1.msra.mxu0 0.0
    %951 = vmatprep.subr.mxu0 0.0
    %952 = vmatpush1.msra.mxu0 0.0
    %953 = vmatprep.subr.mxu0 0.0
    %954 = vmatpush1.msra.mxu0 0.0
    %955 = vmatprep.subr.mxu0 0.0
    %956 = vmatpush1.msra.mxu0 0.0
    %957 = vmatprep.subr.mxu0 0.0
    %958 = vmatpush1.msra.mxu0 0.0
    %959 = vmatprep.subr.mxu0 0.0
    %960 = vmatpush1.msra.mxu0 0.0
    %961 = vmatprep.subr.mxu0 0.0
    %962 = vmatpush1.msra.mxu0 0.0
    %963 = vmatprep.subr.mxu0 0.0
    %964 = vmatpush1.msra.mxu0 0.0
    %965 = vmatprep.subr.mxu0 0.0
    %966 = vmatpush1.msra.mxu0 0.0
    %967 = vmatprep.subr.mxu0 0.0
    %968 = vmatpush1.msra.mxu0 0.0
    %969 = vmatprep.subr.mxu0 0.0
    %970 = vmatpush1.msra.mxu0 0.0
    %971 = vmatprep.subr.mxu0 0.0
    %972 = vmatpush1.msra.mxu0 0.0
    %973 = vmatprep.subr.mxu0 0.0
    %974 = vmatpush1.msra.mxu0 0.0
    %975 = vmatprep.subr.mxu0 0.0
    %976 = vmatpush1.msra.mxu0 0.0
    %977 = vmatprep.subr.mxu0 0.0
    %978 = vmatpush1.msra.mxu0 0.0
    %979 = vmatprep.subr.mxu0 0.0
    %980 = vmatpush1.msra.mxu0 0.0
    %981 = vmatprep.subr.mxu0 0.0
    %982 = vmatpush1.msra.mxu0 0.0
    %983 = vmatprep.subr.mxu0 0.0
    %984 = vmatpush1.msra.mxu0 0.0
    %985 = vmatprep.subr.mxu0 0.0
    %986 = vmatpush1.msra.mxu0 0.0
    %987 = vmatprep.subr.mxu0 0.0
    %988 = vmatpush1.msra.mxu0 0.0
    %989 = vmatprep.subr.mxu0 0.0
    %990 = vmatpush1.msra.mxu0 0.0
    %991 = vmatprep.subr.mxu0 0.0
    %992 = vmatpush1.msra.mxu0 0.0
    %993 = vmatprep.mubr.f32.mxu0 0.0
    %994 = vmatmul.mubr.f32.gmra.mrb[0].mxu0 %v126
    %v995 = vpop.f32.mrb[0].mxu0
    %v996 = vadd.f32 %v927, %v995
    %v997 = vpop.f32.mrb[0].mxu0
    %998 = vmatprep.mubr.f32.mxu0 0.0
    %999 = vmatmul.mubr.f32.gmra.mrb[0].mxu0 %v129
    %v1000 = vpop.f32.mrb[0].mxu0
    %v1001 = vadd.f32 %v927, %v1000
    %v1002 = vpop.f32.mrb[0].mxu0
    %1003 = vdwg.mxu0
    %v1005 = vsel %vm368, %v798, 0
    %v1008 = vsel %vm368, %v897, 0
    %1010 = vmatprep.subr.mxu0 0.0
    %1011 = vmatpush1.xpose.msra.mxu0 %v1008
    %1012 = vmatprep.subr.mxu0 0.0
    %1013 = vmatpush1.xpose.msra.mxu0 0.0
    %1014 = vmatprep.subr.mxu0 0.0
    %1015 = vmatpush1.xpose.msra.mxu0 0.0
    %1016 = vmatprep.subr.mxu0 0.0
    %1017 = vmatpush1.xpose.msra.mxu0 0.0
    %1018 = vmatprep.subr.mxu0 0.0
    %1019 = vmatpush1.xpose.msra.mxu0 0.0
    %1020 = vmatprep.subr.mxu0 0.0
    %1021 = vmatpush1.xpose.msra.mxu0 0.0
    %1022 = vmatprep.subr.mxu0 0.0
    %1023 = vmatpush1.xpose.msra.mxu0 0.0
    %1024 = vmatprep.subr.mxu0 0.0
    %1025 = vmatpush1.xpose.msra.mxu0 0.0
    %1026 = vmatprep.subr.mxu0 0.0
    %1027 = vmatpush1.xpose.msra.mxu0 0.0
    %1028 = vmatprep.subr.mxu0 0.0
    %1029 = vmatpush1.xpose.msra.mxu0 0.0
    %1030 = vmatprep.subr.mxu0 0.0
    %1031 = vmatpush1.xpose.msra.mxu0 0.0
    %1032 = vmatprep.subr.mxu0 0.0
    %1033 = vmatpush1.xpose.msra.mxu0 0.0
    %1034 = vmatprep.subr.mxu0 0.0
    %1035 = vmatpush1.xpose.msra.mxu0 0.0
    %1036 = vmatprep.subr.mxu0 0.0
    %1037 = vmatpush1.xpose.msra.mxu0 0.0
    %1038 = vmatprep.subr.mxu0 0.0
    %1039 = vmatpush1.xpose.msra.mxu0 0.0
    %1040 = vmatprep.subr.mxu0 0.0
    %1041 = vmatpush1.xpose.msra.mxu0 0.0
    %1042 = vmatprep.subr.mxu0 0.0
    %1043 = vmatpush1.xpose.msra.mxu0 0.0
    %1044 = vmatprep.subr.mxu0 0.0
    %1045 = vmatpush1.xpose.msra.mxu0 0.0
    %1046 = vmatprep.subr.mxu0 0.0
    %1047 = vmatpush1.xpose.msra.mxu0 0.0
    %1048 = vmatprep.subr.mxu0 0.0
    %1049 = vmatpush1.xpose.msra.mxu0 0.0
    %1050 = vmatprep.subr.mxu0 0.0
    %1051 = vmatpush1.xpose.msra.mxu0 0.0
    %1052 = vmatprep.subr.mxu0 0.0
    %1053 = vmatpush1.xpose.msra.mxu0 0.0
    %1054 = vmatprep.subr.mxu0 0.0
    %1055 = vmatpush1.xpose.msra.mxu0 0.0
    %1056 = vmatprep.subr.mxu0 0.0
    %1057 = vmatpush1.xpose.msra.mxu0 0.0
    %1058 = vmatprep.subr.mxu0 0.0
    %1059 = vmatpush1.xpose.msra.mxu0 0.0
    %1060 = vmatprep.subr.mxu0 0.0
    %1061 = vmatpush1.xpose.msra.mxu0 0.0
    %1062 = vmatprep.subr.mxu0 0.0
    %1063 = vmatpush1.xpose.msra.mxu0 0.0
    %1064 = vmatprep.subr.mxu0 0.0
    %1065 = vmatpush1.xpose.msra.mxu0 0.0
    %1066 = vmatprep.subr.mxu0 0.0
    %1067 = vmatpush1.xpose.msra.mxu0 0.0
    %1068 = vmatprep.subr.mxu0 0.0
    %1069 = vmatpush1.xpose.msra.mxu0 0.0
    %1070 = vmatprep.subr.mxu0 0.0
    %1071 = vmatpush1.xpose.msra.mxu0 0.0
    %1072 = vmatprep.subr.mxu0 0.0
    %1073 = vmatpush1.xpose.msra.mxu0 0.0
    %1074 = vmatprep.mubr.f32.mxu0 0.0
    %1075 = vmatmul.mubr.f32.gmra.mrb[0].mxu0 %v1005
    %v1076 = vpop.f32.mrb[0].mxu0
    %v1077 = vadd.f32 0.0, %v1076
    %v1078 = vpop.f32.mrb[0].mxu0
    %1079 = vdwg.mxu0
    %v1081 = vsel %vm368, %v803, 0
    %v1084 = vsel %vm368, %v902, 0
    %1086 = vmatprep.subr.mxu0 0.0
    %1087 = vmatpush1.xpose.msra.mxu0 %v1084
    %1088 = vmatprep.subr.mxu0 0.0
    %1089 = vmatpush1.xpose.msra.mxu0 0.0
    %1090 = vmatprep.subr.mxu0 0.0
    %1091 = vmatpush1.xpose.msra.mxu0 0.0
    %1092 = vmatprep.subr.mxu0 0.0
    %1093 = vmatpush1.xpose.msra.mxu0 0.0
    %1094 = vmatprep.subr.mxu0 0.0
    %1095 = vmatpush1.xpose.msra.mxu0 0.0
    %1096 = vmatprep.subr.mxu0 0.0
    %1097 = vmatpush1.xpose.msra.mxu0 0.0
    %1098 = vmatprep.subr.mxu0 0.0
    %1099 = vmatpush1.xpose.msra.mxu0 0.0
    %1100 = vmatprep.subr.mxu0 0.0
    %1101 = vmatpush1.xpose.msra.mxu0 0.0
    %1102 = vmatprep.subr.mxu0 0.0
    %1103 = vmatpush1.xpose.msra.mxu0 0.0
    %1104 = vmatprep.subr.mxu0 0.0
    %1105 = vmatpush1.xpose.msra.mxu0 0.0
    %1106 = vmatprep.subr.mxu0 0.0
    %1107 = vmatpush1.xpose.msra.mxu0 0.0
    %1108 = vmatprep.subr.mxu0 0.0
    %1109 = vmatpush1.xpose.msra.mxu0 0.0
    %1110 = vmatprep.subr.mxu0 0.0
    %1111 = vmatpush1.xpose.msra.mxu0 0.0
    %1112 = vmatprep.subr.mxu0 0.0
    %1113 = vmatpush1.xpose.msra.mxu0 0.0
    %1114 = vmatprep.subr.mxu0 0.0
    %1115 = vmatpush1.xpose.msra.mxu0 0.0
    %1116 = vmatprep.subr.mxu0 0.0
    %1117 = vmatpush1.xpose.msra.mxu0 0.0
    %1118 = vmatprep.subr.mxu0 0.0
    %1119 = vmatpush1.xpose.msra.mxu0 0.0
    %1120 = vmatprep.subr.mxu0 0.0
    %1121 = vmatpush1.xpose.msra.mxu0 0.0
    %1122 = vmatprep.subr.mxu0 0.0
    %1123 = vmatpush1.xpose.msra.mxu0 0.0
    %1124 = vmatprep.subr.mxu0 0.0
    %1125 = vmatpush1.xpose.msra.mxu0 0.0
    %1126 = vmatprep.subr.mxu0 0.0
    %1127 = vmatpush1.xpose.msra.mxu0 0.0
    %1128 = vmatprep.subr.mxu0 0.0
    %1129 = vmatpush1.xpose.msra.mxu0 0.0
    %1130 = vmatprep.subr.mxu0 0.0
    %1131 = vmatpush1.xpose.msra.mxu0 0.0
    %1132 = vmatprep.subr.mxu0 0.0
    %1133 = vmatpush1.xpose.msra.mxu0 0.0
    %1134 = vmatprep.subr.mxu0 0.0
    %1135 = vmatpush1.xpose.msra.mxu0 0.0
    %1136 = vmatprep.subr.mxu0 0.0
    %1137 = vmatpush1.xpose.msra.mxu0 0.0
    %1138 = vmatprep.subr.mxu0 0.0
    %1139 = vmatpush1.xpose.msra.mxu0 0.0
    %1140 = vmatprep.subr.mxu0 0.0
    %1141 = vmatpush1.xpose.msra.mxu0 0.0
    %1142 = vmatprep.subr.mxu0 0.0
    %1143 = vmatpush1.xpose.msra.mxu0 0.0
    %1144 = vmatprep.subr.mxu0 0.0
    %1145 = vmatpush1.xpose.msra.mxu0 0.0
    %1146 = vmatprep.subr.mxu0 0.0
    %1147 = vmatpush1.xpose.msra.mxu0 0.0
    %1148 = vmatprep.subr.mxu0 0.0
    %1149 = vmatpush1.xpose.msra.mxu0 0.0
    %1150 = vmatprep.mubr.f32.mxu0 0.0
    %1151 = vmatmul.mubr.f32.gmra.mrb[0].mxu0 %v1081
    %v1152 = vpop.f32.mrb[0].mxu0
    %v1153 = vadd.f32 0.0, %v1152
    %v1154 = vpop.f32.mrb[0].mxu0
    %1155 = vdwg.mxu0
    %v1156 = vmul.f32 %v1077, 0.17677669
    %v1157 = vmul.f32 %v1153, 0.17677669
    %v1158 = vsel %vm368, %v1156, -inf
    %1159 = vmax.xlane.f32.xlu0 %v1158
    %v1160 = vpop.xlane.xlu0 %1159
    %v1161 = vsel %vm368, %v1157, -inf
    %1162 = vmax.xlane.f32.xlu0 %v1161
    %v1163 = vpop.xlane.xlu0 %1162
    %v1164 = vsub.f32 %v1156, %v1160
    %v1165 = vsub.f32 %v1157, %v1163
    %v1166 = vmul.f32 %v1164, 1.442695
    %v1167 = vpow.pop %v1166
    %v1168 = vmul.f32 %v1165, 1.442695
    %v1169 = vpow.pop %v1168
    %v1170 = vsel %vm368, %v1167, 0.0
    %1171 = vadd.xlane.f32.xlu0 %v1170
    %v1172 = vpop.xlane.xlu0 %1171
    %v1173 = vsel %vm368, %v1169, 0.0
    %1174 = vadd.xlane.f32.xlu0 %v1173
    %v1175 = vpop.xlane.xlu0 %1174
    %v1176 = vrcp.pop %v1172
    %v1177 = vrcp.pop %v1175
    %v1178 = vmul.f32 %v1167, %v1176
    %v1179 = vmul.f32 %v1169, %v1177
    %v1181 = vsel %vm368, %v1178, 0
    %1183 = vmatprep.subr.mxu0 0.0
    %1184 = vmatpush1.msra.mxu0 %v996
    %1185 = vmatprep.subr.mxu0 0.0
    %1186 = vmatpush1.msra.mxu0 0.0
    %1187 = vmatprep.subr.mxu0 0.0
    %1188 = vmatpush1.msra.mxu0 0.0
    %1189 = vmatprep.subr.mxu0 0.0
    %1190 = vmatpush1.msra.mxu0 0.0
    %1191 = vmatprep.subr.mxu0 0.0
    %1192 = vmatpush1.msra.mxu0 0.0
    %1193 = vmatprep.subr.mxu0 0.0
    %1194 = vmatpush1.msra.mxu0 0.0
    %1195 = vmatprep.subr.mxu0 0.0
    %1196 = vmatpush1.msra.mxu0 0.0
    %1197 = vmatprep.subr.mxu0 0.0
    %1198 = vmatpush1.msra.mxu0 0.0
    %1199 = vmatprep.subr.mxu0 0.0
    %1200 = vmatpush1.msra.mxu0 0.0
    %1201 = vmatprep.subr.mxu0 0.0
    %1202 = vmatpush1.msra.mxu0 0.0
    %1203 = vmatprep.subr.mxu0 0.0
    %1204 = vmatpush1.msra.mxu0 0.0
    %1205 = vmatprep.subr.mxu0 0.0
    %1206 = vmatpush1.msra.mxu0 0.0
    %1207 = vmatprep.subr.mxu0 0.0
    %1208 = vmatpush1.msra.mxu0 0.0
    %1209 = vmatprep.subr.mxu0 0.0
    %1210 = vmatpush1.msra.mxu0 0.0
    %1211 = vmatprep.subr.mxu0 0.0
    %1212 = vmatpush1.msra.mxu0 0.0
    %1213 = vmatprep.subr.mxu0 0.0
    %1214 = vmatpush1.msra.mxu0 0.0
    %1215 = vmatprep.subr.mxu0 0.0
    %1216 = vmatpush1.msra.mxu0 0.0
    %1217 = vmatprep.subr.mxu0 0.0
    %1218 = vmatpush1.msra.mxu0 0.0
    %1219 = vmatprep.subr.mxu0 0.0
    %1220 = vmatpush1.msra.mxu0 0.0
    %1221 = vmatprep.subr.mxu0 0.0
    %1222 = vmatpush1.msra.mxu0 0.0
    %1223 = vmatprep.subr.mxu0 0.0
    %1224 = vmatpush1.msra.mxu0 0.0
    %1225 = vmatprep.subr.mxu0 0.0
    %1226 = vmatpush1.msra.mxu0 0.0
    %1227 = vmatprep.subr.mxu0 0.0
    %1228 = vmatpush1.msra.mxu0 0.0
    %1229 = vmatprep.subr.mxu0 0.0
    %1230 = vmatpush1.msra.mxu0 0.0
    %1231 = vmatprep.subr.mxu0 0.0
    %1232 = vmatpush1.msra.mxu0 0.0
    %1233 = vmatprep.subr.mxu0 0.0
    %1234 = vmatpush1.msra.mxu0 0.0
    %1235 = vmatprep.subr.mxu0 0.0
    %1236 = vmatpush1.msra.mxu0 0.0
    %1237 = vmatprep.subr.mxu0 0.0
    %1238 = vmatpush1.msra.mxu0 0.0
    %1239 = vmatprep.subr.mxu0 0.0
    %1240 = vmatpush1.msra.mxu0 0.0
    %1241 = vmatprep.subr.mxu0 0.0
    %1242 = vmatpush1.msra.mxu0 0.0
    %1243 = vmatprep.subr.mxu0 0.0
    %1244 = vmatpush1.msra.mxu0 0.0
    %1245 = vmatprep.subr.mxu0 0.0
    %1246 = vmatpush1.msra.mxu0 0.0
    %1247 = vmatprep.mubr.f32.mxu0 0.0
    %1248 = vmatmul.mubr.f32.gmra.mrb[0].mxu0 %v1181
    %v1249 = vpop.f32.mrb[0].mxu0
    %v1250 = vadd.f32 0.0, %v1249
    %v1251 = vpop.f32.mrb[0].mxu0
    %1252 = vdwg.mxu0
    %v1254 = vsel %vm368, %v1179, 0
    %1256 = vmatprep.subr.mxu0 0.0
    %1257 = vmatpush1.msra.mxu0 %v1001
    %1258 = vmatprep.subr.mxu0 0.0
    %1259 = vmatpush1.msra.mxu0 0.0
    %1260 = vmatprep.subr.mxu0 0.0
    %1261 = vmatpush1.msra.mxu0 0.0
    %1262 = vmatprep.subr.mxu0 0.0
    %1263 = vmatpush1.msra.mxu0 0.0
    %1264 = vmatprep.subr.mxu0 0.0
    %1265 = vmatpush1.msra.mxu0 0.0
    %1266 = vmatprep.subr.mxu0 0.0
    %1267 = vmatpush1.msra.mxu0 0.0
    %1268 = vmatprep.subr.mxu0 0.0
    %1269 = vmatpush1.msra.mxu0 0.0
    %1270 = vmatprep.subr.mxu0 0.0
    %1271 = vmatpush1.msra.mxu0 0.0
    %1272 = vmatprep.subr.mxu0 0.0
    %1273 = vmatpush1.msra.mxu0 0.0
    %1274 = vmatprep.subr.mxu0 0.0
    %1275 = vmatpush1.msra.mxu0 0.0
    %1276 = vmatprep.subr.mxu0 0.0
    %1277 = vmatpush1.msra.mxu0 0.0
    %1278 = vmatprep.subr.mxu0 0.0
    %1279 = vmatpush1.msra.mxu0 0.0
    %1280 = vmatprep.subr.mxu0 0.0
    %1281 = vmatpush1.msra.mxu0 0.0
    %1282 = vmatprep.subr.mxu0 0.0
    %1283 = vmatpush1.msra.mxu0 0.0
    %1284 = vmatprep.subr.mxu0 0.0
    %1285 = vmatpush1.msra.mxu0 0.0
    %1286 = vmatprep.subr.mxu0 0.0
    %1287 = vmatpush1.msra.mxu0 0.0
    %1288 = vmatprep.subr.mxu0 0.0
    %1289 = vmatpush1.msra.mxu0 0.0
    %1290 = vmatprep.subr.mxu0 0.0
    %1291 = vmatpush1.msra.mxu0 0.0
    %1292 = vmatprep.subr.mxu0 0.0
    %1293 = vmatpush1.msra.mxu0 0.0
    %1294 = vmatprep.subr.mxu0 0.0
    %1295 = vmatpush1.msra.mxu0 0.0
    %1296 = vmatprep.subr.mxu0 0.0
    %1297 = vmatpush1.msra.mxu0 0.0
    %1298 = vmatprep.subr.mxu0 0.0
    %1299 = vmatpush1.msra.mxu0 0.0
    %1300 = vmatprep.subr.mxu0 0.0
    %1301 = vmatpush1.msra.mxu0 0.0
    %1302 = vmatprep.subr.mxu0 0.0
    %1303 = vmatpush1.msra.mxu0 0.0
    %1304 = vmatprep.subr.mxu0 0.0
    %1305 = vmatpush1.msra.mxu0 0.0
    %1306 = vmatprep.subr.mxu0 0.0
    %1307 = vmatpush1.msra.mxu0 0.0
    %1308 = vmatprep.subr.mxu0 0.0
    %1309 = vmatpush1.msra.mxu0 0.0
    %1310 = vmatprep.subr.mxu0 0.0
    %1311 = vmatpush1.msra.mxu0 0.0
    %1312 = vmatprep.subr.mxu0 0.0
    %1313 = vmatpush1.msra.mxu0 0.0
    %1314 = vmatprep.subr.mxu0 0.0
    %1315 = vmatpush1.msra.mxu0 0.0
    %1316 = vmatprep.subr.mxu0 0.0
    %1317 = vmatpush1.msra.mxu0 0.0
    %1318 = vmatprep.subr.mxu0 0.0
    %1319 = vmatpush1.msra.mxu0 0.0
    %1320 = vmatprep.mubr.f32.mxu0 0.0
    %1321 = vmatmul.mubr.f32.gmra.mrb[0].mxu0 %v1254
    %v1322 = vpop.f32.mrb[0].mxu0
    %v1323 = vadd.f32 0.0, %v1322
    %v1324 = vpop.f32.mrb[0].mxu0
    %1325 = vdwg.mxu0
    %v1326 = vld [vmem:[#allocation10 + $0x8] sm:$0xff]
    %v1328 = vsel %vm368, %v1250, 0
    %v1331 = vsel %vm368, %v1323, 0
    %1333 = vmatprep.subr.mxu0 0.0
    %1334 = vmatpush1.msra.mxu0 %v1326
    %1335 = vmatprep.subr.mxu0 0.0
    %1336 = vmatpush1.msra.mxu0 0.0
    %1337 = vmatprep.subr.mxu0 0.0
    %1338 = vmatpush1.msra.mxu0 0.0
    %1339 = vmatprep.subr.mxu0 0.0
    %1340 = vmatpush1.msra.mxu0 0.0
    %1341 = vmatprep.subr.mxu0 0.0
    %1342 = vmatpush1.msra.mxu0 0.0
    %1343 = vmatprep.subr.mxu0 0.0
    %1344 = vmatpush1.msra.mxu0 0.0
    %1345 = vmatprep.subr.mxu0 0.0
    %1346 = vmatpush1.msra.mxu0 0.0
    %1347 = vmatprep.subr.mxu0 0.0
    %1348 = vmatpush1.msra.mxu0 0.0
    %1349 = vmatprep.subr.mxu0 0.0
    %1350 = vmatpush1.msra.mxu0 0.0
    %1351 = vmatprep.subr.mxu0 0.0
    %1352 = vmatpush1.msra.mxu0 0.0
    %1353 = vmatprep.subr.mxu0 0.0
    %1354 = vmatpush1.msra.mxu0 0.0
    %1355 = vmatprep.subr.mxu0 0.0
    %1356 = vmatpush1.msra.mxu0 0.0
    %1357 = vmatprep.subr.mxu0 0.0
    %1358 = vmatpush1.msra.mxu0 0.0
    %1359 = vmatprep.subr.mxu0 0.0
    %1360 = vmatpush1.msra.mxu0 0.0
    %1361 = vmatprep.subr.mxu0 0.0
    %1362 = vmatpush1.msra.mxu0 0.0
    %1363 = vmatprep.subr.mxu0 0.0
    %1364 = vmatpush1.msra.mxu0 0.0
    %1365 = vmatprep.subr.mxu0 0.0
    %1366 = vmatpush1.msra.mxu0 0.0
    %1367 = vmatprep.subr.mxu0 0.0
    %1368 = vmatpush1.msra.mxu0 0.0
    %1369 = vmatprep.subr.mxu0 0.0
    %1370 = vmatpush1.msra.mxu0 0.0
    %1371 = vmatprep.subr.mxu0 0.0
    %1372 = vmatpush1.msra.mxu0 0.0
    %1373 = vmatprep.subr.mxu0 0.0
    %1374 = vmatpush1.msra.mxu0 0.0
    %1375 = vmatprep.subr.mxu0 0.0
    %1376 = vmatpush1.msra.mxu0 0.0
    %1377 = vmatprep.subr.mxu0 0.0
    %1378 = vmatpush1.msra.mxu0 0.0
    %1379 = vmatprep.subr.mxu0 0.0
    %1380 = vmatpush1.msra.mxu0 0.0
    %1381 = vmatprep.subr.mxu0 0.0
    %1382 = vmatpush1.msra.mxu0 0.0
    %1383 = vmatprep.subr.mxu0 0.0
    %1384 = vmatpush1.msra.mxu0 0.0
    %1385 = vmatprep.subr.mxu0 0.0
    %1386 = vmatpush1.msra.mxu0 0.0
    %1387 = vmatprep.subr.mxu0 0.0
    %1388 = vmatpush1.msra.mxu0 0.0
    %1389 = vmatprep.subr.mxu0 0.0
    %1390 = vmatpush1.msra.mxu0 0.0
    %1391 = vmatprep.subr.mxu0 0.0
    %1392 = vmatpush1.msra.mxu0 0.0
    %1393 = vmatprep.subr.mxu0 0.0
    %1394 = vmatpush1.msra.mxu0 0.0
    %1395 = vmatprep.subr.mxu0 0.0
    %1396 = vmatpush1.msra.mxu0 0.0
    %1397 = vmatprep.mubr.f32.mxu0 0.0
    %1398 = vmatmul.mubr.f32.gmra.mrb[0].mxu0 %v1328
    %v1399 = vpop.f32.mrb[0].mxu0
    %v1400 = vadd.f32 0.0, %v1399
    %v1401 = vpop.f32.mrb[0].mxu0
    %1402 = vmatprep.mubr.f32.mxu0 0.0
    %1403 = vmatmul.mubr.f32.gmra.mrb[0].mxu0 %v1331
    %v1404 = vpop.f32.mrb[0].mxu0
    %v1405 = vadd.f32 0.0, %v1404
    %v1406 = vpop.f32.mrb[0].mxu0
    %1407 = vdwg.mxu0
    %v1409 = vsel %vm368, %v615, 0
    %v1412 = vsel %vm368, %v688, 0
    %1414 = vmatprep.subr.mxu0 0.0
    %1415 = vmatpush1.msra.mxu0 %v691
    %1416 = vmatprep.subr.mxu0 0.0
    %1417 = vmatpush1.msra.mxu0 0.0
    %1418 = vmatprep.subr.mxu0 0.0
    %1419 = vmatpush1.msra.mxu0 0.0
    %1420 = vmatprep.subr.mxu0 0.0
    %1421 = vmatpush1.msra.mxu0 0.0
    %1422 = vmatprep.subr.mxu0 0.0
    %1423 = vmatpush1.msra.mxu0 0.0
    %1424 = vmatprep.subr.mxu0 0.0
    %1425 = vmatpush1.msra.mxu0 0.0
    %1426 = vmatprep.subr.mxu0 0.0
    %1427 = vmatpush1.msra.mxu0 0.0
    %1428 = vmatprep.subr.mxu0 0.0
    %1429 = vmatpush1.msra.mxu0 0.0
    %1430 = vmatprep.subr.mxu0 0.0
    %1431 = vmatpush1.msra.mxu0 0.0
    %1432 = vmatprep.subr.mxu0 0.0
    %1433 = vmatpush1.msra.mxu0 0.0
    %1434 = vmatprep.subr.mxu0 0.0
    %1435 = vmatpush1.msra.mxu0 0.0
    %1436 = vmatprep.subr.mxu0 0.0
    %1437 = vmatpush1.msra.mxu0 0.0
    %1438 = vmatprep.subr.mxu0 0.0
    %1439 = vmatpush1.msra.mxu0 0.0
    %1440 = vmatprep.subr.mxu0 0.0
    %1441 = vmatpush1.msra.mxu0 0.0
    %1442 = vmatprep.subr.mxu0 0.0
    %1443 = vmatpush1.msra.mxu0 0.0
    %1444 = vmatprep.subr.mxu0 0.0
    %1445 = vmatpush1.msra.mxu0 0.0
    %1446 = vmatprep.subr.mxu0 0.0
    %1447 = vmatpush1.msra.mxu0 0.0
    %1448 = vmatprep.subr.mxu0 0.0
    %1449 = vmatpush1.msra.mxu0 0.0
    %1450 = vmatprep.subr.mxu0 0.0
    %1451 = vmatpush1.msra.mxu0 0.0
    %1452 = vmatprep.subr.mxu0 0.0
    %1453 = vmatpush1.msra.mxu0 0.0
    %1454 = vmatprep.subr.mxu0 0.0
    %1455 = vmatpush1.msra.mxu0 0.0
    %1456 = vmatprep.subr.mxu0 0.0
    %1457 = vmatpush1.msra.mxu0 0.0
    %1458 = vmatprep.subr.mxu0 0.0
    %1459 = vmatpush1.msra.mxu0 0.0
    %1460 = vmatprep.subr.mxu0 0.0
    %1461 = vmatpush1.msra.mxu0 0.0
    %1462 = vmatprep.subr.mxu0 0.0
    %1463 = vmatpush1.msra.mxu0 0.0
    %1464 = vmatprep.subr.mxu0 0.0
    %1465 = vmatpush1.msra.mxu0 0.0
    %1466 = vmatprep.subr.mxu0 0.0
    %1467 = vmatpush1.msra.mxu0 0.0
    %1468 = vmatprep.subr.mxu0 0.0
    %1469 = vmatpush1.msra.mxu0 0.0
    %1470 = vmatprep.subr.mxu0 0.0
    %1471 = vmatpush1.msra.mxu0 0.0
    %1472 = vmatprep.subr.mxu0 0.0
    %1473 = vmatpush1.msra.mxu0 0.0
    %1474 = vmatprep.subr.mxu0 0.0
    %1475 = vmatpush1.msra.mxu0 0.0
    %1476 = vmatprep.subr.mxu0 0.0
    %1477 = vmatpush1.msra.mxu0 0.0
    %1478 = vmatprep.mubr.f32.mxu0 0.0
    %1479 = vmatmul.mubr.f32.gmra.mrb[0].mxu0 %v1409
    %v1480 = vpop.f32.mrb[0].mxu0
    %v1481 = vadd.f32 %v1400, %v1480
    %v1482 = vpop.f32.mrb[0].mxu0
    %1483 = vmatprep.mubr.f32.mxu0 0.0
    %1484 = vmatmul.mubr.f32.gmra.mrb[0].mxu0 %v1412
    %v1485 = vpop.f32.mrb[0].mxu0
    %v1486 = vadd.f32 %v1405, %v1485
    %v1487 = vpop.f32.mrb[0].mxu0
    %1488 = vdwg.mxu0
    %v1489 = vld [vmem:[#allocation5] sm:$0xff]
    %v1490 = vld [vmem:[#allocation5 + $0x8] sm:$0xff]
    %v1491 = vld [vmem:[#allocation5 + $0x10] sm:$0xff]
    %v1492 = vld [vmem:[#allocation5 + $0x18] sm:$0xff]
    %v1493 = vld [vmem:[#allocation7] sm:$0xff]
    %v1494 = vld [vmem:[#allocation7 + $0x8] sm:$0xff]
    %v1495 = vld [vmem:[#allocation7 + $0x10] sm:$0xff]
    %v1496 = vld [vmem:[#allocation7 + $0x18] sm:$0xff]
    %v1497 = vld [vmem:[#allocation8] sm:$0xff]
    %v1498 = vld [vmem:[#allocation8 + $0x8] sm:$0xff]
    %v1499 = vld [vmem:[#allocation8 + $0x10] sm:$0xff]
    %v1500 = vld [vmem:[#allocation8 + $0x18] sm:$0xff]
    %v1501 = vld [vmem:[%s2] sm:$0x1]
    %v1502 = vld [vmem:[%s4] sm:$0x1]
    %v1503 = vld [vmem:[%s6] sm:$0x1]
    %v1505 = vlaneseq
    %v1506 = vshrl.u32 %v1505, 7
    %v1507 = vsub.s32 0, %v1506
    %v1508 = vrot.slane %v1501, %v1507
    %1513 = vrot.lane.b32.xlu0 %v1489, 112
    %v1514 = vpop.permute.xlu0 %1513
    %1515 = vrot.lane.b32.xlu0 %v1490, 112
    %v1516 = vpop.permute.xlu0 %1515
    %1517 = vrot.lane.b32.xlu0 %v1491, 112
    %v1518 = vpop.permute.xlu0 %1517
    %1519 = vrot.lane.b32.xlu0 %v1492, 112
    %v1520 = vpop.permute.xlu0 %1519
    %1525 = vrot.lane.b32.xlu0 %v1508, 112
    %v1526 = vpop.permute.xlu0 %1525
    %1528 = vmatprep.subr.mxu0 0.0
    %1529 = vmatpush1.msra.mxu0 %v1514
    %1530 = vmatprep.subr.mxu0 0.0
    %1531 = vmatpush1.msra.mxu0 %v1516
    %1532 = vmatprep.subr.mxu0 0.0
    %1533 = vmatpush1.msra.mxu0 %v1518
    %1534 = vmatprep.subr.mxu0 0.0
    %1535 = vmatpush1.msra.mxu0 %v1520
    %1536 = vmatprep.subr.mxu0 0.0
    %1537 = vmatpush1.msra.mxu0 0.0
    %1538 = vmatprep.subr.mxu0 0.0
    %1539 = vmatpush1.msra.mxu0 0.0
    %1540 = vmatprep.subr.mxu0 0.0
    %1541 = vmatpush1.msra.mxu0 0.0
    %1542 = vmatprep.subr.mxu0 0.0
    %1543 = vmatpush1.msra.mxu0 0.0
    %1544 = vmatprep.subr.mxu0 0.0
    %1545 = vmatpush1.msra.mxu0 0.0
    %1546 = vmatprep.subr.mxu0 0.0
    %1547 = vmatpush1.msra.mxu0 0.0
    %1548 = vmatprep.subr.mxu0 0.0
    %1549 = vmatpush1.msra.mxu0 0.0
    %1550 = vmatprep.subr.mxu0 0.0
    %1551 = vmatpush1.msra.mxu0 0.0
    %1552 = vmatprep.subr.mxu0 0.0
    %1553 = vmatpush1.msra.mxu0 0.0
    %1554 = vmatprep.subr.mxu0 0.0
    %1555 = vmatpush1.msra.mxu0 0.0
    %1556 = vmatprep.subr.mxu0 0.0
    %1557 = vmatpush1.msra.mxu0 0.0
    %1558 = vmatprep.subr.mxu0 0.0
    %1559 = vmatpush1.msra.mxu0 0.0
    %1560 = vmatprep.subr.mxu0 0.0
    %1561 = vmatpush1.msra.mxu0 0.0
    %1562 = vmatprep.subr.mxu0 0.0
    %1563 = vmatpush1.msra.mxu0 0.0
    %1564 = vmatprep.subr.mxu0 0.0
    %1565 = vmatpush1.msra.mxu0 0.0
    %1566 = vmatprep.subr.mxu0 0.0
    %1567 = vmatpush1.msra.mxu0 0.0
    %1568 = vmatprep.subr.mxu0 0.0
    %1569 = vmatpush1.msra.mxu0 0.0
    %1570 = vmatprep.subr.mxu0 0.0
    %1571 = vmatpush1.msra.mxu0 0.0
    %1572 = vmatprep.subr.mxu0 0.0
    %1573 = vmatpush1.msra.mxu0 0.0
    %1574 = vmatprep.subr.mxu0 0.0
    %1575 = vmatpush1.msra.mxu0 0.0
    %1576 = vmatprep.subr.mxu0 0.0
    %1577 = vmatpush1.msra.mxu0 0.0
    %1578 = vmatprep.subr.mxu0 0.0
    %1579 = vmatpush1.msra.mxu0 0.0
    %1580 = vmatprep.subr.mxu0 0.0
    %1581 = vmatpush1.msra.mxu0 0.0
    %1582 = vmatprep.subr.mxu0 0.0
    %1583 = vmatpush1.msra.mxu0 0.0
    %1584 = vmatprep.subr.mxu0 0.0
    %1585 = vmatpush1.msra.mxu0 0.0
    %1586 = vmatprep.subr.mxu0 0.0
    %1587 = vmatpush1.msra.mxu0 0.0
    %1588 = vmatprep.subr.mxu0 0.0
    %1589 = vmatpush1.msra.mxu0 0.0
    %1590 = vmatprep.subr.mxu0 0.0
    %1591 = vmatpush1.msra.mxu0 0.0
    %1592 = vmatprep.mubr.f32.mxu0 0.0
    %1593 = vmatmul.mubr.f32.gmra.mrb[0].mxu0 %v126
    %v1594 = vpop.f32.mrb[0].mxu0
    %v1595 = vadd.f32 %v1526, %v1594
    %v1596 = vpop.f32.mrb[0].mxu0
    %1597 = vmatprep.mubr.f32.mxu0 0.0
    %1598 = vmatmul.mubr.f32.gmra.mrb[0].mxu0 %v129
    %v1599 = vpop.f32.mrb[0].mxu0
    %v1600 = vadd.f32 %v1526, %v1599
    %v1601 = vpop.f32.mrb[0].mxu0
    %1602 = vdwg.mxu0
    %v1604 = vlaneseq
    %v1605 = vshrl.u32 %v1604, 7
    %v1606 = vsub.s32 0, %v1605
    %v1607 = vrot.slane %v1502, %v1606
    %1612 = vrot.lane.b32.xlu0 %v1493, 112
    %v1613 = vpop.permute.xlu0 %1612
    %1614 = vrot.lane.b32.xlu0 %v1494, 112
    %v1615 = vpop.permute.xlu0 %1614
    %1616 = vrot.lane.b32.xlu0 %v1495, 112
    %v1617 = vpop.permute.xlu0 %1616
    %1618 = vrot.lane.b32.xlu0 %v1496, 112
    %v1619 = vpop.permute.xlu0 %1618
    %1624 = vrot.lane.b32.xlu0 %v1607, 112
    %v1625 = vpop.permute.xlu0 %1624
    %1627 = vmatprep.subr.mxu0 0.0
    %1628 = vmatpush1.msra.mxu0 %v1613
    %1629 = vmatprep.subr.mxu0 0.0
    %1630 = vmatpush1.msra.mxu0 %v1615
    %1631 = vmatprep.subr.mxu0 0.0
    %1632 = vmatpush1.msra.mxu0 %v1617
    %1633 = vmatprep.subr.mxu0 0.0
    %1634 = vmatpush1.msra.mxu0 %v1619
    %1635 = vmatprep.subr.mxu0 0.0
    %1636 = vmatpush1.msra.mxu0 0.0
    %1637 = vmatprep.subr.mxu0 0.0
    %1638 = vmatpush1.msra.mxu0 0.0
    %1639 = vmatprep.subr.mxu0 0.0
    %1640 = vmatpush1.msra.mxu0 0.0
    %1641 = vmatprep.subr.mxu0 0.0
    %1642 = vmatpush1.msra.mxu0 0.0
    %1643 = vmatprep.subr.mxu0 0.0
    %1644 = vmatpush1.msra.mxu0 0.0
    %1645 = vmatprep.subr.mxu0 0.0
    %1646 = vmatpush1.msra.mxu0 0.0
    %1647 = vmatprep.subr.mxu0 0.0
    %1648 = vmatpush1.msra.mxu0 0.0
    %1649 = vmatprep.subr.mxu0 0.0
    %1650 = vmatpush1.msra.mxu0 0.0
    %1651 = vmatprep.subr.mxu0 0.0
    %1652 = vmatpush1.msra.mxu0 0.0
    %1653 = vmatprep.subr.mxu0 0.0
    %1654 = vmatpush1.msra.mxu0 0.0
    %1655 = vmatprep.subr.mxu0 0.0
    %1656 = vmatpush1.msra.mxu0 0.0
    %1657 = vmatprep.subr.mxu0 0.0
    %1658 = vmatpush1.msra.mxu0 0.0
    %1659 = vmatprep.subr.mxu0 0.0
    %1660 = vmatpush1.msra.mxu0 0.0
    %1661 = vmatprep.subr.mxu0 0.0
    %1662 = vmatpush1.msra.mxu0 0.0
    %1663 = vmatprep.subr.mxu0 0.0
    %1664 = vmatpush1.msra.mxu0 0.0
    %1665 = vmatprep.subr.mxu0 0.0
    %1666 = vmatpush1.msra.mxu0 0.0
    %1667 = vmatprep.subr.mxu0 0.0
    %1668 = vmatpush1.msra.mxu0 0.0
    %1669 = vmatprep.subr.mxu0 0.0
    %1670 = vmatpush1.msra.mxu0 0.0
    %1671 = vmatprep.subr.mxu0 0.0
    %1672 = vmatpush1.msra.mxu0 0.0
    %1673 = vmatprep.subr.mxu0 0.0
    %1674 = vmatpush1.msra.mxu0 0.0
    %1675 = vmatprep.subr.mxu0 0.0
    %1676 = vmatpush1.msra.mxu0 0.0
    %1677 = vmatprep.subr.mxu0 0.0
    %1678 = vmatpush1.msra.mxu0 0.0
    %1679 = vmatprep.subr.mxu0 0.0
    %1680 = vmatpush1.msra.mxu0 0.0
    %1681 = vmatprep.subr.mxu0 0.0
    %1682 = vmatpush1.msra.mxu0 0.0
    %1683 = vmatprep.subr.mxu0 0.0
    %1684 = vmatpush1.msra.mxu0 0.0
    %1685 = vmatprep.subr.mxu0 0.0
    %1686 = vmatpush1.msra.mxu0 0.0
    %1687 = vmatprep.subr.mxu0 0.0
    %1688 = vmatpush1.msra.mxu0 0.0
    %1689 = vmatprep.subr.mxu0 0.0
    %1690 = vmatpush1.msra.mxu0 0.0
    %1691 = vmatprep.mubr.f32.mxu0 0.0
    %1692 = vmatmul.mubr.f32.gmra.mrb[0].mxu0 %v126
    %v1693 = vpop.f32.mrb[0].mxu0
    %v1694 = vadd.f32 %v1625, %v1693
    %v1695 = vpop.f32.mrb[0].mxu0
    %1696 = vmatprep.mubr.f32.mxu0 0.0
    %1697 = vmatmul.mubr.f32.gmra.mrb[0].mxu0 %v129
    %v1698 = vpop.f32.mrb[0].mxu0
    %v1699 = vadd.f32 %v1625, %v1698
    %v1700 = vpop.f32.mrb[0].mxu0
    %1701 = vdwg.mxu0
    %v1703 = vlaneseq
    %v1704 = vshrl.u32 %v1703, 7
    %v1705 = vsub.s32 0, %v1704
    %v1706 = vrot.slane %v1503, %v1705
    %1711 = vrot.lane.b32.xlu0 %v1497, 112
    %v1712 = vpop.permute.xlu0 %1711
    %1713 = vrot.lane.b32.xlu0 %v1498, 112
    %v1714 = vpop.permute.xlu0 %1713
    %1715 = vrot.lane.b32.xlu0 %v1499, 112
    %v1716 = vpop.permute.xlu0 %1715
    %1717 = vrot.lane.b32.xlu0 %v1500, 112
    %v1718 = vpop.permute.xlu0 %1717
    %1723 = vrot.lane.b32.xlu0 %v1706, 112
    %v1724 = vpop.permute.xlu0 %1723
    %1726 = vmatprep.subr.mxu0 0.0
    %1727 = vmatpush1.msra.mxu0 %v1712
    %1728 = vmatprep.subr.mxu0 0.0
    %1729 = vmatpush1.msra.mxu0 %v1714
    %1730 = vmatprep.subr.mxu0 0.0
    %1731 = vmatpush1.msra.mxu0 %v1716
    %1732 = vmatprep.subr.mxu0 0.0
    %1733 = vmatpush1.msra.mxu0 %v1718
    %1734 = vmatprep.subr.mxu0 0.0
    %1735 = vmatpush1.msra.mxu0 0.0
    %1736 = vmatprep.subr.mxu0 0.0
    %1737 = vmatpush1.msra.mxu0 0.0
    %1738 = vmatprep.subr.mxu0 0.0
    %1739 = vmatpush1.msra.mxu0 0.0
    %1740 = vmatprep.subr.mxu0 0.0
    %1741 = vmatpush1.msra.mxu0 0.0
    %1742 = vmatprep.subr.mxu0 0.0
    %1743 = vmatpush1.msra.mxu0 0.0
    %1744 = vmatprep.subr.mxu0 0.0
    %1745 = vmatpush1.msra.mxu0 0.0
    %1746 = vmatprep.subr.mxu0 0.0
    %1747 = vmatpush1.msra.mxu0 0.0
    %1748 = vmatprep.subr.mxu0 0.0
    %1749 = vmatpush1.msra.mxu0 0.0
    %1750 = vmatprep.subr.mxu0 0.0
    %1751 = vmatpush1.msra.mxu0 0.0
    %1752 = vmatprep.subr.mxu0 0.0
    %1753 = vmatpush1.msra.mxu0 0.0
    %1754 = vmatprep.subr.mxu0 0.0
    %1755 = vmatpush1.msra.mxu0 0.0
    %1756 = vmatprep.subr.mxu0 0.0
    %1757 = vmatpush1.msra.mxu0 0.0
    %1758 = vmatprep.subr.mxu0 0.0
    %1759 = vmatpush1.msra.mxu0 0.0
    %1760 = vmatprep.subr.mxu0 0.0
    %1761 = vmatpush1.msra.mxu0 0.0
    %1762 = vmatprep.subr.mxu0 0.0
    %1763 = vmatpush1.msra.mxu0 0.0
    %1764 = vmatprep.subr.mxu0 0.0
    %1765 = vmatpush1.msra.mxu0 0.0
    %1766 = vmatprep.subr.mxu0 0.0
    %1767 = vmatpush1.msra.mxu0 0.0
    %1768 = vmatprep.subr.mxu0 0.0
    %1769 = vmatpush1.msra.mxu0 0.0
    %1770 = vmatprep.subr.mxu0 0.0
    %1771 = vmatpush1.msra.mxu0 0.0
    %1772 = vmatprep.subr.mxu0 0.0
    %1773 = vmatpush1.msra.mxu0 0.0
    %1774 = vmatprep.subr.mxu0 0.0
    %1775 = vmatpush1.msra.mxu0 0.0
    %1776 = vmatprep.subr.mxu0 0.0
    %1777 = vmatpush1.msra.mxu0 0.0
    %1778 = vmatprep.subr.mxu0 0.0
    %1779 = vmatpush1.msra.mxu0 0.0
    %1780 = vmatprep.subr.mxu0 0.0
    %1781 = vmatpush1.msra.mxu0 0.0
    %1782 = vmatprep.subr.mxu0 0.0
    %1783 = vmatpush1.msra.mxu0 0.0
    %1784 = vmatprep.subr.mxu0 0.0
    %1785 = vmatpush1.msra.mxu0 0.0
    %1786 = vmatprep.subr.mxu0 0.0
    %1787 = vmatpush1.msra.mxu0 0.0
    %1788 = vmatprep.subr.mxu0 0.0
    %1789 = vmatpush1.msra.mxu0 0.0
    %1790 = vmatprep.mubr.f32.mxu0 0.0
    %1791 = vmatmul.mubr.f32.gmra.mrb[0].mxu0 %v126
    %v1792 = vpop.f32.mrb[0].mxu0
    %v1793 = vadd.f32 %v1724, %v1792
    %v1794 = vpop.f32.mrb[0].mxu0
    %1795 = vmatprep.mubr.f32.mxu0 0.0
    %1796 = vmatmul.mubr.f32.gmra.mrb[0].mxu0 %v129
    %v1797 = vpop.f32.mrb[0].mxu0
    %v1798 = vadd.f32 %v1724, %v1797
    %v1799 = vpop.f32.mrb[0].mxu0
    %1800 = vdwg.mxu0
    %v1802 = vsel %vm368, %v1595, 0
    %v1805 = vsel %vm368, %v1694, 0
    %1807 = vmatprep.subr.mxu0 0.0
    %1808 = vmatpush1.xpose.msra.mxu0 %v1805
    %1809 = vmatprep.subr.mxu0 0.0
    %1810 = vmatpush1.xpose.msra.mxu0 0.0
    %1811 = vmatprep.subr.mxu0 0.0
    %1812 = vmatpush1.xpose.msra.mxu0 0.0
    %1813 = vmatprep.subr.mxu0 0.0
    %1814 = vmatpush1.xpose.msra.mxu0 0.0
    %1815 = vmatprep.subr.mxu0 0.0
    %1816 = vmatpush1.xpose.msra.mxu0 0.0
    %1817 = vmatprep.subr.mxu0 0.0
    %1818 = vmatpush1.xpose.msra.mxu0 0.0
    %1819 = vmatprep.subr.mxu0 0.0
    %1820 = vmatpush1.xpose.msra.mxu0 0.0
    %1821 = vmatprep.subr.mxu0 0.0
    %1822 = vmatpush1.xpose.msra.mxu0 0.0
    %1823 = vmatprep.subr.mxu0 0.0
    %1824 = vmatpush1.xpose.msra.mxu0 0.0
    %1825 = vmatprep.subr.mxu0 0.0
    %1826 = vmatpush1.xpose.msra.mxu0 0.0
    %1827 = vmatprep.subr.mxu0 0.0
    %1828 = vmatpush1.xpose.msra.mxu0 0.0
    %1829 = vmatprep.subr.mxu0 0.0
    %1830 = vmatpush1.xpose.msra.mxu0 0.0
    %1831 = vmatprep.subr.mxu0 0.0
    %1832 = vmatpush1.xpose.msra.mxu0 0.0
    %1833 = vmatprep.subr.mxu0 0.0
    %1834 = vmatpush1.xpose.msra.mxu0 0.0
    %1835 = vmatprep.subr.mxu0 0.0
    %1836 = vmatpush1.xpose.msra.mxu0 0.0
    %1837 = vmatprep.subr.mxu0 0.0
    %1838 = vmatpush1.xpose.msra.mxu0 0.0
    %1839 = vmatprep.subr.mxu0 0.0
    %1840 = vmatpush1.xpose.msra.mxu0 0.0
    %1841 = vmatprep.subr.mxu0 0.0
    %1842 = vmatpush1.xpose.msra.mxu0 0.0
    %1843 = vmatprep.subr.mxu0 0.0
    %1844 = vmatpush1.xpose.msra.mxu0 0.0
    %1845 = vmatprep.subr.mxu0 0.0
    %1846 = vmatpush1.xpose.msra.mxu0 0.0
    %1847 = vmatprep.subr.mxu0 0.0
    %1848 = vmatpush1.xpose.msra.mxu0 0.0
    %1849 = vmatprep.subr.mxu0 0.0
    %1850 = vmatpush1.xpose.msra.mxu0 0.0
    %1851 = vmatprep.subr.mxu0 0.0
    %1852 = vmatpush1.xpose.msra.mxu0 0.0
    %1853 = vmatprep.subr.mxu0 0.0
    %1854 = vmatpush1.xpose.msra.mxu0 0.0
    %1855 = vmatprep.subr.mxu0 0.0
    %1856 = vmatpush1.xpose.msra.mxu0 0.0
    %1857 = vmatprep.subr.mxu0 0.0
    %1858 = vmatpush1.xpose.msra.mxu0 0.0
    %1859 = vmatprep.subr.mxu0 0.0
    %1860 = vmatpush1.xpose.msra.mxu0 0.0
    %1861 = vmatprep.subr.mxu0 0.0
    %1862 = vmatpush1.xpose.msra.mxu0 0.0
    %1863 = vmatprep.subr.mxu0 0.0
    %1864 = vmatpush1.xpose.msra.mxu0 0.0
    %1865 = vmatprep.subr.mxu0 0.0
    %1866 = vmatpush1.xpose.msra.mxu0 0.0
    %1867 = vmatprep.subr.mxu0 0.0
    %1868 = vmatpush1.xpose.msra.mxu0 0.0
    %1869 = vmatprep.subr.mxu0 0.0
    %1870 = vmatpush1.xpose.msra.mxu0 0.0
    %1871 = vmatprep.mubr.f32.mxu0 0.0
    %1872 = vmatmul.mubr.f32.gmra.mrb[0].mxu0 %v1802
    %v1873 = vpop.f32.mrb[0].mxu0
    %v1874 = vadd.f32 0.0, %v1873
    %v1875 = vpop.f32.mrb[0].mxu0
    %1876 = vdwg.mxu0
    %v1878 = vsel %vm368, %v1600, 0
    %v1881 = vsel %vm368, %v1699, 0
    %1883 = vmatprep.subr.mxu0 0.0
    %1884 = vmatpush1.xpose.msra.mxu0 %v1881
    %1885 = vmatprep.subr.mxu0 0.0
    %1886 = vmatpush1.xpose.msra.mxu0 0.0
    %1887 = vmatprep.subr.mxu0 0.0
    %1888 = vmatpush1.xpose.msra.mxu0 0.0
    %1889 = vmatprep.subr.mxu0 0.0
    %1890 = vmatpush1.xpose.msra.mxu0 0.0
    %1891 = vmatprep.subr.mxu0 0.0
    %1892 = vmatpush1.xpose.msra.mxu0 0.0
    %1893 = vmatprep.subr.mxu0 0.0
    %1894 = vmatpush1.xpose.msra.mxu0 0.0
    %1895 = vmatprep.subr.mxu0 0.0
    %1896 = vmatpush1.xpose.msra.mxu0 0.0
    %1897 = vmatprep.subr.mxu0 0.0
    %1898 = vmatpush1.xpose.msra.mxu0 0.0
    %1899 = vmatprep.subr.mxu0 0.0
    %1900 = vmatpush1.xpose.msra.mxu0 0.0
    %1901 = vmatprep.subr.mxu0 0.0
    %1902 = vmatpush1.xpose.msra.mxu0 0.0
    %1903 = vmatprep.subr.mxu0 0.0
    %1904 = vmatpush1.xpose.msra.mxu0 0.0
    %1905 = vmatprep.subr.mxu0 0.0
    %1906 = vmatpush1.xpose.msra.mxu0 0.0
    %1907 = vmatprep.subr.mxu0 0.0
    %1908 = vmatpush1.xpose.msra.mxu0 0.0
    %1909 = vmatprep.subr.mxu0 0.0
    %1910 = vmatpush1.xpose.msra.mxu0 0.0
    %1911 = vmatprep.subr.mxu0 0.0
    %1912 = vmatpush1.xpose.msra.mxu0 0.0
    %1913 = vmatprep.subr.mxu0 0.0
    %1914 = vmatpush1.xpose.msra.mxu0 0.0
    %1915 = vmatprep.subr.mxu0 0.0
    %1916 = vmatpush1.xpose.msra.mxu0 0.0
    %1917 = vmatprep.subr.mxu0 0.0
    %1918 = vmatpush1.xpose.msra.mxu0 0.0
    %1919 = vmatprep.subr.mxu0 0.0
    %1920 = vmatpush1.xpose.msra.mxu0 0.0
    %1921 = vmatprep.subr.mxu0 0.0
    %1922 = vmatpush1.xpose.msra.mxu0 0.0
    %1923 = vmatprep.subr.mxu0 0.0
    %1924 = vmatpush1.xpose.msra.mxu0 0.0
    %1925 = vmatprep.subr.mxu0 0.0
    %1926 = vmatpush1.xpose.msra.mxu0 0.0
    %1927 = vmatprep.subr.mxu0 0.0
    %1928 = vmatpush1.xpose.msra.mxu0 0.0
    %1929 = vmatprep.subr.mxu0 0.0
    %1930 = vmatpush1.xpose.msra.mxu0 0.0
    %1931 = vmatprep.subr.mxu0 0.0
    %1932 = vmatpush1.xpose.msra.mxu0 0.0
    %1933 = vmatprep.subr.mxu0 0.0
    %1934 = vmatpush1.xpose.msra.mxu0 0.0
    %1935 = vmatprep.subr.mxu0 0.0
    %1936 = vmatpush1.xpose.msra.mxu0 0.0
    %1937 = vmatprep.subr.mxu0 0.0
    %1938 = vmatpush1.xpose.msra.mxu0 0.0
    %1939 = vmatprep.subr.mxu0 0.0
    %1940 = vmatpush1.xpose.msra.mxu0 0.0
    %1941 = vmatprep.subr.mxu0 0.0
    %1942 = vmatpush1.xpose.msra.mxu0 0.0
    %1943 = vmatprep.subr.mxu0 0.0
    %1944 = vmatpush1.xpose.msra.mxu0 0.0
    %1945 = vmatprep.subr.mxu0 0.0
    %1946 = vmatpush1.xpose.msra.mxu0 0.0
    %1947 = vmatprep.mubr.f32.mxu0 0.0
    %1948 = vmatmul.mubr.f32.gmra.mrb[0].mxu0 %v1878
    %v1949 = vpop.f32.mrb[0].mxu0
    %v1950 = vadd.f32 0.0, %v1949
    %v1951 = vpop.f32.mrb[0].mxu0
    %1952 = vdwg.mxu0
    %v1953 = vmul.f32 %v1874, 0.17677669
    %v1954 = vmul.f32 %v1950, 0.17677669
    %v1955 = vsel %vm368, %v1953, -inf
    %1956 = vmax.xlane.f32.xlu0 %v1955
    %v1957 = vpop.xlane.xlu0 %1956
    %v1958 = vsel %vm368, %v1954, -inf
    %1959 = vmax.xlane.f32.xlu0 %v1958
    %v1960 = vpop.xlane.xlu0 %1959
    %v1961 = vsub.f32 %v1953, %v1957
    %v1962 = vsub.f32 %v1954, %v1960
    %v1963 = vmul.f32 %v1961, 1.442695
    %v1964 = vpow.pop %v1963
    %v1965 = vmul.f32 %v1962, 1.442695
    %v1966 = vpow.pop %v1965
    %v1967 = vsel %vm368, %v1964, 0.0
    %1968 = vadd.xlane.f32.xlu0 %v1967
    %v1969 = vpop.xlane.xlu0 %1968
    %v1970 = vsel %vm368, %v1966, 0.0
    %1971 = vadd.xlane.f32.xlu0 %v1970
    %v1972 = vpop.xlane.xlu0 %1971
    %v1973 = vrcp.pop %v1969
    %v1974 = vrcp.pop %v1972
    %v1975 = vmul.f32 %v1964, %v1973
    %v1976 = vmul.f32 %v1966, %v1974
    %v1978 = vsel %vm368, %v1975, 0
    %1980 = vmatprep.subr.mxu0 0.0
    %1981 = vmatpush1.msra.mxu0 %v1793
    %1982 = vmatprep.subr.mxu0 0.0
    %1983 = vmatpush1.msra.mxu0 0.0
    %1984 = vmatprep.subr.mxu0 0.0
    %1985 = vmatpush1.msra.mxu0 0.0
    %1986 = vmatprep.subr.mxu0 0.0
    %1987 = vmatpush1.msra.mxu0 0.0
    %1988 = vmatprep.subr.mxu0 0.0
    %1989 = vmatpush1.msra.mxu0 0.0
    %1990 = vmatprep.subr.mxu0 0.0
    %1991 = vmatpush1.msra.mxu0 0.0
    %1992 = vmatprep.subr.mxu0 0.0
    %1993 = vmatpush1.msra.mxu0 0.0
    %1994 = vmatprep.subr.mxu0 0.0
    %1995 = vmatpush1.msra.mxu0 0.0
    %1996 = vmatprep.subr.mxu0 0.0
    %1997 = vmatpush1.msra.mxu0 0.0
    %1998 = vmatprep.subr.mxu0 0.0
    %1999 = vmatpush1.msra.mxu0 0.0
    %2000 = vmatprep.subr.mxu0 0.0
    %2001 = vmatpush1.msra.mxu0 0.0
    %2002 = vmatprep.subr.mxu0 0.0
    %2003 = vmatpush1.msra.mxu0 0.0
    %2004 = vmatprep.subr.mxu0 0.0
    %2005 = vmatpush1.msra.mxu0 0.0
    %2006 = vmatprep.subr.mxu0 0.0
    %2007 = vmatpush1.msra.mxu0 0.0
    %2008 = vmatprep.subr.mxu0 0.0
    %2009 = vmatpush1.msra.mxu0 0.0
    %2010 = vmatprep.subr.mxu0 0.0
    %2011 = vmatpush1.msra.mxu0 0.0
    %2012 = vmatprep.subr.mxu0 0.0
    %2013 = vmatpush1.msra.mxu0 0.0
    %2014 = vmatprep.subr.mxu0 0.0
    %2015 = vmatpush1.msra.mxu0 0.0
    %2016 = vmatprep.subr.mxu0 0.0
    %2017 = vmatpush1.msra.mxu0 0.0
    %2018 = vmatprep.subr.mxu0 0.0
    %2019 = vmatpush1.msra.mxu0 0.0
    %2020 = vmatprep.subr.mxu0 0.0
    %2021 = vmatpush1.msra.mxu0 0.0
    %2022 = vmatprep.subr.mxu0 0.0
    %2023 = vmatpush1.msra.mxu0 0.0
    %2024 = vmatprep.subr.mxu0 0.0
    %2025 = vmatpush1.msra.mxu0 0.0
    %2026 = vmatprep.subr.mxu0 0.0
    %2027 = vmatpush1.msra.mxu0 0.0
    %2028 = vmatprep.subr.mxu0 0.0
    %2029 = vmatpush1.msra.mxu0 0.0
    %2030 = vmatprep.subr.mxu0 0.0
    %2031 = vmatpush1.msra.mxu0 0.0
    %2032 = vmatprep.subr.mxu0 0.0
    %2033 = vmatpush1.msra.mxu0 0.0
    %2034 = vmatprep.subr.mxu0 0.0
    %2035 = vmatpush1.msra.mxu0 0.0
    %2036 = vmatprep.subr.mxu0 0.0
    %2037 = vmatpush1.msra.mxu0 0.0
    %2038 = vmatprep.subr.mxu0 0.0
    %2039 = vmatpush1.msra.mxu0 0.0
    %2040 = vmatprep.subr.mxu0 0.0
    %2041 = vmatpush1.msra.mxu0 0.0
    %2042 = vmatprep.subr.mxu0 0.0
    %2043 = vmatpush1.msra.mxu0 0.0
    %2044 = vmatprep.mubr.f32.mxu0 0.0
    %2045 = vmatmul.mubr.f32.gmra.mrb[0].mxu0 %v1978
    %v2046 = vpop.f32.mrb[0].mxu0
    %v2047 = vadd.f32 0.0, %v2046
    %v2048 = vpop.f32.mrb[0].mxu0
    %2049 = vdwg.mxu0
    %v2051 = vsel %vm368, %v1976, 0
    %2053 = vmatprep.subr.mxu0 0.0
    %2054 = vmatpush1.msra.mxu0 %v1798
    %2055 = vmatprep.subr.mxu0 0.0
    %2056 = vmatpush1.msra.mxu0 0.0
    %2057 = vmatprep.subr.mxu0 0.0
    %2058 = vmatpush1.msra.mxu0 0.0
    %2059 = vmatprep.subr.mxu0 0.0
    %2060 = vmatpush1.msra.mxu0 0.0
    %2061 = vmatprep.subr.mxu0 0.0
    %2062 = vmatpush1.msra.mxu0 0.0
    %2063 = vmatprep.subr.mxu0 0.0
    %2064 = vmatpush1.msra.mxu0 0.0
    %2065 = vmatprep.subr.mxu0 0.0
    %2066 = vmatpush1.msra.mxu0 0.0
    %2067 = vmatprep.subr.mxu0 0.0
    %2068 = vmatpush1.msra.mxu0 0.0
    %2069 = vmatprep.subr.mxu0 0.0
    %2070 = vmatpush1.msra.mxu0 0.0
    %2071 = vmatprep.subr.mxu0 0.0
    %2072 = vmatpush1.msra.mxu0 0.0
    %2073 = vmatprep.subr.mxu0 0.0
    %2074 = vmatpush1.msra.mxu0 0.0
    %2075 = vmatprep.subr.mxu0 0.0
    %2076 = vmatpush1.msra.mxu0 0.0
    %2077 = vmatprep.subr.mxu0 0.0
    %2078 = vmatpush1.msra.mxu0 0.0
    %2079 = vmatprep.subr.mxu0 0.0
    %2080 = vmatpush1.msra.mxu0 0.0
    %2081 = vmatprep.subr.mxu0 0.0
    %2082 = vmatpush1.msra.mxu0 0.0
    %2083 = vmatprep.subr.mxu0 0.0
    %2084 = vmatpush1.msra.mxu0 0.0
    %2085 = vmatprep.subr.mxu0 0.0
    %2086 = vmatpush1.msra.mxu0 0.0
    %2087 = vmatprep.subr.mxu0 0.0
    %2088 = vmatpush1.msra.mxu0 0.0
    %2089 = vmatprep.subr.mxu0 0.0
    %2090 = vmatpush1.msra.mxu0 0.0
    %2091 = vmatprep.subr.mxu0 0.0
    %2092 = vmatpush1.msra.mxu0 0.0
    %2093 = vmatprep.subr.mxu0 0.0
    %2094 = vmatpush1.msra.mxu0 0.0
    %2095 = vmatprep.subr.mxu0 0.0
    %2096 = vmatpush1.msra.mxu0 0.0
    %2097 = vmatprep.subr.mxu0 0.0
    %2098 = vmatpush1.msra.mxu0 0.0
    %2099 = vmatprep.subr.mxu0 0.0
    %2100 = vmatpush1.msra.mxu0 0.0
    %2101 = vmatprep.subr.mxu0 0.0
    %2102 = vmatpush1.msra.mxu0 0.0
    %2103 = vmatprep.subr.mxu0 0.0
    %2104 = vmatpush1.msra.mxu0 0.0
    %2105 = vmatprep.subr.mxu0 0.0
    %2106 = vmatpush1.msra.mxu0 0.0
    %2107 = vmatprep.subr.mxu0 0.0
    %2108 = vmatpush1.msra.mxu0 0.0
    %2109 = vmatprep.subr.mxu0 0.0
    %2110 = vmatpush1.msra.mxu0 0.0
    %2111 = vmatprep.subr.mxu0 0.0
    %2112 = vmatpush1.msra.mxu0 0.0
    %2113 = vmatprep.subr.mxu0 0.0
    %2114 = vmatpush1.msra.mxu0 0.0
    %2115 = vmatprep.subr.mxu0 0.0
    %2116 = vmatpush1.msra.mxu0 0.0
    %2117 = vmatprep.mubr.f32.mxu0 0.0
    %2118 = vmatmul.mubr.f32.gmra.mrb[0].mxu0 %v2051
    %v2119 = vpop.f32.mrb[0].mxu0
    %v2120 = vadd.f32 0.0, %v2119
    %v2121 = vpop.f32.mrb[0].mxu0
    %2122 = vdwg.mxu0
    %v2123 = vld [vmem:[#allocation10 + $0x10] sm:$0xff]
    %v2125 = vsel %vm368, %v2047, 0
    %v2128 = vsel %vm368, %v2120, 0
    %2130 = vmatprep.subr.mxu0 0.0
    %2131 = vmatpush1.msra.mxu0 %v2123
    %2132 = vmatprep.subr.mxu0 0.0
    %2133 = vmatpush1.msra.mxu0 0.0
    %2134 = vmatprep.subr.mxu0 0.0
    %2135 = vmatpush1.msra.mxu0 0.0
    %2136 = vmatprep.subr.mxu0 0.0
    %2137 = vmatpush1.msra.mxu0 0.0
    %2138 = vmatprep.subr.mxu0 0.0
    %2139 = vmatpush1.msra.mxu0 0.0
    %2140 = vmatprep.subr.mxu0 0.0
    %2141 = vmatpush1.msra.mxu0 0.0
    %2142 = vmatprep.subr.mxu0 0.0
    %2143 = vmatpush1.msra.mxu0 0.0
    %2144 = vmatprep.subr.mxu0 0.0
    %2145 = vmatpush1.msra.mxu0 0.0
    %2146 = vmatprep.subr.mxu0 0.0
    %2147 = vmatpush1.msra.mxu0 0.0
    %2148 = vmatprep.subr.mxu0 0.0
    %2149 = vmatpush1.msra.mxu0 0.0
    %2150 = vmatprep.subr.mxu0 0.0
    %2151 = vmatpush1.msra.mxu0 0.0
    %2152 = vmatprep.subr.mxu0 0.0
    %2153 = vmatpush1.msra.mxu0 0.0
    %2154 = vmatprep.subr.mxu0 0.0
    %2155 = vmatpush1.msra.mxu0 0.0
    %2156 = vmatprep.subr.mxu0 0.0
    %2157 = vmatpush1.msra.mxu0 0.0
    %2158 = vmatprep.subr.mxu0 0.0
    %2159 = vmatpush1.msra.mxu0 0.0
    %2160 = vmatprep.subr.mxu0 0.0
    %2161 = vmatpush1.msra.mxu0 0.0
    %2162 = vmatprep.subr.mxu0 0.0
    %2163 = vmatpush1.msra.mxu0 0.0
    %2164 = vmatprep.subr.mxu0 0.0
    %2165 = vmatpush1.msra.mxu0 0.0
    %2166 = vmatprep.subr.mxu0 0.0
    %2167 = vmatpush1.msra.mxu0 0.0
    %2168 = vmatprep.subr.mxu0 0.0
    %2169 = vmatpush1.msra.mxu0 0.0
    %2170 = vmatprep.subr.mxu0 0.0
    %2171 = vmatpush1.msra.mxu0 0.0
    %2172 = vmatprep.subr.mxu0 0.0
    %2173 = vmatpush1.msra.mxu0 0.0
    %2174 = vmatprep.subr.mxu0 0.0
    %2175 = vmatpush1.msra.mxu0 0.0
    %2176 = vmatprep.subr.mxu0 0.0
    %2177 = vmatpush1.msra.mxu0 0.0
    %2178 = vmatprep.subr.mxu0 0.0
    %2179 = vmatpush1.msra.mxu0 0.0
    %2180 = vmatprep.subr.mxu0 0.0
    %2181 = vmatpush1.msra.mxu0 0.0
    %2182 = vmatprep.subr.mxu0 0.0
    %2183 = vmatpush1.msra.mxu0 0.0
    %2184 = vmatprep.subr.mxu0 0.0
    %2185 = vmatpush1.msra.mxu0 0.0
    %2186 = vmatprep.subr.mxu0 0.0
    %2187 = vmatpush1.msra.mxu0 0.0
    %2188 = vmatprep.subr.mxu0 0.0
    %2189 = vmatpush1.msra.mxu0 0.0
    %2190 = vmatprep.subr.mxu0 0.0
    %2191 = vmatpush1.msra.mxu0 0.0
    %2192 = vmatprep.subr.mxu0 0.0
    %2193 = vmatpush1.msra.mxu0 0.0
    %2194 = vmatprep.mubr.f32.mxu0 0.0
    %2195 = vmatmul.mubr.f32.gmra.mrb[0].mxu0 %v2125
    %v2196 = vpop.f32.mrb[0].mxu0
    %v2197 = vadd.f32 0.0, %v2196
    %v2198 = vpop.f32.mrb[0].mxu0
    %2199 = vmatprep.mubr.f32.mxu0 0.0
    %2200 = vmatmul.mubr.f32.gmra.mrb[0].mxu0 %v2128
    %v2201 = vpop.f32.mrb[0].mxu0
    %v2202 = vadd.f32 0.0, %v2201
    %v2203 = vpop.f32.mrb[0].mxu0
    %2204 = vdwg.mxu0
    %v2205 = vadd.f32 %v1481, %v2197
    %v2206 = vadd.f32 %v1486, %v2202
    %v2207 = vld [vmem:[#allocation5] sm:$0xff]
    %v2208 = vld [vmem:[#allocation5 + $0x8] sm:$0xff]
    %v2209 = vld [vmem:[#allocation5 + $0x10] sm:$0xff]
    %v2210 = vld [vmem:[#allocation5 + $0x18] sm:$0xff]
    %v2211 = vld [vmem:[#allocation7] sm:$0xff]
    %v2212 = vld [vmem:[#allocation7 + $0x8] sm:$0xff]
    %v2213 = vld [vmem:[#allocation7 + $0x10] sm:$0xff]
    %v2214 = vld [vmem:[#allocation7 + $0x18] sm:$0xff]
    %v2215 = vld [vmem:[#allocation8] sm:$0xff]
    %v2216 = vld [vmem:[#allocation8 + $0x8] sm:$0xff]
    %v2217 = vld [vmem:[#allocation8 + $0x10] sm:$0xff]
    %v2218 = vld [vmem:[#allocation8 + $0x18] sm:$0xff]
    %v2219 = vld [vmem:[%s2] sm:$0x1]
    %v2220 = vld [vmem:[%s4] sm:$0x1]
    %v2221 = vld [vmem:[%s6] sm:$0x1]
    %v2223 = vlaneseq
    %v2224 = vshrl.u32 %v2223, 7
    %v2225 = vsub.s32 0, %v2224
    %v2226 = vrot.slane %v2219, %v2225
    %2231 = vrot.lane.b32.xlu0 %v2207, 104
    %v2232 = vpop.permute.xlu0 %2231
    %2233 = vrot.lane.b32.xlu0 %v2208, 104
    %v2234 = vpop.permute.xlu0 %2233
    %2235 = vrot.lane.b32.xlu0 %v2209, 104
    %v2236 = vpop.permute.xlu0 %2235
    %2237 = vrot.lane.b32.xlu0 %v2210, 104
    %v2238 = vpop.permute.xlu0 %2237
    %2243 = vrot.lane.b32.xlu0 %v2226, 104
    %v2244 = vpop.permute.xlu0 %2243
    %2246 = vmatprep.subr.mxu0 0.0
    %2247 = vmatpush1.msra.mxu0 %v2232
    %2248 = vmatprep.subr.mxu0 0.0
    %2249 = vmatpush1.msra.mxu0 %v2234
    %2250 = vmatprep.subr.mxu0 0.0
    %2251 = vmatpush1.msra.mxu0 %v2236
    %2252 = vmatprep.subr.mxu0 0.0
    %2253 = vmatpush1.msra.mxu0 %v2238
    %2254 = vmatprep.subr.mxu0 0.0
    %2255 = vmatpush1.msra.mxu0 0.0
    %2256 = vmatprep.subr.mxu0 0.0
    %2257 = vmatpush1.msra.mxu0 0.0
    %2258 = vmatprep.subr.mxu0 0.0
    %2259 = vmatpush1.msra.mxu0 0.0
    %2260 = vmatprep.subr.mxu0 0.0
    %2261 = vmatpush1.msra.mxu0 0.0
    %2262 = vmatprep.subr.mxu0 0.0
    %2263 = vmatpush1.msra.mxu0 0.0
    %2264 = vmatprep.subr.mxu0 0.0
    %2265 = vmatpush1.msra.mxu0 0.0
    %2266 = vmatprep.subr.mxu0 0.0
    %2267 = vmatpush1.msra.mxu0 0.0
    %2268 = vmatprep.subr.mxu0 0.0
    %2269 = vmatpush1.msra.mxu0 0.0
    %2270 = vmatprep.subr.mxu0 0.0
    %2271 = vmatpush1.msra.mxu0 0.0
    %2272 = vmatprep.subr.mxu0 0.0
    %2273 = vmatpush1.msra.mxu0 0.0
    %2274 = vmatprep.subr.mxu0 0.0
    %2275 = vmatpush1.msra.mxu0 0.0
    %2276 = vmatprep.subr.mxu0 0.0
    %2277 = vmatpush1.msra.mxu0 0.0
    %2278 = vmatprep.subr.mxu0 0.0
    %2279 = vmatpush1.msra.mxu0 0.0
    %2280 = vmatprep.subr.mxu0 0.0
    %2281 = vmatpush1.msra.mxu0 0.0
    %2282 = vmatprep.subr.mxu0 0.0
    %2283 = vmatpush1.msra.mxu0 0.0
    %2284 = vmatprep.subr.mxu0 0.0
    %2285 = vmatpush1.msra.mxu0 0.0
    %2286 = vmatprep.subr.mxu0 0.0
    %2287 = vmatpush1.msra.mxu0 0.0
    %2288 = vmatprep.subr.mxu0 0.0
    %2289 = vmatpush1.msra.mxu0 0.0
    %2290 = vmatprep.subr.mxu0 0.0
    %2291 = vmatpush1.msra.mxu0 0.0
    %2292 = vmatprep.subr.mxu0 0.0
    %2293 = vmatpush1.msra.mxu0 0.0
    %2294 = vmatprep.subr.mxu0 0.0
    %2295 = vmatpush1.msra.mxu0 0.0
    %2296 = vmatprep.subr.mxu0 0.0
    %2297 = vmatpush1.msra.mxu0 0.0
    %2298 = vmatprep.subr.mxu0 0.0
    %2299 = vmatpush1.msra.mxu0 0.0
    %2300 = vmatprep.subr.mxu0 0.0
    %2301 = vmatpush1.msra.mxu0 0.0
    %2302 = vmatprep.subr.mxu0 0.0
    %2303 = vmatpush1.msra.mxu0 0.0
    %2304 = vmatprep.subr.mxu0 0.0
    %2305 = vmatpush1.msra.mxu0 0.0
    %2306 = vmatprep.subr.mxu0 0.0
    %2307 = vmatpush1.msra.mxu0 0.0
    %2308 = vmatprep.subr.mxu0 0.0
    %2309 = vmatpush1.msra.mxu0 0.0
    %2310 = vmatprep.mubr.f32.mxu0 0.0
    %2311 = vmatmul.mubr.f32.gmra.mrb[0].mxu0 %v126
    %v2312 = vpop.f32.mrb[0].mxu0
    %v2313 = vadd.f32 %v2244, %v2312
    %v2314 = vpop.f32.mrb[0].mxu0
    %2315 = vmatprep.mubr.f32.mxu0 0.0
    %2316 = vmatmul.mubr.f32.gmra.mrb[0].mxu0 %v129
    %v2317 = vpop.f32.mrb[0].mxu0
    %v2318 = vadd.f32 %v2244, %v2317
    %v2319 = vpop.f32.mrb[0].mxu0
    %2320 = vdwg.mxu0
    %v2322 = vlaneseq
    %v2323 = vshrl.u32 %v2322, 7
    %v2324 = vsub.s32 0, %v2323
    %v2325 = vrot.slane %v2220, %v2324
    %2330 = vrot.lane.b32.xlu0 %v2211, 104
    %v2331 = vpop.permute.xlu0 %2330
    %2332 = vrot.lane.b32.xlu0 %v2212, 104
    %v2333 = vpop.permute.xlu0 %2332
    %2334 = vrot.lane.b32.xlu0 %v2213, 104
    %v2335 = vpop.permute.xlu0 %2334
    %2336 = vrot.lane.b32.xlu0 %v2214, 104
    %v2337 = vpop.permute.xlu0 %2336
    %2342 = vrot.lane.b32.xlu0 %v2325, 104
    %v2343 = vpop.permute.xlu0 %2342
    %2345 = vmatprep.subr.mxu0 0.0
    %2346 = vmatpush1.msra.mxu0 %v2331
    %2347 = vmatprep.subr.mxu0 0.0
    %2348 = vmatpush1.msra.mxu0 %v2333
    %2349 = vmatprep.subr.mxu0 0.0
    %2350 = vmatpush1.msra.mxu0 %v2335
    %2351 = vmatprep.subr.mxu0 0.0
    %2352 = vmatpush1.msra.mxu0 %v2337
    %2353 = vmatprep.subr.mxu0 0.0
    %2354 = vmatpush1.msra.mxu0 0.0
    %2355 = vmatprep.subr.mxu0 0.0
    %2356 = vmatpush1.msra.mxu0 0.0
    %2357 = vmatprep.subr.mxu0 0.0
    %2358 = vmatpush1.msra.mxu0 0.0
    %2359 = vmatprep.subr.mxu0 0.0
    %2360 = vmatpush1.msra.mxu0 0.0
    %2361 = vmatprep.subr.mxu0 0.0
    %2362 = vmatpush1.msra.mxu0 0.0
    %2363 = vmatprep.subr.mxu0 0.0
    %2364 = vmatpush1.msra.mxu0 0.0
    %2365 = vmatprep.subr.mxu0 0.0
    %2366 = vmatpush1.msra.mxu0 0.0
    %2367 = vmatprep.subr.mxu0 0.0
    %2368 = vmatpush1.msra.mxu0 0.0
    %2369 = vmatprep.subr.mxu0 0.0
    %2370 = vmatpush1.msra.mxu0 0.0
    %2371 = vmatprep.subr.mxu0 0.0
    %2372 = vmatpush1.msra.mxu0 0.0
    %2373 = vmatprep.subr.mxu0 0.0
    %2374 = vmatpush1.msra.mxu0 0.0
    %2375 = vmatprep.subr.mxu0 0.0
    %2376 = vmatpush1.msra.mxu0 0.0
    %2377 = vmatprep.subr.mxu0 0.0
    %2378 = vmatpush1.msra.mxu0 0.0
    %2379 = vmatprep.subr.mxu0 0.0
    %2380 = vmatpush1.msra.mxu0 0.0
    %2381 = vmatprep.subr.mxu0 0.0
    %2382 = vmatpush1.msra.mxu0 0.0
    %2383 = vmatprep.subr.mxu0 0.0
    %2384 = vmatpush1.msra.mxu0 0.0
    %2385 = vmatprep.subr.mxu0 0.0
    %2386 = vmatpush1.msra.mxu0 0.0
    %2387 = vmatprep.subr.mxu0 0.0
    %2388 = vmatpush1.msra.mxu0 0.0
    %2389 = vmatprep.subr.mxu0 0.0
    %2390 = vmatpush1.msra.mxu0 0.0
    %2391 = vmatprep.subr.mxu0 0.0
    %2392 = vmatpush1.msra.mxu0 0.0
    %2393 = vmatprep.subr.mxu0 0.0
    %2394 = vmatpush1.msra.mxu0 0.0
    %2395 = vmatprep.subr.mxu0 0.0
    %2396 = vmatpush1.msra.mxu0 0.0
    %2397 = vmatprep.subr.mxu0 0.0
    %2398 = vmatpush1.msra.mxu0 0.0
    %2399 = vmatprep.subr.mxu0 0.0
    %2400 = vmatpush1.msra.mxu0 0.0
    %2401 = vmatprep.subr.mxu0 0.0
    %2402 = vmatpush1.msra.mxu0 0.0
    %2403 = vmatprep.subr.mxu0 0.0
    %2404 = vmatpush1.msra.mxu0 0.0
    %2405 = vmatprep.subr.mxu0 0.0
    %2406 = vmatpush1.msra.mxu0 0.0
    %2407 = vmatprep.subr.mxu0 0.0
    %2408 = vmatpush1.msra.mxu0 0.0
    %2409 = vmatprep.mubr.f32.mxu0 0.0
    %2410 = vmatmul.mubr.f32.gmra.mrb[0].mxu0 %v126
    %v2411 = vpop.f32.mrb[0].mxu0
    %v2412 = vadd.f32 %v2343, %v2411
    %v2413 = vpop.f32.mrb[0].mxu0
    %2414 = vmatprep.mubr.f32.mxu0 0.0
    %2415 = vmatmul.mubr.f32.gmra.mrb[0].mxu0 %v129
    %v2416 = vpop.f32.mrb[0].mxu0
    %v2417 = vadd.f32 %v2343, %v2416
    %v2418 = vpop.f32.mrb[0].mxu0
    %2419 = vdwg.mxu0
    %v2421 = vlaneseq
    %v2422 = vshrl.u32 %v2421, 7
    %v2423 = vsub.s32 0, %v2422
    %v2424 = vrot.slane %v2221, %v2423
    %2429 = vrot.lane.b32.xlu0 %v2215, 104
    %v2430 = vpop.permute.xlu0 %2429
    %2431 = vrot.lane.b32.xlu0 %v2216, 104
    %v2432 = vpop.permute.xlu0 %2431
    %2433 = vrot.lane.b32.xlu0 %v2217, 104
    %v2434 = vpop.permute.xlu0 %2433
    %2435 = vrot.lane.b32.xlu0 %v2218, 104
    %v2436 = vpop.permute.xlu0 %2435
    %2441 = vrot.lane.b32.xlu0 %v2424, 104
    %v2442 = vpop.permute.xlu0 %2441
    %2444 = vmatprep.subr.mxu0 0.0
    %2445 = vmatpush1.msra.mxu0 %v2430
    %2446 = vmatprep.subr.mxu0 0.0
    %2447 = vmatpush1.msra.mxu0 %v2432
    %2448 = vmatprep.subr.mxu0 0.0
    %2449 = vmatpush1.msra.mxu0 %v2434
    %2450 = vmatprep.subr.mxu0 0.0
    %2451 = vmatpush1.msra.mxu0 %v2436
    %2452 = vmatprep.subr.mxu0 0.0
    %2453 = vmatpush1.msra.mxu0 0.0
    %2454 = vmatprep.subr.mxu0 0.0
    %2455 = vmatpush1.msra.mxu0 0.0
    %2456 = vmatprep.subr.mxu0 0.0
    %2457 = vmatpush1.msra.mxu0 0.0
    %2458 = vmatprep.subr.mxu0 0.0
    %2459 = vmatpush1.msra.mxu0 0.0
    %2460 = vmatprep.subr.mxu0 0.0
    %2461 = vmatpush1.msra.mxu0 0.0
    %2462 = vmatprep.subr.mxu0 0.0
    %2463 = vmatpush1.msra.mxu0 0.0
    %2464 = vmatprep.subr.mxu0 0.0
    %2465 = vmatpush1.msra.mxu0 0.0
    %2466 = vmatprep.subr.mxu0 0.0
    %2467 = vmatpush1.msra.mxu0 0.0
    %2468 = vmatprep.subr.mxu0 0.0
    %2469 = vmatpush1.msra.mxu0 0.0
    %2470 = vmatprep.subr.mxu0 0.0
    %2471 = vmatpush1.msra.mxu0 0.0
    %2472 = vmatprep.subr.mxu0 0.0
    %2473 = vmatpush1.msra.mxu0 0.0
    %2474 = vmatprep.subr.mxu0 0.0
    %2475 = vmatpush1.msra.mxu0 0.0
    %2476 = vmatprep.subr.mxu0 0.0
    %2477 = vmatpush1.msra.mxu0 0.0
    %2478 = vmatprep.subr.mxu0 0.0
    %2479 = vmatpush1.msra.mxu0 0.0
    %2480 = vmatprep.subr.mxu0 0.0
    %2481 = vmatpush1.msra.mxu0 0.0
    %2482 = vmatprep.subr.mxu0 0.0
    %2483 = vmatpush1.msra.mxu0 0.0
    %2484 = vmatprep.subr.mxu0 0.0
    %2485 = vmatpush1.msra.mxu0 0.0
    %2486 = vmatprep.subr.mxu0 0.0
    %2487 = vmatpush1.msra.mxu0 0.0
    %2488 = vmatprep.subr.mxu0 0.0
    %2489 = vmatpush1.msra.mxu0 0.0
    %2490 = vmatprep.subr.mxu0 0.0
    %2491 = vmatpush1.msra.mxu0 0.0
    %2492 = vmatprep.subr.mxu0 0.0
    %2493 = vmatpush1.msra.mxu0 0.0
    %2494 = vmatprep.subr.mxu0 0.0
    %2495 = vmatpush1.msra.mxu0 0.0
    %2496 = vmatprep.subr.mxu0 0.0
    %2497 = vmatpush1.msra.mxu0 0.0
    %2498 = vmatprep.subr.mxu0 0.0
    %2499 = vmatpush1.msra.mxu0 0.0
    %2500 = vmatprep.subr.mxu0 0.0
    %2501 = vmatpush1.msra.mxu0 0.0
    %2502 = vmatprep.subr.mxu0 0.0
    %2503 = vmatpush1.msra.mxu0 0.0
    %2504 = vmatprep.subr.mxu0 0.0
    %2505 = vmatpush1.msra.mxu0 0.0
    %2506 = vmatprep.subr.mxu0 0.0
    %2507 = vmatpush1.msra.mxu0 0.0
    %2508 = vmatprep.mubr.f32.mxu0 0.0
    %2509 = vmatmul.mubr.f32.gmra.mrb[0].mxu0 %v126
    %v2510 = vpop.f32.mrb[0].mxu0
    %v2511 = vadd.f32 %v2442, %v2510
    %v2512 = vpop.f32.mrb[0].mxu0
    %2513 = vmatprep.mubr.f32.mxu0 0.0
    %2514 = vmatmul.mubr.f32.gmra.mrb[0].mxu0 %v129
    %v2515 = vpop.f32.mrb[0].mxu0
    %v2516 = vadd.f32 %v2442, %v2515
    %v2517 = vpop.f32.mrb[0].mxu0
    %2518 = vdwg.mxu0
    %v2520 = vsel %vm368, %v2313, 0
    %v2523 = vsel %vm368, %v2412, 0
    %2525 = vmatprep.subr.mxu0 0.0
    %2526 = vmatpush1.xpose.msra.mxu0 %v2523
    %2527 = vmatprep.subr.mxu0 0.0
    %2528 = vmatpush1.xpose.msra.mxu0 0.0
    %2529 = vmatprep.subr.mxu0 0.0
    %2530 = vmatpush1.xpose.msra.mxu0 0.0
    %2531 = vmatprep.subr.mxu0 0.0
    %2532 = vmatpush1.xpose.msra.mxu0 0.0
    %2533 = vmatprep.subr.mxu0 0.0
    %2534 = vmatpush1.xpose.msra.mxu0 0.0
    %2535 = vmatprep.subr.mxu0 0.0
    %2536 = vmatpush1.xpose.msra.mxu0 0.0
    %2537 = vmatprep.subr.mxu0 0.0
    %2538 = vmatpush1.xpose.msra.mxu0 0.0
    %2539 = vmatprep.subr.mxu0 0.0
    %2540 = vmatpush1.xpose.msra.mxu0 0.0
    %2541 = vmatprep.subr.mxu0 0.0
    %2542 = vmatpush1.xpose.msra.mxu0 0.0
    %2543 = vmatprep.subr.mxu0 0.0
    %2544 = vmatpush1.xpose.msra.mxu0 0.0
    %2545 = vmatprep.subr.mxu0 0.0
    %2546 = vmatpush1.xpose.msra.mxu0 0.0
    %2547 = vmatprep.subr.mxu0 0.0
    %2548 = vmatpush1.xpose.msra.mxu0 0.0
    %2549 = vmatprep.subr.mxu0 0.0
    %2550 = vmatpush1.xpose.msra.mxu0 0.0
    %2551 = vmatprep.subr.mxu0 0.0
    %2552 = vmatpush1.xpose.msra.mxu0 0.0
    %2553 = vmatprep.subr.mxu0 0.0
    %2554 = vmatpush1.xpose.msra.mxu0 0.0
    %2555 = vmatprep.subr.mxu0 0.0
    %2556 = vmatpush1.xpose.msra.mxu0 0.0
    %2557 = vmatprep.subr.mxu0 0.0
    %2558 = vmatpush1.xpose.msra.mxu0 0.0
    %2559 = vmatprep.subr.mxu0 0.0
    %2560 = vmatpush1.xpose.msra.mxu0 0.0
    %2561 = vmatprep.subr.mxu0 0.0
    %2562 = vmatpush1.xpose.msra.mxu0 0.0
    %2563 = vmatprep.subr.mxu0 0.0
    %2564 = vmatpush1.xpose.msra.mxu0 0.0
    %2565 = vmatprep.subr.mxu0 0.0
    %2566 = vmatpush1.xpose.msra.mxu0 0.0
    %2567 = vmatprep.subr.mxu0 0.0
    %2568 = vmatpush1.xpose.msra.mxu0 0.0
    %2569 = vmatprep.subr.mxu0 0.0
    %2570 = vmatpush1.xpose.msra.mxu0 0.0
    %2571 = vmatprep.subr.mxu0 0.0
    %2572 = vmatpush1.xpose.msra.mxu0 0.0
    %2573 = vmatprep.subr.mxu0 0.0
    %2574 = vmatpush1.xpose.msra.mxu0 0.0
    %2575 = vmatprep.subr.mxu0 0.0
    %2576 = vmatpush1.xpose.msra.mxu0 0.0
    %2577 = vmatprep.subr.mxu0 0.0
    %2578 = vmatpush1.xpose.msra.mxu0 0.0
    %2579 = vmatprep.subr.mxu0 0.0
    %2580 = vmatpush1.xpose.msra.mxu0 0.0
    %2581 = vmatprep.subr.mxu0 0.0
    %2582 = vmatpush1.xpose.msra.mxu0 0.0
    %2583 = vmatprep.subr.mxu0 0.0
    %2584 = vmatpush1.xpose.msra.mxu0 0.0
    %2585 = vmatprep.subr.mxu0 0.0
    %2586 = vmatpush1.xpose.msra.mxu0 0.0
    %2587 = vmatprep.subr.mxu0 0.0
    %2588 = vmatpush1.xpose.msra.mxu0 0.0
    %2589 = vmatprep.mubr.f32.mxu0 0.0
    %2590 = vmatmul.mubr.f32.gmra.mrb[0].mxu0 %v2520
    %v2591 = vpop.f32.mrb[0].mxu0
    %v2592 = vadd.f32 0.0, %v2591
    %v2593 = vpop.f32.mrb[0].mxu0
    %2594 = vdwg.mxu0
    %v2596 = vsel %vm368, %v2318, 0
    %v2599 = vsel %vm368, %v2417, 0
    %2601 = vmatprep.subr.mxu0 0.0
    %2602 = vmatpush1.xpose.msra.mxu0 %v2599
    %2603 = vmatprep.subr.mxu0 0.0
    %2604 = vmatpush1.xpose.msra.mxu0 0.0
    %2605 = vmatprep.subr.mxu0 0.0
    %2606 = vmatpush1.xpose.msra.mxu0 0.0
    %2607 = vmatprep.subr.mxu0 0.0
    %2608 = vmatpush1.xpose.msra.mxu0 0.0
    %2609 = vmatprep.subr.mxu0 0.0
    %2610 = vmatpush1.xpose.msra.mxu0 0.0
    %2611 = vmatprep.subr.mxu0 0.0
    %2612 = vmatpush1.xpose.msra.mxu0 0.0
    %2613 = vmatprep.subr.mxu0 0.0
    %2614 = vmatpush1.xpose.msra.mxu0 0.0
    %2615 = vmatprep.subr.mxu0 0.0
    %2616 = vmatpush1.xpose.msra.mxu0 0.0
    %2617 = vmatprep.subr.mxu0 0.0
    %2618 = vmatpush1.xpose.msra.mxu0 0.0
    %2619 = vmatprep.subr.mxu0 0.0
    %2620 = vmatpush1.xpose.msra.mxu0 0.0
    %2621 = vmatprep.subr.mxu0 0.0
    %2622 = vmatpush1.xpose.msra.mxu0 0.0
    %2623 = vmatprep.subr.mxu0 0.0
    %2624 = vmatpush1.xpose.msra.mxu0 0.0
    %2625 = vmatprep.subr.mxu0 0.0
    %2626 = vmatpush1.xpose.msra.mxu0 0.0
    %2627 = vmatprep.subr.mxu0 0.0
    %2628 = vmatpush1.xpose.msra.mxu0 0.0
    %2629 = vmatprep.subr.mxu0 0.0
    %2630 = vmatpush1.xpose.msra.mxu0 0.0
    %2631 = vmatprep.subr.mxu0 0.0
    %2632 = vmatpush1.xpose.msra.mxu0 0.0
    %2633 = vmatprep.subr.mxu0 0.0
    %2634 = vmatpush1.xpose.msra.mxu0 0.0
    %2635 = vmatprep.subr.mxu0 0.0
    %2636 = vmatpush1.xpose.msra.mxu0 0.0
    %2637 = vmatprep.subr.mxu0 0.0
    %2638 = vmatpush1.xpose.msra.mxu0 0.0
    %2639 = vmatprep.subr.mxu0 0.0
    %2640 = vmatpush1.xpose.msra.mxu0 0.0
    %2641 = vmatprep.subr.mxu0 0.0
    %2642 = vmatpush1.xpose.msra.mxu0 0.0
    %2643 = vmatprep.subr.mxu0 0.0
    %2644 = vmatpush1.xpose.msra.mxu0 0.0
    %2645 = vmatprep.subr.mxu0 0.0
    %2646 = vmatpush1.xpose.msra.mxu0 0.0
    %2647 = vmatprep.subr.mxu0 0.0
    %2648 = vmatpush1.xpose.msra.mxu0 0.0
    %2649 = vmatprep.subr.mxu0 0.0
    %2650 = vmatpush1.xpose.msra.mxu0 0.0
    %2651 = vmatprep.subr.mxu0 0.0
    %2652 = vmatpush1.xpose.msra.mxu0 0.0
    %2653 = vmatprep.subr.mxu0 0.0
    %2654 = vmatpush1.xpose.msra.mxu0 0.0
    %2655 = vmatprep.subr.mxu0 0.0
    %2656 = vmatpush1.xpose.msra.mxu0 0.0
    %2657 = vmatprep.subr.mxu0 0.0
    %2658 = vmatpush1.xpose.msra.mxu0 0.0
    %2659 = vmatprep.subr.mxu0 0.0
    %2660 = vmatpush1.xpose.msra.mxu0 0.0
    %2661 = vmatprep.subr.mxu0 0.0
    %2662 = vmatpush1.xpose.msra.mxu0 0.0
    %2663 = vmatprep.subr.mxu0 0.0
    %2664 = vmatpush1.xpose.msra.mxu0 0.0
    %2665 = vmatprep.mubr.f32.mxu0 0.0
    %2666 = vmatmul.mubr.f32.gmra.mrb[0].mxu0 %v2596
    %v2667 = vpop.f32.mrb[0].mxu0
    %v2668 = vadd.f32 0.0, %v2667
    %v2669 = vpop.f32.mrb[0].mxu0
    %2670 = vdwg.mxu0
    %v2671 = vmul.f32 %v2592, 0.17677669
    %v2672 = vmul.f32 %v2668, 0.17677669
    %v2673 = vsel %vm368, %v2671, -inf
    %2674 = vmax.xlane.f32.xlu0 %v2673
    %v2675 = vpop.xlane.xlu0 %2674
    %v2676 = vsel %vm368, %v2672, -inf
    %2677 = vmax.xlane.f32.xlu0 %v2676
    %v2678 = vpop.xlane.xlu0 %2677
    %v2679 = vsub.f32 %v2671, %v2675
    %v2680 = vsub.f32 %v2672, %v2678
    %v2681 = vmul.f32 %v2679, 1.442695
    %v2682 = vpow.pop %v2681
    %v2683 = vmul.f32 %v2680, 1.442695
    %v2684 = vpow.pop %v2683
    %v2685 = vsel %vm368, %v2682, 0.0
    %2686 = vadd.xlane.f32.xlu0 %v2685
    %v2687 = vpop.xlane.xlu0 %2686
    %v2688 = vsel %vm368, %v2684, 0.0
    %2689 = vadd.xlane.f32.xlu0 %v2688
    %v2690 = vpop.xlane.xlu0 %2689
    %v2691 = vrcp.pop %v2687
    %v2692 = vrcp.pop %v2690
    %v2693 = vmul.f32 %v2682, %v2691
    %v2694 = vmul.f32 %v2684, %v2692
    %v2696 = vsel %vm368, %v2693, 0
    %2698 = vmatprep.subr.mxu0 0.0
    %2699 = vmatpush1.msra.mxu0 %v2511
    %2700 = vmatprep.subr.mxu0 0.0
    %2701 = vmatpush1.msra.mxu0 0.0
    %2702 = vmatprep.subr.mxu0 0.0
    %2703 = vmatpush1.msra.mxu0 0.0
    %2704 = vmatprep.subr.mxu0 0.0
    %2705 = vmatpush1.msra.mxu0 0.0
    %2706 = vmatprep.subr.mxu0 0.0
    %2707 = vmatpush1.msra.mxu0 0.0
    %2708 = vmatprep.subr.mxu0 0.0
    %2709 = vmatpush1.msra.mxu0 0.0
    %2710 = vmatprep.subr.mxu0 0.0
    %2711 = vmatpush1.msra.mxu0 0.0
    %2712 = vmatprep.subr.mxu0 0.0
    %2713 = vmatpush1.msra.mxu0 0.0
    %2714 = vmatprep.subr.mxu0 0.0
    %2715 = vmatpush1.msra.mxu0 0.0
    %2716 = vmatprep.subr.mxu0 0.0
    %2717 = vmatpush1.msra.mxu0 0.0
    %2718 = vmatprep.subr.mxu0 0.0
    %2719 = vmatpush1.msra.mxu0 0.0
    %2720 = vmatprep.subr.mxu0 0.0
    %2721 = vmatpush1.msra.mxu0 0.0
    %2722 = vmatprep.subr.mxu0 0.0
    %2723 = vmatpush1.msra.mxu0 0.0
    %2724 = vmatprep.subr.mxu0 0.0
    %2725 = vmatpush1.msra.mxu0 0.0
    %2726 = vmatprep.subr.mxu0 0.0
    %2727 = vmatpush1.msra.mxu0 0.0
    %2728 = vmatprep.subr.mxu0 0.0
    %2729 = vmatpush1.msra.mxu0 0.0
    %2730 = vmatprep.subr.mxu0 0.0
    %2731 = vmatpush1.msra.mxu0 0.0
    %2732 = vmatprep.subr.mxu0 0.0
    %2733 = vmatpush1.msra.mxu0 0.0
    %2734 = vmatprep.subr.mxu0 0.0
    %2735 = vmatpush1.msra.mxu0 0.0
    %2736 = vmatprep.subr.mxu0 0.0
    %2737 = vmatpush1.msra.mxu0 0.0
    %2738 = vmatprep.subr.mxu0 0.0
    %2739 = vmatpush1.msra.mxu0 0.0
    %2740 = vmatprep.subr.mxu0 0.0
    %2741 = vmatpush1.msra.mxu0 0.0
    %2742 = vmatprep.subr.mxu0 0.0
    %2743 = vmatpush1.msra.mxu0 0.0
    %2744 = vmatprep.subr.mxu0 0.0
    %2745 = vmatpush1.msra.mxu0 0.0
    %2746 = vmatprep.subr.mxu0 0.0
    %2747 = vmatpush1.msra.mxu0 0.0
    %2748 = vmatprep.subr.mxu0 0.0
    %2749 = vmatpush1.msra.mxu0 0.0
    %2750 = vmatprep.subr.mxu0 0.0
    %2751 = vmatpush1.msra.mxu0 0.0
    %2752 = vmatprep.subr.mxu0 0.0
    %2753 = vmatpush1.msra.mxu0 0.0
    %2754 = vmatprep.subr.mxu0 0.0
    %2755 = vmatpush1.msra.mxu0 0.0
    %2756 = vmatprep.subr.mxu0 0.0
    %2757 = vmatpush1.msra.mxu0 0.0
    %2758 = vmatprep.subr.mxu0 0.0
    %2759 = vmatpush1.msra.mxu0 0.0
    %2760 = vmatprep.subr.mxu0 0.0
    %2761 = vmatpush1.msra.mxu0 0.0
    %2762 = vmatprep.mubr.f32.mxu0 0.0
    %2763 = vmatmul.mubr.f32.gmra.mrb[0].mxu0 %v2696
    %v2764 = vpop.f32.mrb[0].mxu0
    %v2765 = vadd.f32 0.0, %v2764
    %v2766 = vpop.f32.mrb[0].mxu0
    %2767 = vdwg.mxu0
    %v2769 = vsel %vm368, %v2694, 0
    %2771 = vmatprep.subr.mxu0 0.0
    %2772 = vmatpush1.msra.mxu0 %v2516
    %2773 = vmatprep.subr.mxu0 0.0
    %2774 = vmatpush1.msra.mxu0 0.0
    %2775 = vmatprep.subr.mxu0 0.0
    %2776 = vmatpush1.msra.mxu0 0.0
    %2777 = vmatprep.subr.mxu0 0.0
    %2778 = vmatpush1.msra.mxu0 0.0
    %2779 = vmatprep.subr.mxu0 0.0
    %2780 = vmatpush1.msra.mxu0 0.0
    %2781 = vmatprep.subr.mxu0 0.0
    %2782 = vmatpush1.msra.mxu0 0.0
    %2783 = vmatprep.subr.mxu0 0.0
    %2784 = vmatpush1.msra.mxu0 0.0
    %2785 = vmatprep.subr.mxu0 0.0
    %2786 = vmatpush1.msra.mxu0 0.0
    %2787 = vmatprep.subr.mxu0 0.0
    %2788 = vmatpush1.msra.mxu0 0.0
    %2789 = vmatprep.subr.mxu0 0.0
    %2790 = vmatpush1.msra.mxu0 0.0
    %2791 = vmatprep.subr.mxu0 0.0
    %2792 = vmatpush1.msra.mxu0 0.0
    %2793 = vmatprep.subr.mxu0 0.0
    %2794 = vmatpush1.msra.mxu0 0.0
    %2795 = vmatprep.subr.mxu0 0.0
    %2796 = vmatpush1.msra.mxu0 0.0
    %2797 = vmatprep.subr.mxu0 0.0
    %2798 = vmatpush1.msra.mxu0 0.0
    %2799 = vmatprep.subr.mxu0 0.0
    %2800 = vmatpush1.msra.mxu0 0.0
    %2801 = vmatprep.subr.mxu0 0.0
    %2802 = vmatpush1.msra.mxu0 0.0
    %2803 = vmatprep.subr.mxu0 0.0
    %2804 = vmatpush1.msra.mxu0 0.0
    %2805 = vmatprep.subr.mxu0 0.0
    %2806 = vmatpush1.msra.mxu0 0.0
    %2807 = vmatprep.subr.mxu0 0.0
    %2808 = vmatpush1.msra.mxu0 0.0
    %2809 = vmatprep.subr.mxu0 0.0
    %2810 = vmatpush1.msra.mxu0 0.0
    %2811 = vmatprep.subr.mxu0 0.0
    %2812 = vmatpush1.msra.mxu0 0.0
    %2813 = vmatprep.subr.mxu0 0.0
    %2814 = vmatpush1.msra.mxu0 0.0
    %2815 = vmatprep.subr.mxu0 0.0
    %2816 = vmatpush1.msra.mxu0 0.0
    %2817 = vmatprep.subr.mxu0 0.0
    %2818 = vmatpush1.msra.mxu0 0.0
    %2819 = vmatprep.subr.mxu0 0.0
    %2820 = vmatpush1.msra.mxu0 0.0
    %2821 = vmatprep.subr.mxu0 0.0
    %2822 = vmatpush1.msra.mxu0 0.0
    %2823 = vmatprep.subr.mxu0 0.0
    %2824 = vmatpush1.msra.mxu0 0.0
    %2825 = vmatprep.subr.mxu0 0.0
    %2826 = vmatpush1.msra.mxu0 0.0
    %2827 = vmatprep.subr.mxu0 0.0
    %2828 = vmatpush1.msra.mxu0 0.0
    %2829 = vmatprep.subr.mxu0 0.0
    %2830 = vmatpush1.msra.mxu0 0.0
    %2831 = vmatprep.subr.mxu0 0.0
    %2832 = vmatpush1.msra.mxu0 0.0
    %2833 = vmatprep.subr.mxu0 0.0
    %2834 = vmatpush1.msra.mxu0 0.0
    %2835 = vmatprep.mubr.f32.mxu0 0.0
    %2836 = vmatmul.mubr.f32.gmra.mrb[0].mxu0 %v2769
    %v2837 = vpop.f32.mrb[0].mxu0
    %v2838 = vadd.f32 0.0, %v2837
    %v2839 = vpop.f32.mrb[0].mxu0
    %2840 = vdwg.mxu0
    %v2841 = vld [vmem:[#allocation10 + $0x18] sm:$0xff]
    %v2843 = vsel %vm368, %v2765, 0
    %v2846 = vsel %vm368, %v2838, 0
    %2848 = vmatprep.subr.mxu0 0.0
    %2849 = vmatpush1.msra.mxu0 %v2841
    %2850 = vmatprep.subr.mxu0 0.0
    %2851 = vmatpush1.msra.mxu0 0.0
    %2852 = vmatprep.subr.mxu0 0.0
    %2853 = vmatpush1.msra.mxu0 0.0
    %2854 = vmatprep.subr.mxu0 0.0
    %2855 = vmatpush1.msra.mxu0 0.0
    %2856 = vmatprep.subr.mxu0 0.0
    %2857 = vmatpush1.msra.mxu0 0.0
    %2858 = vmatprep.subr.mxu0 0.0
    %2859 = vmatpush1.msra.mxu0 0.0
    %2860 = vmatprep.subr.mxu0 0.0
    %2861 = vmatpush1.msra.mxu0 0.0
    %2862 = vmatprep.subr.mxu0 0.0
    %2863 = vmatpush1.msra.mxu0 0.0
    %2864 = vmatprep.subr.mxu0 0.0
    %2865 = vmatpush1.msra.mxu0 0.0
    %2866 = vmatprep.subr.mxu0 0.0
    %2867 = vmatpush1.msra.mxu0 0.0
    %2868 = vmatprep.subr.mxu0 0.0
    %2869 = vmatpush1.msra.mxu0 0.0
    %2870 = vmatprep.subr.mxu0 0.0
    %2871 = vmatpush1.msra.mxu0 0.0
    %2872 = vmatprep.subr.mxu0 0.0
    %2873 = vmatpush1.msra.mxu0 0.0
    %2874 = vmatprep.subr.mxu0 0.0
    %2875 = vmatpush1.msra.mxu0 0.0
    %2876 = vmatprep.subr.mxu0 0.0
    %2877 = vmatpush1.msra.mxu0 0.0
    %2878 = vmatprep.subr.mxu0 0.0
    %2879 = vmatpush1.msra.mxu0 0.0
    %2880 = vmatprep.subr.mxu0 0.0
    %2881 = vmatpush1.msra.mxu0 0.0
    %2882 = vmatprep.subr.mxu0 0.0
    %2883 = vmatpush1.msra.mxu0 0.0
    %2884 = vmatprep.subr.mxu0 0.0
    %2885 = vmatpush1.msra.mxu0 0.0
    %2886 = vmatprep.subr.mxu0 0.0
    %2887 = vmatpush1.msra.mxu0 0.0
    %2888 = vmatprep.subr.mxu0 0.0
    %2889 = vmatpush1.msra.mxu0 0.0
    %2890 = vmatprep.subr.mxu0 0.0
    %2891 = vmatpush1.msra.mxu0 0.0
    %2892 = vmatprep.subr.mxu0 0.0
    %2893 = vmatpush1.msra.mxu0 0.0
    %2894 = vmatprep.subr.mxu0 0.0
    %2895 = vmatpush1.msra.mxu0 0.0
    %2896 = vmatprep.subr.mxu0 0.0
    %2897 = vmatpush1.msra.mxu0 0.0
    %2898 = vmatprep.subr.mxu0 0.0
    %2899 = vmatpush1.msra.mxu0 0.0
    %2900 = vmatprep.subr.mxu0 0.0
    %2901 = vmatpush1.msra.mxu0 0.0
    %2902 = vmatprep.subr.mxu0 0.0
    %2903 = vmatpush1.msra.mxu0 0.0
    %2904 = vmatprep.subr.mxu0 0.0
    %2905 = vmatpush1.msra.mxu0 0.0
    %2906 = vmatprep.subr.mxu0 0.0
    %2907 = vmatpush1.msra.mxu0 0.0
    %2908 = vmatprep.subr.mxu0 0.0
    %2909 = vmatpush1.msra.mxu0 0.0
    %2910 = vmatprep.subr.mxu0 0.0
    %2911 = vmatpush1.msra.mxu0 0.0
    %2912 = vmatprep.mubr.f32.mxu0 0.0
    %2913 = vmatmul.mubr.f32.gmra.mrb[0].mxu0 %v2843
    %v2914 = vpop.f32.mrb[0].mxu0
    %v2915 = vadd.f32 0.0, %v2914
    %v2916 = vpop.f32.mrb[0].mxu0
    %2917 = vmatprep.mubr.f32.mxu0 0.0
    %2918 = vmatmul.mubr.f32.gmra.mrb[0].mxu0 %v2846
    %v2919 = vpop.f32.mrb[0].mxu0
    %v2920 = vadd.f32 0.0, %v2919
    %v2921 = vpop.f32.mrb[0].mxu0
    %2922 = vdwg.mxu0
    %v2923 = vadd.f32 %v2205, %v2915
    %v2924 = vadd.f32 %v2206, %v2920
    %v2925 = vld [vmem:[%s8] sm:$0x1]
    %v2927 = vlaneseq
    %v2928 = vshrl.u32 %v2927, 7
    %v2929 = vsub.s32 0, %v2928
    %v2930 = vrot.slane %v2925, %v2929
    %v2932 = vadd.f32 %v2923, %v2930
    %v2933 = vadd.f32 %v2924, %v2930
    %2934 = vst.msk [vmem:[#allocation11] sm:$0xff] %vm124, %v2932
    %2935 = vst.msk [vmem:[#allocation11 + $0x8] sm:$0xff] %vm124, %v2933
    // Predicated region
    $region58: #{tpu_custom_call.1} parent=1 // pred_check
      _
    $region59: #{tpu_custom_call.1} parent=1 // pred_check_branch
      %2937 = sbr.rel (0) target = $region61
    $region60: #{tpu_custom_call.1} parent=1 // pred_region
      %s2939 = ssub.s32 256, 256
      %2940 = vsyncadd [#allocation4], %s2939
      %s2941 = sshll.u32 [#allocation11], 4
      %s2942 = int_to_ptr.vmem [resolvable:$true] %s2941
      %2947 = dma.vmem_to_hbm [thread:$0]  %s2942, 256, %s9, [#allocation4], 128, 128, 8
    $region61: #{tpu_custom_call.1} parent=1 // pred_fallthru
      _
    // Predicated region
    $region62: #{tpu_custom_call.1} parent=1 // pred_check
      _
    $region63: #{tpu_custom_call.1} parent=1 // pred_check_branch
      %2949 = sbr.rel (0) target = $region65
    $region64: #{tpu_custom_call.1} parent=1 // pred_region
      %2950 = dma.done [#allocation4], 256
    $region65: #{tpu_custom_call.1} parent=1 // pred_fallthru
      _
    %2951 = vsyncpa [#allocation3], 1
    %2952 = vsyncpa [#allocation6], 1
    %2953 = vsyncpa [#allocation9], 1
    %2954 = vsyncpa [#allocation4], 1

</llo_original>
